<compile_context>
chip_gen: v5e
topology: v5e:2x2
jax: 0.10.0
libtpu: 0.0.40
codegen_flags: <defaults>
</compile_context>

<pallas_src>
import functools
import math

import jax
import jax.numpy as jnp
from jax.experimental import pallas as pl
from jax.experimental.pallas import tpu as pltpu


def _round_up(x, m):
    return ((x + m - 1) // m) * m


# ----------------------------------------------------------------------------
# Fused (LayerNorm) -> Linear -> (SiLU / GLU) -> (+ residual) -> (LayerNorm)
# ----------------------------------------------------------------------------
def _fused_linear_kernel(*refs, activation, has_ln, has_res, res_scale,
                         has_post_ln, n_out):
    it = iter(refs)
    x_ref = next(it)
    w_ref = next(it)
    b_ref = next(it)
    g_ref = beta_ref = res_ref = pg_ref = pb_ref = None
    if has_ln:
        g_ref = next(it)
        beta_ref = next(it)
    if has_res:
        res_ref = next(it)
    if has_post_ln:
        pg_ref = next(it)
        pb_ref = next(it)
    o_ref = next(it)

    x = x_ref[...].astype(jnp.float32)
    if has_ln:
        mu = jnp.mean(x, axis=-1, keepdims=True)
        xc = x - mu
        var = jnp.mean(xc * xc, axis=-1, keepdims=True)
        x = xc * jax.lax.rsqrt(var + 1e-5) * g_ref[...] + beta_ref[...]

    # bf16 MXU inputs, f32 accumulation.
    y = jnp.dot(x.astype(jnp.bfloat16), w_ref[...].astype(jnp.bfloat16),
                preferred_element_type=jnp.float32)
    y = y + b_ref[...]

    if activation == "silu":
        y = y * jax.nn.sigmoid(y)
    elif activation == "glu":
        y = y[:, :n_out] * jax.nn.sigmoid(y[:, n_out:])

    if has_res:
        y = res_ref[...].astype(jnp.float32) + res_scale * y

    if has_post_ln:
        mu = jnp.mean(y, axis=-1, keepdims=True)
        yc = y - mu
        var = jnp.mean(yc * yc, axis=-1, keepdims=True)
        y = yc * jax.lax.rsqrt(var + 1e-5) * pg_ref[...] + pb_ref[...]

    o_ref[...] = y.astype(o_ref.dtype)


def fused_linear(x, w, b=None, *, ln=None, activation=None, residual=None,
                 res_scale=1.0, post_ln=None, out_dtype=None, tm=256):
    """y = [post_ln]( [residual + res_scale *] act( [ln](x) @ W + b ) )."""
    orig_shape = x.shape
    K = orig_shape[-1]
    M = math.prod(orig_shape[:-1])
    N = w.shape[1]
    n_out = N // 2 if activation == "glu" else N
    if out_dtype is None:
        out_dtype = x.dtype

    x2 = x.reshape(M, K)
    if b is None:
        b = jnp.zeros((N,), jnp.float32)
    res2 = None
    if residual is not None:
        res2 = residual.reshape(M, n_out)

    if M <= tm:
        tm_eff, Mp = M, M
    else:
        tm_eff = tm
        Mp = _round_up(M, tm_eff)
        if Mp != M:
            x2 = jnp.pad(x2, ((0, Mp - M), (0, 0)))
            if res2 is not None:
                res2 = jnp.pad(res2, ((0, Mp - M), (0, 0)))

    grid = (Mp // tm_eff,)

    in_specs = [
        pl.BlockSpec((tm_eff, K), lambda i: (i, 0)),
        pl.BlockSpec((K, N), lambda i: (0, 0)),
        pl.BlockSpec((1, N), lambda i: (0, 0)),
    ]
    args = [x2, w, b.reshape(1, N).astype(jnp.float32)]
    if ln is not None:
        g, bb = ln
        in_specs += [pl.BlockSpec((1, K), lambda i: (0, 0)),
                     pl.BlockSpec((1, K), lambda i: (0, 0))]
        args += [g.reshape(1, K).astype(jnp.float32),
                 bb.reshape(1, K).astype(jnp.float32)]
    if res2 is not None:
        in_specs.append(pl.BlockSpec((tm_eff, n_out), lambda i: (i, 0)))
        args.append(res2)
    if post_ln is not None:
        pg, pb = post_ln
        in_specs += [pl.BlockSpec((1, n_out), lambda i: (0, 0)),
                     pl.BlockSpec((1, n_out), lambda i: (0, 0))]
        args += [pg.reshape(1, n_out).astype(jnp.float32),
                 pb.reshape(1, n_out).astype(jnp.float32)]

    out = pl.pallas_call(
        functools.partial(_fused_linear_kernel,
                          activation=activation,
                          has_ln=ln is not None,
                          has_res=res2 is not None,
                          res_scale=res_scale,
                          has_post_ln=post_ln is not None,
                          n_out=n_out),
        out_shape=jax.ShapeDtypeStruct((Mp, n_out), out_dtype),
        grid=grid,
        in_specs=in_specs,
        out_specs=pl.BlockSpec((tm_eff, n_out), lambda i: (i, 0)),
        compiler_params=pltpu.CompilerParams(
            dimension_semantics=("parallel",)),
    )(*args)

    if Mp != M:
        out = out[:M]
    return out.reshape(orig_shape[:-1] + (n_out,))


# ----------------------------------------------------------------------------
# Flash attention (heads packed per batch, KV-axis tiling, online softmax)
# ----------------------------------------------------------------------------
def _flash_attention_kernel(q_ref, k_ref, v_ref, bias_ref, o_ref,
                            m_sc, l_sc, acc_sc, *, scale, heads, dim_head):
    j = pl.program_id(1)

    @pl.when(j == 0)
    def _init():
        m_sc[...] = jnp.full(m_sc.shape, -1e30, m_sc.dtype)
        l_sc[...] = jnp.zeros(l_sc.shape, l_sc.dtype)
        acc_sc[...] = jnp.zeros(acc_sc.shape, acc_sc.dtype)

    q = q_ref[0].astype(jnp.bfloat16)          # (H, N, Dh)
    k = k_ref[0].astype(jnp.bfloat16)          # (H, tk, Dh)
    v = v_ref[0].astype(jnp.bfloat16)          # (H, tk, Dh)

    s = jnp.einsum("hqd,hkd->hqk", q, k,
                   preferred_element_type=jnp.float32) * scale
    s = s + bias_ref[0].astype(jnp.float32)    # (H, N, tk)

    m_prev = m_sc[...]
    m_new = jnp.maximum(m_prev, jnp.max(s, axis=-1, keepdims=True))
    alpha = jnp.exp(m_prev - m_new)
    p = jnp.exp(s - m_new)
    l_sc[...] = alpha * l_sc[...] + jnp.sum(p, axis=-1, keepdims=True)
    acc_sc[...] = alpha * acc_sc[...] + jnp.einsum(
        "hqk,hkd->hqd", p.astype(jnp.bfloat16), v,
        preferred_element_type=jnp.float32)
    m_sc[...] = m_new

    @pl.when(j == pl.num_programs(1) - 1)
    def _finalize():
        for h in range(heads):
            inv_l = pl.reciprocal(l_sc[h], approx=True)       # (N, 1)
            o_ref[0, :, h * dim_head:(h + 1) * dim_head] = (
                acc_sc[h] * inv_l).astype(o_ref.dtype)


def pallas_flash_attention(q, k, v, bias, scale, *, kv_tile=None):
    """q/k/v: (B, H, N, Dh); bias: (B, H, N, N). Returns (B, N, H*Dh)."""
    B, H, N, Dh = q.shape
    if kv_tile is None:
        kv_tile = N if N <= 512 else 256
    Nk = _round_up(N, kv_tile)
    if Nk != N:
        pad = Nk - N
        k = jnp.pad(k, ((0, 0), (0, 0), (0, pad), (0, 0)))
        v = jnp.pad(v, ((0, 0), (0, 0), (0, pad), (0, 0)))
        bias = jnp.pad(bias, ((0, 0), (0, 0), (0, 0), (0, pad)),
                       constant_values=-1e30)

    return pl.pallas_call(
        functools.partial(_flash_attention_kernel,
                          scale=scale, heads=H, dim_head=Dh),
        out_shape=jax.ShapeDtypeStruct((B, N, H * Dh), jnp.float32),
        grid=(B, Nk // kv_tile),
        in_specs=[
            pl.BlockSpec((1, H, N, Dh), lambda b, j: (b, 0, 0, 0)),
            pl.BlockSpec((1, H, kv_tile, Dh), lambda b, j: (b, 0, j, 0)),
            pl.BlockSpec((1, H, kv_tile, Dh), lambda b, j: (b, 0, j, 0)),
            pl.BlockSpec((1, H, N, kv_tile), lambda b, j: (b, 0, 0, j)),
        ],
        out_specs=pl.BlockSpec((1, N, H * Dh), lambda b, j: (b, 0, 0)),
        scratch_shapes=[
            pltpu.VMEM((H, N, 1), jnp.float32),
            pltpu.VMEM((H, N, 1), jnp.float32),
            pltpu.VMEM((H, N, Dh), jnp.float32),
        ],
        compiler_params=pltpu.CompilerParams(
            dimension_semantics=("parallel", "arbitrary")),
    )(q, k, v, bias)


# ----------------------------------------------------------------------------
# Conv module core: depthwise conv + BN(eval) + Swish + pointwise2 + residual,
# all in (T, C) layout with channels on lanes.
# ----------------------------------------------------------------------------
def _conv_module_kernel(x_ref, dww_ref, dwb_ref, bns_ref, bnt_ref,
                        pw2w_ref, pw2b_ref, res_ref, o_ref, xp_sc,
                        *, ksize, pad_l, seq_len):
    C = x_ref.shape[2]
    # Build the zero-padded ("same" padding) time window in VMEM scratch.
    xp_sc[...] = jnp.zeros(xp_sc.shape, xp_sc.dtype)
    xp_sc[pad_l:pad_l + seq_len, :] = x_ref[0].astype(jnp.float32)
    xp = xp_sc[...]                                   # (T + K - 1, C)

    w = dww_ref[...].astype(jnp.float32)              # (K, C)
    acc = jnp.zeros((seq_len, C), jnp.float32)
    for kk in range(ksize):                           # static unroll over taps
        acc = acc + xp[kk:kk + seq_len, :] * w[kk:kk + 1, :]

    y = acc + dwb_ref[...]
    y = y * bns_ref[...] + bnt_ref[...]               # folded eval BatchNorm
    y = y * jax.nn.sigmoid(y)                         # swish

    out = jnp.dot(y.astype(jnp.bfloat16), pw2w_ref[...].astype(jnp.bfloat16),
                  preferred_element_type=jnp.float32)
    out = out + pw2b_ref[...] + res_ref[0].astype(jnp.float32)
    o_ref[0] = out.astype(o_ref.dtype)


def pallas_conv_core(x_glu, dw_w, dw_b, bn_scale, bn_shift, pw2_w, pw2_b,
                     residual, *, ksize, pad_l):
    B, T, C = x_glu.shape
    D = pw2_w.shape[1]
    return pl.pallas_call(
        functools.partial(_conv_module_kernel,
                          ksize=ksize, pad_l=pad_l, seq_len=T),
        out_shape=jax.ShapeDtypeStruct((B, T, D), residual.dtype),
        grid=(B,),
        in_specs=[
            pl.BlockSpec((1, T, C), lambda b: (b, 0, 0)),
            pl.BlockSpec((ksize, C), lambda b: (0, 0)),
            pl.BlockSpec((1, C), lambda b: (0, 0)),
            pl.BlockSpec((1, C), lambda b: (0, 0)),
            pl.BlockSpec((1, C), lambda b: (0, 0)),
            pl.BlockSpec((C, D), lambda b: (0, 0)),
            pl.BlockSpec((1, D), lambda b: (0, 0)),
            pl.BlockSpec((1, T, D), lambda b: (b, 0, 0)),
        ],
        out_specs=pl.BlockSpec((1, T, D), lambda b: (b, 0, 0)),
        scratch_shapes=[pltpu.VMEM((T + ksize - 1, C), jnp.float32)],
        compiler_params=pltpu.CompilerParams(
            dimension_semantics=("parallel",)),
    )(x_glu, dw_w, dw_b.reshape(1, C), bn_scale.reshape(1, C),
      bn_shift.reshape(1, C), pw2_w, pw2_b.reshape(1, D), residual)


# ----------------------------------------------------------------------------
# Conformer sub-modules (thin JAX glue around the fused Pallas kernels)
# ----------------------------------------------------------------------------
def attention_block(x, p, heads, dim_head, max_pos_emb):
    B, N, _ = x.shape
    inner = heads * dim_head
    scale = dim_head ** -0.5

    # LN + fused qkv projection (no bias), bf16 output for the MXU/DMA.
    qkv = fused_linear(x, p["qkv_w"], None, ln=(p["ln_g"], p["ln_b"]),
                       out_dtype=jnp.bfloat16)                  # (B, N, 3*inner)
    q, k, v = jnp.split(qkv, 3, axis=-1)

    def split_heads(t):
        return t.reshape(B, N, heads, dim_head).transpose(0, 2, 1, 3)

    qh, kh, vh = split_heads(q), split_heads(k), split_heads(v)  # (B,H,N,Dh)

    # Shaw relative positional bias: MXU matmul against the embedding table,
    # then a gather in score space (never materializes an (N, N, Dh) tensor).
    s = jnp.einsum("bhnd,rd->bhnr", qh, p["rel_emb"],
                   preferred_element_type=jnp.float32)           # (B,H,N,2P+1)
    seq = jnp.arange(N)
    dist = (jnp.clip(seq[:, None] - seq[None, :], -max_pos_emb, max_pos_emb)
            + max_pos_emb).astype(jnp.int32)                     # (N, N)
    bias = jnp.take_along_axis(
        s, jnp.broadcast_to(dist, (B, heads, N, N)), axis=-1) * scale

    o = pallas_flash_attention(qh, kh, vh, bias, scale)          # (B, N, inner)
    return fused_linear(o, p["out_w"], p["out_b"], residual=x)   # +residual


def conv_block(x, p, ksize):
    # LN + pointwise conv1 + GLU fused.
    h = fused_linear(x, p["pw1_w"], p["pw1_b"], ln=(p["ln_g"], p["ln_b"]),
                     activation="glu", out_dtype=jnp.bfloat16)   # (B, T, C)
    eps = 1e-5
    bn_scale = p["bn_g"] * jax.lax.rsqrt(p["bn_var"] + eps)
    bn_shift = p["bn_b"] - p["bn_mean"] * bn_scale
    pad_l = ksize // 2
    # depthwise conv + BN + swish + pointwise conv2 + residual, one kernel.
    return pallas_conv_core(h, p["dw_w"], p["dw_b"], bn_scale, bn_shift,
                            p["pw2_w"], p["pw2_b"], x,
                            ksize=ksize, pad_l=pad_l)


def conformer_block(x, p, *, heads, dim_head, max_pos_emb, conv_kernel):
    # FF1 (half-step residual)
    h = fused_linear(x, p["ff1"]["w1"], p["ff1"]["b1"],
                     ln=(p["ff1"]["ln_g"], p["ff1"]["ln_b"]), activation="silu")
    x = fused_linear(h, p["ff1"]["w2"], p["ff1"]["b2"],
                     residual=x, res_scale=0.5)
    # MHSA
    x = attention_block(x, p["attn"], heads, dim_head, max_pos_emb)
    # Conv module
    x = conv_block(x, p["conv"], conv_kernel)
    # FF2 (half-step residual) with the block's post-LayerNorm fused into the
    # epilogue of its second linear.
    h = fused_linear(x, p["ff2"]["w1"], p["ff2"]["b1"],
                     ln=(p["ff2"]["ln_g"], p["ff2"]["ln_b"]), activation="silu")
    x = fused_linear(h, p["ff2"]["w2"], p["ff2"]["b2"],
                     residual=x, res_scale=0.5,
                     post_ln=(p["post_ln_g"], p["post_ln_b"]))
    return x


def conformer_ctc_forward(params, x, *, heads, dim_head, max_pos_emb,
                          conv_kernel):
    h = fused_linear(x, params["in_w"], params["in_b"])
    for bp in params["blocks"]:
        h = conformer_block(h, bp, heads=heads, dim_head=dim_head,
                            max_pos_emb=max_pos_emb, conv_kernel=conv_kernel)
    # Final classifier: pad the class dim to a lane-dense multiple of 128,
    # then slice back.
    nc = params["out_b"].shape[0]
    ncp = _round_up(nc, 128)
    w = jnp.pad(params["out_w"], ((0, 0), (0, ncp - nc)))
    b = jnp.pad(params["out_b"], ((0, ncp - nc),))
    out = fused_linear(h, w, b)
    return out[..., :nc]


# ----------------------------------------------------------------------------
# Deterministic parameter initialisation
# ----------------------------------------------------------------------------
class KeyGen:
    def __init__(self, key):
        self._key = key

    def __call__(self):
        self._key, sub = jax.random.split(self._key)
        return sub


def _normal(kg, shape, dtype=jnp.bfloat16, scale=0.02):
    return (scale * jax.random.normal(kg(), shape, jnp.float32)).astype(dtype)


def init_block_params(kg, dim, heads, dim_head, ff_mult, conv_expansion,
                      conv_kernel, max_pos_emb):
    inner = heads * dim_head
    conv_inner = dim * conv_expansion
    hid = dim * ff_mult

    def ff_params():
        return dict(
            ln_g=jnp.ones((dim,), jnp.float32),
            ln_b=jnp.zeros((dim,), jnp.float32),
            w1=_normal(kg, (dim, hid)), b1=jnp.zeros((hid,), jnp.float32),
            w2=_normal(kg, (hid, dim)), b2=jnp.zeros((dim,), jnp.float32),
        )

    return dict(
        ff1=ff_params(),
        attn=dict(
            ln_g=jnp.ones((dim,), jnp.float32),
            ln_b=jnp.zeros((dim,), jnp.float32),
            # q / k / v projections stored as one concatenated weight.
            qkv_w=_normal(kg, (dim, 3 * inner)),
            out_w=_normal(kg, (inner, dim)),
            out_b=jnp.zeros((dim,), jnp.float32),
            rel_emb=_normal(kg, (2 * max_pos_emb + 1, dim_head),
                            dtype=jnp.float32),
        ),
        conv=dict(
            ln_g=jnp.ones((dim,), jnp.float32),
            ln_b=jnp.zeros((dim,), jnp.float32),
            pw1_w=_normal(kg, (dim, 2 * conv_inner)),
            pw1_b=jnp.zeros((2 * conv_inner,), jnp.float32),
            dw_w=_normal(kg, (conv_kernel, conv_inner), dtype=jnp.float32),
            dw_b=jnp.zeros((conv_inner,), jnp.float32),
            bn_g=jnp.ones((conv_inner,), jnp.float32),
            bn_b=jnp.zeros((conv_inner,), jnp.float32),
            bn_mean=jnp.zeros((conv_inner,), jnp.float32),
            bn_var=jnp.ones((conv_inner,), jnp.float32),
            pw2_w=_normal(kg, (conv_inner, dim)),
            pw2_b=jnp.zeros((dim,), jnp.float32),
        ),
        ff2=ff_params(),
        post_ln_g=jnp.ones((dim,), jnp.float32),
        post_ln_b=jnp.zeros((dim,), jnp.float32),
    )


def init_params(key, input_dim, num_classes, dim, depth, heads, dim_head,
                ff_mult, conv_expansion, conv_kernel, max_pos_emb):
    kg = KeyGen(key)
    return dict(
        in_w=_normal(kg, (input_dim, dim)),
        in_b=jnp.zeros((dim,), jnp.float32),
        blocks=[
            init_block_params(kg, dim, heads, dim_head, ff_mult,
                              conv_expansion, conv_kernel, max_pos_emb)
            for _ in range(depth)
        ],
        out_w=_normal(kg, (dim, num_classes)),
        out_b=jnp.zeros((num_classes,), jnp.float32),
    )


# ----------------------------------------------------------------------------
if __name__ == "__main__":
    # Small configuration consistent with ConformerCTCModel(input_dim,
    # num_classes, encoder_dim=..., depth=..., heads=..., dim_head=...,
    # conv_kernel_size=...).
    B, T = 2, 16
    INPUT_DIM = 40
    NUM_CLASSES = 12
    ENCODER_DIM = 64
    DEPTH = 2
    HEADS = 4
    DIM_HEAD = 16
    FF_MULT = 4
    CONV_EXPANSION = 2
    CONV_KERNEL = 7
    MAX_POS_EMB = 512

    root = jax.random.PRNGKey(0)
    pkey, xkey = jax.random.split(root)
    params = init_params(pkey, INPUT_DIM, NUM_CLASSES, ENCODER_DIM, DEPTH,
                         HEADS, DIM_HEAD, FF_MULT, CONV_EXPANSION,
                         CONV_KERNEL, MAX_POS_EMB)
    x = jax.random.normal(xkey, (B, T, INPUT_DIM), jnp.float32)

    fwd = jax.jit(functools.partial(
        conformer_ctc_forward,
        heads=HEADS, dim_head=DIM_HEAD,
        max_pos_emb=MAX_POS_EMB, conv_kernel=CONV_KERNEL))

    out = fwd(params, x)
    jax.block_until_ready(out)
    assert out.shape == (B, T, NUM_CLASSES), out.shape
    assert bool(jnp.all(jnp.isfinite(out)))
    print("KERNEL_OK")
</pallas_src>

<mosaic_0001>
module attributes {stable_mosaic.version = 11 : i64} {
  func.func @_fused_linear_kernel(%arg0: i32, %arg1: memref<32x40xf32, #tpu.memory_space<vmem>>, %arg2: memref<40x64xbf16, #tpu.memory_space<vmem>>, %arg3: memref<1x64xf32, #tpu.memory_space<vmem>>, %arg4: memref<32x64xf32, #tpu.memory_space<vmem>>) attributes {dimension_semantics = [#tpu.dimension_semantics<parallel>], iteration_bounds = array<i64: 1>, scalar_prefetch = 0 : i64, scratch_operands = 0 : i64, tpu.core_type = #tpu.core_type<tc>, window_params = [{transform_indices = @transform_0, window_bounds = array<i64: 32, 40>}, {pipeline_mode = #tpu.pipeline_mode<synchronous>, transform_indices = @transform_1, window_bounds = array<i64: 40, 64>}, {pipeline_mode = #tpu.pipeline_mode<synchronous>, transform_indices = @transform_2, window_bounds = array<i64: 1, 64>}, {transform_indices = @transform_3, window_bounds = array<i64: 32, 64>}]} {
    %c0 = arith.constant 0 : index
    %c0_0 = arith.constant 0 : index
    %0 = vector.load %arg1[%c0, %c0_0] : memref<32x40xf32, #tpu.memory_space<vmem>>, vector<32x40xf32>
    %1 = arith.truncf %0 : vector<32x40xf32> to vector<32x40xbf16>
    %c0_1 = arith.constant 0 : index
    %c0_2 = arith.constant 0 : index
    %2 = vector.load %arg2[%c0_1, %c0_2] : memref<40x64xbf16, #tpu.memory_space<vmem>>, vector<40x64xbf16>
    %cst = arith.constant dense<0.000000e+00> : vector<32x64xf32>
    %3 = tpu.matmul %1, %2, %cst {dimension_numbers = #tpu.dot_dimension_numbers<[1], [0], [0], [1], [0, 0, 1, 1], [], []>} : vector<32x40xbf16>, vector<40x64xbf16>, vector<32x64xf32> -> vector<32x64xf32>
    %c0_3 = arith.constant 0 : index
    %c0_4 = arith.constant 0 : index
    %4 = vector.load %arg3[%c0_3, %c0_4] : memref<1x64xf32, #tpu.memory_space<vmem>>, vector<1x64xf32>
    %5 = vector.broadcast %4 : vector<1x64xf32> to vector<32x64xf32>
    %6 = arith.addf %3, %5 : vector<32x64xf32>
    %c0_5 = arith.constant 0 : index
    %c0_6 = arith.constant 0 : index
    %7 = vector.load %arg4[%c0_5, %c0_6] : memref<32x64xf32, #tpu.memory_space<vmem>>, vector<32x64xf32>
    tpu.vector_store %arg4[%c0_5, %c0_6], %6 {strides = array<i32>} : memref<32x64xf32, #tpu.memory_space<vmem>>, vector<32x64xf32>,
    return
  }
  func.func @transform_0(%arg0: i32) -> (i32, i32) {
    %c0_i32 = arith.constant 0 : i32
    %c0_i32_0 = arith.constant 0 : i32
    return %arg0, %c0_i32 : i32, i32
  }
  func.func @transform_1(%arg0: i32) -> (i32, i32) {
    %c0_i32 = arith.constant 0 : i32
    %c0_i32_0 = arith.constant 0 : i32
    %c0_i32_1 = arith.constant 0 : i32
    return %c0_i32, %c0_i32_0 : i32, i32
  }
  func.func @transform_2(%arg0: i32) -> (i32, i32) {
    %c0_i32 = arith.constant 0 : i32
    %c0_i32_0 = arith.constant 0 : i32
    %c0_i32_1 = arith.constant 0 : i32
    return %c0_i32, %c0_i32_0 : i32, i32
  }
  func.func @transform_3(%arg0: i32) -> (i32, i32) {
    %c0_i32 = arith.constant 0 : i32
    %c0_i32_0 = arith.constant 0 : i32
    return %arg0, %c0_i32 : i32, i32
  }
}

module attributes {stable_mosaic.version = 11 : i64} {
  func.func @_fused_linear_kernel(%arg0: i32, %arg1: memref<32x64xf32, #tpu.memory_space<vmem>>, %arg2: memref<64x256xbf16, #tpu.memory_space<vmem>>, %arg3: memref<1x256xf32, #tpu.memory_space<vmem>>, %arg4: memref<1x64xf32, #tpu.memory_space<vmem>>, %arg5: memref<1x64xf32, #tpu.memory_space<vmem>>, %arg6: memref<32x256xf32, #tpu.memory_space<vmem>>) attributes {dimension_semantics = [#tpu.dimension_semantics<parallel>], iteration_bounds = array<i64: 1>, scalar_prefetch = 0 : i64, scratch_operands = 0 : i64, tpu.core_type = #tpu.core_type<tc>, window_params = [{transform_indices = @transform_0, window_bounds = array<i64: 32, 64>}, {pipeline_mode = #tpu.pipeline_mode<synchronous>, transform_indices = @transform_1, window_bounds = array<i64: 64, 256>}, {pipeline_mode = #tpu.pipeline_mode<synchronous>, transform_indices = @transform_2, window_bounds = array<i64: 1, 256>}, {pipeline_mode = #tpu.pipeline_mode<synchronous>, transform_indices = @transform_3, window_bounds = array<i64: 1, 64>}, {pipeline_mode = #tpu.pipeline_mode<synchronous>, transform_indices = @transform_4, window_bounds = array<i64: 1, 64>}, {transform_indices = @transform_5, window_bounds = array<i64: 32, 256>}]} {
    %c0 = arith.constant 0 : index
    %c0_0 = arith.constant 0 : index
    %0 = vector.load %arg1[%c0, %c0_0] : memref<32x64xf32, #tpu.memory_space<vmem>>, vector<32x64xf32>
    %cst = arith.constant dense<0.000000e+00> : vector<32xf32>
    %1 = vector.multi_reduction <add>, %0, %cst [1] : vector<32x64xf32> to vector<32xf32>
    %2 = vector.shape_cast %1 : vector<32xf32> to vector<32x1xf32>
    %cst_1 = arith.constant 6.400000e+01 : f32
    %3 = vector.broadcast %cst_1 : f32 to vector<32x1xf32>
    %4 = arith.divf %2, %3 : vector<32x1xf32>
    %5 = vector.broadcast %4 : vector<32x1xf32> to vector<32x64xf32>
    %6 = arith.subf %0, %5 : vector<32x64xf32>
    %7 = arith.mulf %6, %6 : vector<32x64xf32>
    %cst_2 = arith.constant dense<0.000000e+00> : vector<32xf32>
    %8 = vector.multi_reduction <add>, %7, %cst_2 [1] : vector<32x64xf32> to vector<32xf32>
    %9 = vector.shape_cast %8 : vector<32xf32> to vector<32x1xf32>
    %cst_3 = arith.constant 6.400000e+01 : f32
    %10 = vector.broadcast %cst_3 : f32 to vector<32x1xf32>
    %11 = arith.divf %9, %10 : vector<32x1xf32>
    %cst_4 = arith.constant 9.99999974E-6 : f32
    %12 = vector.broadcast %cst_4 : f32 to vector<32x1xf32>
    %13 = arith.addf %11, %12 : vector<32x1xf32>
    %14 = math.rsqrt %13 : vector<32x1xf32>
    %15 = vector.broadcast %14 : vector<32x1xf32> to vector<32x64xf32>
    %16 = arith.mulf %6, %15 : vector<32x64xf32>
    %c0_5 = arith.constant 0 : index
    %c0_6 = arith.constant 0 : index
    %17 = vector.load %arg4[%c0_5, %c0_6] : memref<1x64xf32, #tpu.memory_space<vmem>>, vector<1x64xf32>
    %18 = vector.broadcast %17 : vector<1x64xf32> to vector<32x64xf32>
    %19 = arith.mulf %16, %18 : vector<32x64xf32>
    %c0_7 = arith.constant 0 : index
    %c0_8 = arith.constant 0 : index
    %20 = vector.load %arg5[%c0_7, %c0_8] : memref<1x64xf32, #tpu.memory_space<vmem>>, vector<1x64xf32>
    %21 = vector.broadcast %20 : vector<1x64xf32> to vector<32x64xf32>
    %22 = arith.addf %19, %21 : vector<32x64xf32>
    %23 = arith.truncf %22 : vector<32x64xf32> to vector<32x64xbf16>
    %c0_9 = arith.constant 0 : index
    %c0_10 = arith.constant 0 : index
    %24 = vector.load %arg2[%c0_9, %c0_10] : memref<64x256xbf16, #tpu.memory_space<vmem>>, vector<64x256xbf16>
    %cst_11 = arith.constant dense<0.000000e+00> : vector<32x256xf32>
    %25 = tpu.matmul %23, %24, %cst_11 {dimension_numbers = #tpu.dot_dimension_numbers<[1], [0], [0], [1], [0, 0, 1, 1], [], []>} : vector<32x64xbf16>, vector<64x256xbf16>, vector<32x256xf32> -> vector<32x256xf32>
    %c0_12 = arith.constant 0 : index
    %c0_13 = arith.constant 0 : index
    %26 = vector.load %arg3[%c0_12, %c0_13] : memref<1x256xf32, #tpu.memory_space<vmem>>, vector<1x256xf32>
    %27 = vector.broadcast %26 : vector<1x256xf32> to vector<32x256xf32>
    %28 = arith.addf %25, %27 : vector<32x256xf32>
    %29 = arith.negf %28 : vector<32x256xf32>
    %30 = math.exp %29 : vector<32x256xf32>
    %cst_14 = arith.constant 1.000000e+00 : f32
    %31 = vector.broadcast %cst_14 : f32 to vector<32x256xf32>
    %32 = arith.addf %31, %30 : vector<32x256xf32>
    %33 = arith.divf %31, %32 : vector<32x256xf32>
    %34 = arith.mulf %28, %33 : vector<32x256xf32>
    %c0_15 = arith.constant 0 : index
    %c0_16 = arith.constant 0 : index
    %35 = vector.load %arg6[%c0_15, %c0_16] : memref<32x256xf32, #tpu.memory_space<vmem>>, vector<32x256xf32>
    tpu.vector_store %arg6[%c0_15, %c0_16], %34 {strides = array<i32>} : memref<32x256xf32, #tpu.memory_space<vmem>>, vector<32x256xf32>,
    return
  }
  func.func @transform_0(%arg0: i32) -> (i32, i32) {
    %c0_i32 = arith.constant 0 : i32
    %c0_i32_0 = arith.constant 0 : i32
    return %arg0, %c0_i32 : i32, i32
  }
  func.func @transform_1(%arg0: i32) -> (i32, i32) {
    %c0_i32 = arith.constant 0 : i32
    %c0_i32_0 = arith.constant 0 : i32
    %c0_i32_1 = arith.constant 0 : i32
    return %c0_i32, %c0_i32_0 : i32, i32
  }
  func.func @transform_2(%arg0: i32) -> (i32, i32) {
    %c0_i32 = arith.constant 0 : i32
    %c0_i32_0 = arith.constant 0 : i32
    %c0_i32_1 = arith.constant 0 : i32
    return %c0_i32, %c0_i32_0 : i32, i32
  }
  func.func @transform_3(%arg0: i32) -> (i32, i32) {
    %c0_i32 = arith.constant 0 : i32
    %c0_i32_0 = arith.constant 0 : i32
    %c0_i32_1 = arith.constant 0 : i32
    return %c0_i32, %c0_i32_0 : i32, i32
  }
  func.func @transform_4(%arg0: i32) -> (i32, i32) {
    %c0_i32 = arith.constant 0 : i32
    %c0_i32_0 = arith.constant 0 : i32
    %c0_i32_1 = arith.constant 0 : i32
    return %c0_i32, %c0_i32_0 : i32, i32
  }
  func.func @transform_5(%arg0: i32) -> (i32, i32) {
    %c0_i32 = arith.constant 0 : i32
    %c0_i32_0 = arith.constant 0 : i32
    return %arg0, %c0_i32 : i32, i32
  }
}

module attributes {stable_mosaic.version = 11 : i64} {
  func.func @_fused_linear_kernel(%arg0: i32, %arg1: memref<32x256xf32, #tpu.memory_space<vmem>>, %arg2: memref<256x64xbf16, #tpu.memory_space<vmem>>, %arg3: memref<1x64xf32, #tpu.memory_space<vmem>>, %arg4: memref<32x64xf32, #tpu.memory_space<vmem>>, %arg5: memref<32x64xf32, #tpu.memory_space<vmem>>) attributes {dimension_semantics = [#tpu.dimension_semantics<parallel>], iteration_bounds = array<i64: 1>, scalar_prefetch = 0 : i64, scratch_operands = 0 : i64, tpu.core_type = #tpu.core_type<tc>, window_params = [{transform_indices = @transform_0, window_bounds = array<i64: 32, 256>}, {pipeline_mode = #tpu.pipeline_mode<synchronous>, transform_indices = @transform_1, window_bounds = array<i64: 256, 64>}, {pipeline_mode = #tpu.pipeline_mode<synchronous>, transform_indices = @transform_2, window_bounds = array<i64: 1, 64>}, {transform_indices = @transform_3, window_bounds = array<i64: 32, 64>}, {transform_indices = @transform_4, window_bounds = array<i64: 32, 64>}]} {
    %c0 = arith.constant 0 : index
    %c0_0 = arith.constant 0 : index
    %0 = vector.load %arg1[%c0, %c0_0] : memref<32x256xf32, #tpu.memory_space<vmem>>, vector<32x256xf32>
    %1 = arith.truncf %0 : vector<32x256xf32> to vector<32x256xbf16>
    %c0_1 = arith.constant 0 : index
    %c0_2 = arith.constant 0 : index
    %2 = vector.load %arg2[%c0_1, %c0_2] : memref<256x64xbf16, #tpu.memory_space<vmem>>, vector<256x64xbf16>
    %cst = arith.constant dense<0.000000e+00> : vector<32x64xf32>
    %3 = tpu.matmul %1, %2, %cst {dimension_numbers = #tpu.dot_dimension_numbers<[1], [0], [0], [1], [0, 0, 1, 1], [], []>} : vector<32x256xbf16>, vector<256x64xbf16>, vector<32x64xf32> -> vector<32x64xf32>
    %c0_3 = arith.constant 0 : index
    %c0_4 = arith.constant 0 : index
    %4 = vector.load %arg3[%c0_3, %c0_4] : memref<1x64xf32, #tpu.memory_space<vmem>>, vector<1x64xf32>
    %5 = vector.broadcast %4 : vector<1x64xf32> to vector<32x64xf32>
    %6 = arith.addf %3, %5 : vector<32x64xf32>
    %c0_5 = arith.constant 0 : index
    %c0_6 = arith.constant 0 : index
    %7 = vector.load %arg4[%c0_5, %c0_6] : memref<32x64xf32, #tpu.memory_space<vmem>>, vector<32x64xf32>
    %cst_7 = arith.constant 5.000000e-01 : f32
    %8 = vector.broadcast %cst_7 : f32 to vector<32x64xf32>
    %9 = arith.mulf %8, %6 : vector<32x64xf32>
    %10 = arith.addf %7, %9 : vector<32x64xf32>
    %c0_8 = arith.constant 0 : index
    %c0_9 = arith.constant 0 : index
    %11 = vector.load %arg5[%c0_8, %c0_9] : memref<32x64xf32, #tpu.memory_space<vmem>>, vector<32x64xf32>
    tpu.vector_store %arg5[%c0_8, %c0_9], %10 {strides = array<i32>} : memref<32x64xf32, #tpu.memory_space<vmem>>, vector<32x64xf32>,
    return
  }
  func.func @transform_0(%arg0: i32) -> (i32, i32) {
    %c0_i32 = arith.constant 0 : i32
    %c0_i32_0 = arith.constant 0 : i32
    return %arg0, %c0_i32 : i32, i32
  }
  func.func @transform_1(%arg0: i32) -> (i32, i32) {
    %c0_i32 = arith.constant 0 : i32
    %c0_i32_0 = arith.constant 0 : i32
    %c0_i32_1 = arith.constant 0 : i32
    return %c0_i32, %c0_i32_0 : i32, i32
  }
  func.func @transform_2(%arg0: i32) -> (i32, i32) {
    %c0_i32 = arith.constant 0 : i32
    %c0_i32_0 = arith.constant 0 : i32
    %c0_i32_1 = arith.constant 0 : i32
    return %c0_i32, %c0_i32_0 : i32, i32
  }
  func.func @transform_3(%arg0: i32) -> (i32, i32) {
    %c0_i32 = arith.constant 0 : i32
    %c0_i32_0 = arith.constant 0 : i32
    return %arg0, %c0_i32 : i32, i32
  }
  func.func @transform_4(%arg0: i32) -> (i32, i32) {
    %c0_i32 = arith.constant 0 : i32
    %c0_i32_0 = arith.constant 0 : i32
    return %arg0, %c0_i32 : i32, i32
  }
}

module attributes {stable_mosaic.version = 11 : i64} {
  func.func @_fused_linear_kernel(%arg0: i32, %arg1: memref<32x64xf32, #tpu.memory_space<vmem>>, %arg2: memref<64x192xbf16, #tpu.memory_space<vmem>>, %arg3: memref<1x192xf32, #tpu.memory_space<vmem>>, %arg4: memref<1x64xf32, #tpu.memory_space<vmem>>, %arg5: memref<1x64xf32, #tpu.memory_space<vmem>>, %arg6: memref<32x192xbf16, #tpu.memory_space<vmem>>) attributes {dimension_semantics = [#tpu.dimension_semantics<parallel>], iteration_bounds = array<i64: 1>, scalar_prefetch = 0 : i64, scratch_operands = 0 : i64, tpu.core_type = #tpu.core_type<tc>, window_params = [{transform_indices = @transform_0, window_bounds = array<i64: 32, 64>}, {pipeline_mode = #tpu.pipeline_mode<synchronous>, transform_indices = @transform_1, window_bounds = array<i64: 64, 192>}, {pipeline_mode = #tpu.pipeline_mode<synchronous>, transform_indices = @transform_2, window_bounds = array<i64: 1, 192>}, {pipeline_mode = #tpu.pipeline_mode<synchronous>, transform_indices = @transform_3, window_bounds = array<i64: 1, 64>}, {pipeline_mode = #tpu.pipeline_mode<synchronous>, transform_indices = @transform_4, window_bounds = array<i64: 1, 64>}, {transform_indices = @transform_5, window_bounds = array<i64: 32, 192>}]} {
    %c0 = arith.constant 0 : index
    %c0_0 = arith.constant 0 : index
    %0 = vector.load %arg1[%c0, %c0_0] : memref<32x64xf32, #tpu.memory_space<vmem>>, vector<32x64xf32>
    %cst = arith.constant dense<0.000000e+00> : vector<32xf32>
    %1 = vector.multi_reduction <add>, %0, %cst [1] : vector<32x64xf32> to vector<32xf32>
    %2 = vector.shape_cast %1 : vector<32xf32> to vector<32x1xf32>
    %cst_1 = arith.constant 6.400000e+01 : f32
    %3 = vector.broadcast %cst_1 : f32 to vector<32x1xf32>
    %4 = arith.divf %2, %3 : vector<32x1xf32>
    %5 = vector.broadcast %4 : vector<32x1xf32> to vector<32x64xf32>
    %6 = arith.subf %0, %5 : vector<32x64xf32>
    %7 = arith.mulf %6, %6 : vector<32x64xf32>
    %cst_2 = arith.constant dense<0.000000e+00> : vector<32xf32>
    %8 = vector.multi_reduction <add>, %7, %cst_2 [1] : vector<32x64xf32> to vector<32xf32>
    %9 = vector.shape_cast %8 : vector<32xf32> to vector<32x1xf32>
    %cst_3 = arith.constant 6.400000e+01 : f32
    %10 = vector.broadcast %cst_3 : f32 to vector<32x1xf32>
    %11 = arith.divf %9, %10 : vector<32x1xf32>
    %cst_4 = arith.constant 9.99999974E-6 : f32
    %12 = vector.broadcast %cst_4 : f32 to vector<32x1xf32>
    %13 = arith.addf %11, %12 : vector<32x1xf32>
    %14 = math.rsqrt %13 : vector<32x1xf32>
    %15 = vector.broadcast %14 : vector<32x1xf32> to vector<32x64xf32>
    %16 = arith.mulf %6, %15 : vector<32x64xf32>
    %c0_5 = arith.constant 0 : index
    %c0_6 = arith.constant 0 : index
    %17 = vector.load %arg4[%c0_5, %c0_6] : memref<1x64xf32, #tpu.memory_space<vmem>>, vector<1x64xf32>
    %18 = vector.broadcast %17 : vector<1x64xf32> to vector<32x64xf32>
    %19 = arith.mulf %16, %18 : vector<32x64xf32>
    %c0_7 = arith.constant 0 : index
    %c0_8 = arith.constant 0 : index
    %20 = vector.load %arg5[%c0_7, %c0_8] : memref<1x64xf32, #tpu.memory_space<vmem>>, vector<1x64xf32>
    %21 = vector.broadcast %20 : vector<1x64xf32> to vector<32x64xf32>
    %22 = arith.addf %19, %21 : vector<32x64xf32>
    %23 = arith.truncf %22 : vector<32x64xf32> to vector<32x64xbf16>
    %c0_9 = arith.constant 0 : index
    %c0_10 = arith.constant 0 : index
    %24 = vector.load %arg2[%c0_9, %c0_10] : memref<64x192xbf16, #tpu.memory_space<vmem>>, vector<64x192xbf16>
    %cst_11 = arith.constant dense<0.000000e+00> : vector<32x192xf32>
    %25 = tpu.matmul %23, %24, %cst_11 {dimension_numbers = #tpu.dot_dimension_numbers<[1], [0], [0], [1], [0, 0, 1, 1], [], []>} : vector<32x64xbf16>, vector<64x192xbf16>, vector<32x192xf32> -> vector<32x192xf32>
    %c0_12 = arith.constant 0 : index
    %c0_13 = arith.constant 0 : index
    %26 = vector.load %arg3[%c0_12, %c0_13] : memref<1x192xf32, #tpu.memory_space<vmem>>, vector<1x192xf32>
    %27 = vector.broadcast %26 : vector<1x192xf32> to vector<32x192xf32>
    %28 = arith.addf %25, %27 : vector<32x192xf32>
    %29 = arith.truncf %28 : vector<32x192xf32> to vector<32x192xbf16>
    %c0_14 = arith.constant 0 : index
    %c0_15 = arith.constant 0 : index
    %30 = vector.load %arg6[%c0_14, %c0_15] : memref<32x192xbf16, #tpu.memory_space<vmem>>, vector<32x192xbf16>
    tpu.vector_store %arg6[%c0_14, %c0_15], %29 {strides = array<i32>} : memref<32x192xbf16, #tpu.memory_space<vmem>>, vector<32x192xbf16>,
    return
  }
  func.func @transform_0(%arg0: i32) -> (i32, i32) {
    %c0_i32 = arith.constant 0 : i32
    %c0_i32_0 = arith.constant 0 : i32
    return %arg0, %c0_i32 : i32, i32
  }
  func.func @transform_1(%arg0: i32) -> (i32, i32) {
    %c0_i32 = arith.constant 0 : i32
    %c0_i32_0 = arith.constant 0 : i32
    %c0_i32_1 = arith.constant 0 : i32
    return %c0_i32, %c0_i32_0 : i32, i32
  }
  func.func @transform_2(%arg0: i32) -> (i32, i32) {
    %c0_i32 = arith.constant 0 : i32
    %c0_i32_0 = arith.constant 0 : i32
    %c0_i32_1 = arith.constant 0 : i32
    return %c0_i32, %c0_i32_0 : i32, i32
  }
  func.func @transform_3(%arg0: i32) -> (i32, i32) {
    %c0_i32 = arith.constant 0 : i32
    %c0_i32_0 = arith.constant 0 : i32
    %c0_i32_1 = arith.constant 0 : i32
    return %c0_i32, %c0_i32_0 : i32, i32
  }
  func.func @transform_4(%arg0: i32) -> (i32, i32) {
    %c0_i32 = arith.constant 0 : i32
    %c0_i32_0 = arith.constant 0 : i32
    %c0_i32_1 = arith.constant 0 : i32
    return %c0_i32, %c0_i32_0 : i32, i32
  }
  func.func @transform_5(%arg0: i32) -> (i32, i32) {
    %c0_i32 = arith.constant 0 : i32
    %c0_i32_0 = arith.constant 0 : i32
    return %arg0, %c0_i32 : i32, i32
  }
}

module attributes {stable_mosaic.version = 11 : i64} {
  func.func @_fused_linear_kernel(%arg0: i32, %arg1: memref<32x64xf32, #tpu.memory_space<vmem>>, %arg2: memref<64x256xbf16, #tpu.memory_space<vmem>>, %arg3: memref<1x256xf32, #tpu.memory_space<vmem>>, %arg4: memref<1x64xf32, #tpu.memory_space<vmem>>, %arg5: memref<1x64xf32, #tpu.memory_space<vmem>>, %arg6: memref<32x128xbf16, #tpu.memory_space<vmem>>) attributes {dimension_semantics = [#tpu.dimension_semantics<parallel>], iteration_bounds = array<i64: 1>, scalar_prefetch = 0 : i64, scratch_operands = 0 : i64, tpu.core_type = #tpu.core_type<tc>, window_params = [{transform_indices = @transform_0, window_bounds = array<i64: 32, 64>}, {pipeline_mode = #tpu.pipeline_mode<synchronous>, transform_indices = @transform_1, window_bounds = array<i64: 64, 256>}, {pipeline_mode = #tpu.pipeline_mode<synchronous>, transform_indices = @transform_2, window_bounds = array<i64: 1, 256>}, {pipeline_mode = #tpu.pipeline_mode<synchronous>, transform_indices = @transform_3, window_bounds = array<i64: 1, 64>}, {pipeline_mode = #tpu.pipeline_mode<synchronous>, transform_indices = @transform_4, window_bounds = array<i64: 1, 64>}, {transform_indices = @transform_5, window_bounds = array<i64: 32, 128>}]} {
    %c0 = arith.constant 0 : index
    %c0_0 = arith.constant 0 : index
    %0 = vector.load %arg1[%c0, %c0_0] : memref<32x64xf32, #tpu.memory_space<vmem>>, vector<32x64xf32>
    %cst = arith.constant dense<0.000000e+00> : vector<32xf32>
    %1 = vector.multi_reduction <add>, %0, %cst [1] : vector<32x64xf32> to vector<32xf32>
    %2 = vector.shape_cast %1 : vector<32xf32> to vector<32x1xf32>
    %cst_1 = arith.constant 6.400000e+01 : f32
    %3 = vector.broadcast %cst_1 : f32 to vector<32x1xf32>
    %4 = arith.divf %2, %3 : vector<32x1xf32>
    %5 = vector.broadcast %4 : vector<32x1xf32> to vector<32x64xf32>
    %6 = arith.subf %0, %5 : vector<32x64xf32>
    %7 = arith.mulf %6, %6 : vector<32x64xf32>
    %cst_2 = arith.constant dense<0.000000e+00> : vector<32xf32>
    %8 = vector.multi_reduction <add>, %7, %cst_2 [1] : vector<32x64xf32> to vector<32xf32>
    %9 = vector.shape_cast %8 : vector<32xf32> to vector<32x1xf32>
    %cst_3 = arith.constant 6.400000e+01 : f32
    %10 = vector.broadcast %cst_3 : f32 to vector<32x1xf32>
    %11 = arith.divf %9, %10 : vector<32x1xf32>
    %cst_4 = arith.constant 9.99999974E-6 : f32
    %12 = vector.broadcast %cst_4 : f32 to vector<32x1xf32>
    %13 = arith.addf %11, %12 : vector<32x1xf32>
    %14 = math.rsqrt %13 : vector<32x1xf32>
    %15 = vector.broadcast %14 : vector<32x1xf32> to vector<32x64xf32>
    %16 = arith.mulf %6, %15 : vector<32x64xf32>
    %c0_5 = arith.constant 0 : index
    %c0_6 = arith.constant 0 : index
    %17 = vector.load %arg4[%c0_5, %c0_6] : memref<1x64xf32, #tpu.memory_space<vmem>>, vector<1x64xf32>
    %18 = vector.broadcast %17 : vector<1x64xf32> to vector<32x64xf32>
    %19 = arith.mulf %16, %18 : vector<32x64xf32>
    %c0_7 = arith.constant 0 : index
    %c0_8 = arith.constant 0 : index
    %20 = vector.load %arg5[%c0_7, %c0_8] : memref<1x64xf32, #tpu.memory_space<vmem>>, vector<1x64xf32>
    %21 = vector.broadcast %20 : vector<1x64xf32> to vector<32x64xf32>
    %22 = arith.addf %19, %21 : vector<32x64xf32>
    %23 = arith.truncf %22 : vector<32x64xf32> to vector<32x64xbf16>
    %c0_9 = arith.constant 0 : index
    %c0_10 = arith.constant 0 : index
    %24 = vector.load %arg2[%c0_9, %c0_10] : memref<64x256xbf16, #tpu.memory_space<vmem>>, vector<64x256xbf16>
    %cst_11 = arith.constant dense<0.000000e+00> : vector<32x256xf32>
    %25 = tpu.matmul %23, %24, %cst_11 {dimension_numbers = #tpu.dot_dimension_numbers<[1], [0], [0], [1], [0, 0, 1, 1], [], []>} : vector<32x64xbf16>, vector<64x256xbf16>, vector<32x256xf32> -> vector<32x256xf32>
    %c0_12 = arith.constant 0 : index
    %c0_13 = arith.constant 0 : index
    %26 = vector.load %arg3[%c0_12, %c0_13] : memref<1x256xf32, #tpu.memory_space<vmem>>, vector<1x256xf32>
    %27 = vector.broadcast %26 : vector<1x256xf32> to vector<32x256xf32>
    %28 = arith.addf %25, %27 : vector<32x256xf32>
    %29 = vector.extract_strided_slice %28 {offsets = [0, 0], sizes = [32, 128], strides = [1, 1]} : vector<32x256xf32> to vector<32x128xf32>
    %30 = vector.extract_strided_slice %28 {offsets = [0, 128], sizes = [32, 128], strides = [1, 1]} : vector<32x256xf32> to vector<32x128xf32>
    %31 = arith.negf %30 : vector<32x128xf32>
    %32 = math.exp %31 : vector<32x128xf32>
    %cst_14 = arith.constant 1.000000e+00 : f32
    %33 = vector.broadcast %cst_14 : f32 to vector<32x128xf32>
    %34 = arith.addf %33, %32 : vector<32x128xf32>
    %35 = arith.divf %33, %34 : vector<32x128xf32>
    %36 = arith.mulf %29, %35 : vector<32x128xf32>
    %37 = arith.truncf %36 : vector<32x128xf32> to vector<32x128xbf16>
    %c0_15 = arith.constant 0 : index
    %c0_16 = arith.constant 0 : index
    %38 = vector.load %arg6[%c0_15, %c0_16] : memref<32x128xbf16, #tpu.memory_space<vmem>>, vector<32x128xbf16>
    tpu.vector_store %arg6[%c0_15, %c0_16], %37 {strides = array<i32>} : memref<32x128xbf16, #tpu.memory_space<vmem>>, vector<32x128xbf16>,
    return
  }
  func.func @transform_0(%arg0: i32) -> (i32, i32) {
    %c0_i32 = arith.constant 0 : i32
    %c0_i32_0 = arith.constant 0 : i32
    return %arg0, %c0_i32 : i32, i32
  }
  func.func @transform_1(%arg0: i32) -> (i32, i32) {
    %c0_i32 = arith.constant 0 : i32
    %c0_i32_0 = arith.constant 0 : i32
    %c0_i32_1 = arith.constant 0 : i32
    return %c0_i32, %c0_i32_0 : i32, i32
  }
  func.func @transform_2(%arg0: i32) -> (i32, i32) {
    %c0_i32 = arith.constant 0 : i32
    %c0_i32_0 = arith.constant 0 : i32
    %c0_i32_1 = arith.constant 0 : i32
    return %c0_i32, %c0_i32_0 : i32, i32
  }
  func.func @transform_3(%arg0: i32) -> (i32, i32) {
    %c0_i32 = arith.constant 0 : i32
    %c0_i32_0 = arith.constant 0 : i32
    %c0_i32_1 = arith.constant 0 : i32
    return %c0_i32, %c0_i32_0 : i32, i32
  }
  func.func @transform_4(%arg0: i32) -> (i32, i32) {
    %c0_i32 = arith.constant 0 : i32
    %c0_i32_0 = arith.constant 0 : i32
    %c0_i32_1 = arith.constant 0 : i32
    return %c0_i32, %c0_i32_0 : i32, i32
  }
  func.func @transform_5(%arg0: i32) -> (i32, i32) {
    %c0_i32 = arith.constant 0 : i32
    %c0_i32_0 = arith.constant 0 : i32
    return %arg0, %c0_i32 : i32, i32
  }
}

module attributes {stable_mosaic.version = 11 : i64} {
  func.func @_flash_attention_kernel(%arg0: i32, %arg1: i32, %arg2: memref<1x4x16x16xbf16, #tpu.memory_space<vmem>>, %arg3: memref<1x4x16x16xbf16, #tpu.memory_space<vmem>>, %arg4: memref<1x4x16x16xbf16, #tpu.memory_space<vmem>>, %arg5: memref<1x4x16x16xf32, #tpu.memory_space<vmem>>, %arg6: memref<1x16x64xf32, #tpu.memory_space<vmem>>, %arg7: memref<4x16x1xf32, #tpu.memory_space<vmem>>, %arg8: memref<4x16x1xf32, #tpu.memory_space<vmem>>, %arg9: memref<4x16x16xf32, #tpu.memory_space<vmem>>) attributes {dimension_semantics = [#tpu.dimension_semantics<parallel>, #tpu.dimension_semantics<arbitrary>], iteration_bounds = array<i64: 2, 1>, scalar_prefetch = 0 : i64, scratch_operands = 3 : i64, tpu.core_type = #tpu.core_type<tc>, window_params = [{transform_indices = @transform_0, window_bounds = array<i64: 1, 4, 16, 16>}, {transform_indices = @transform_1, window_bounds = array<i64: 1, 4, 16, 16>}, {transform_indices = @transform_2, window_bounds = array<i64: 1, 4, 16, 16>}, {transform_indices = @transform_3, window_bounds = array<i64: 1, 4, 16, 16>}, {transform_indices = @transform_4, window_bounds = array<i64: 1, 16, 64>}]} {
    %c0_i32 = arith.constant 0 : i32
    %0 = arith.cmpi eq, %arg1, %c0_i32 : i32
    %1 = arith.extui %0 : i1 to i32
    %c0_i32_0 = arith.constant 0 : i32
    %2 = arith.cmpi ne, %1, %c0_i32_0 : i32
    scf.if %2 {
      %cst_40 = arith.constant -1.000000e+30 : f32
      %41 = vector.broadcast %cst_40 : f32 to vector<4x16x1xf32>
      %c0_41 = arith.constant 0 : index
      %c0_42 = arith.constant 0 : index
      %c0_43 = arith.constant 0 : index
      %42 = vector.load %arg7[%c0_41, %c0_42, %c0_43] : memref<4x16x1xf32, #tpu.memory_space<vmem>>, vector<4x16x1xf32>
      tpu.vector_store %arg7[%c0_41, %c0_42, %c0_43], %41 {strides = array<i32>} : memref<4x16x1xf32, #tpu.memory_space<vmem>>, vector<4x16x1xf32>,
      %cst_44 = arith.constant 0.000000e+00 : f32
      %43 = vector.broadcast %cst_44 : f32 to vector<4x16x1xf32>
      %c0_45 = arith.constant 0 : index
      %c0_46 = arith.constant 0 : index
      %c0_47 = arith.constant 0 : index
      %44 = vector.load %arg8[%c0_45, %c0_46, %c0_47] : memref<4x16x1xf32, #tpu.memory_space<vmem>>, vector<4x16x1xf32>
      tpu.vector_store %arg8[%c0_45, %c0_46, %c0_47], %43 {strides = array<i32>} : memref<4x16x1xf32, #tpu.memory_space<vmem>>, vector<4x16x1xf32>,
      %cst_48 = arith.constant 0.000000e+00 : f32
      %45 = vector.broadcast %cst_48 : f32 to vector<4x16x16xf32>
      %c0_49 = arith.constant 0 : index
      %c0_50 = arith.constant 0 : index
      %c0_51 = arith.constant 0 : index
      %46 = vector.load %arg9[%c0_49, %c0_50, %c0_51] : memref<4x16x16xf32, #tpu.memory_space<vmem>>, vector<4x16x16xf32>
      tpu.vector_store %arg9[%c0_49, %c0_50, %c0_51], %45 {strides = array<i32>} : memref<4x16x16xf32, #tpu.memory_space<vmem>>, vector<4x16x16xf32>,
    } else {
    }
    %c0 = arith.constant 0 : index
    %c0_1 = arith.constant 0 : index
    %c0_2 = arith.constant 0 : index
    %c0_3 = arith.constant 0 : index
    %3 = vector.load %arg2[%c0, %c0_1, %c0_2, %c0_3] : memref<1x4x16x16xbf16, #tpu.memory_space<vmem>>, vector<1x4x16x16xbf16>
    %4 = vector.shape_cast %3 : vector<1x4x16x16xbf16> to vector<4x16x16xbf16>
    %c0_4 = arith.constant 0 : index
    %c0_5 = arith.constant 0 : index
    %c0_6 = arith.constant 0 : index
    %c0_7 = arith.constant 0 : index
    %5 = vector.load %arg3[%c0_4, %c0_5, %c0_6, %c0_7] : memref<1x4x16x16xbf16, #tpu.memory_space<vmem>>, vector<1x4x16x16xbf16>
    %6 = vector.shape_cast %5 : vector<1x4x16x16xbf16> to vector<4x16x16xbf16>
    %c0_8 = arith.constant 0 : index
    %c0_9 = arith.constant 0 : index
    %c0_10 = arith.constant 0 : index
    %c0_11 = arith.constant 0 : index
    %7 = vector.load %arg4[%c0_8, %c0_9, %c0_10, %c0_11] : memref<1x4x16x16xbf16, #tpu.memory_space<vmem>>, vector<1x4x16x16xbf16>
    %8 = vector.shape_cast %7 : vector<1x4x16x16xbf16> to vector<4x16x16xbf16>
    "tpu.trace_start"() <{level = 10 : i32, message = "hqd,hkd->hqk"}> : () -> ()
    %cst = arith.constant dense<0.000000e+00> : vector<4x16x16xf32>
    %9 = tpu.matmul %4, %6, %cst {dimension_numbers = #tpu.dot_dimension_numbers<[2], [2], [1], [1], [0, 0, 0, 1, 1, 1], [0], [0]>} : vector<4x16x16xbf16>, vector<4x16x16xbf16>, vector<4x16x16xf32> -> vector<4x16x16xf32>
    "tpu.trace_stop"() : () -> ()
    %cst_12 = arith.constant 2.500000e-01 : f32
    %10 = vector.broadcast %cst_12 : f32 to vector<4x16x16xf32>
    %11 = arith.mulf %9, %10 : vector<4x16x16xf32>
    %c0_13 = arith.constant 0 : index
    %c0_14 = arith.constant 0 : index
    %c0_15 = arith.constant 0 : index
    %c0_16 = arith.constant 0 : index
    %12 = vector.load %arg5[%c0_13, %c0_14, %c0_15, %c0_16] : memref<1x4x16x16xf32, #tpu.memory_space<vmem>>, vector<1x4x16x16xf32>
    %13 = vector.shape_cast %12 : vector<1x4x16x16xf32> to vector<4x16x16xf32>
    %14 = arith.addf %11, %13 : vector<4x16x16xf32>
    %c0_17 = arith.constant 0 : index
    %c0_18 = arith.constant 0 : index
    %c0_19 = arith.constant 0 : index
    %15 = vector.load %arg7[%c0_17, %c0_18, %c0_19] : memref<4x16x1xf32, #tpu.memory_space<vmem>>, vector<4x16x1xf32>
    %cst_20 = arith.constant dense<0xFF800000> : vector<4x16xf32>
    %16 = vector.multi_reduction <maximumf>, %14, %cst_20 [2] : vector<4x16x16xf32> to vector<4x16xf32>
    %17 = vector.shape_cast %16 : vector<4x16xf32> to vector<4x16x1xf32>
    %18 = arith.maximumf %15, %17 : vector<4x16x1xf32>
    %19 = arith.subf %15, %18 : vector<4x16x1xf32>
    %20 = math.exp %19 : vector<4x16x1xf32>
    %21 = vector.broadcast %18 : vector<4x16x1xf32> to vector<4x16x16xf32>
    %22 = arith.subf %14, %21 : vector<4x16x16xf32>
    %23 = math.exp %22 : vector<4x16x16xf32>
    %c0_21 = arith.constant 0 : index
    %c0_22 = arith.constant 0 : index
    %c0_23 = arith.constant 0 : index
    %24 = vector.load %arg8[%c0_21, %c0_22, %c0_23] : memref<4x16x1xf32, #tpu.memory_space<vmem>>, vector<4x16x1xf32>
    %25 = arith.mulf %20, %24 : vector<4x16x1xf32>
    %cst_24 = arith.constant dense<0.000000e+00> : vector<4x16xf32>
    %26 = vector.multi_reduction <add>, %23, %cst_24 [2] : vector<4x16x16xf32> to vector<4x16xf32>
    %27 = vector.shape_cast %26 : vector<4x16xf32> to vector<4x16x1xf32>
    %28 = arith.addf %25, %27 : vector<4x16x1xf32>
    %c0_25 = arith.constant 0 : index
    %c0_26 = arith.constant 0 : index
    %c0_27 = arith.constant 0 : index
    %29 = vector.load %arg8[%c0_25, %c0_26, %c0_27] : memref<4x16x1xf32, #tpu.memory_space<vmem>>, vector<4x16x1xf32>
    tpu.vector_store %arg8[%c0_25, %c0_26, %c0_27], %28 {strides = array<i32>} : memref<4x16x1xf32, #tpu.memory_space<vmem>>, vector<4x16x1xf32>,
    %c0_28 = arith.constant 0 : index
    %c0_29 = arith.constant 0 : index
    %c0_30 = arith.constant 0 : index
    %30 = vector.load %arg9[%c0_28, %c0_29, %c0_30] : memref<4x16x16xf32, #tpu.memory_space<vmem>>, vector<4x16x16xf32>
    %31 = vector.broadcast %20 : vector<4x16x1xf32> to vector<4x16x16xf32>
    %32 = arith.mulf %31, %30 : vector<4x16x16xf32>
    %33 = arith.truncf %23 : vector<4x16x16xf32> to vector<4x16x16xbf16>
    "tpu.trace_start"() <{level = 10 : i32, message = "hqk,hkd->hqd"}> : () -> ()
    %cst_31 = arith.constant dense<0.000000e+00> : vector<4x16x16xf32>
    %34 = tpu.matmul %33, %8, %cst_31 {dimension_numbers = #tpu.dot_dimension_numbers<[2], [1], [1], [2], [0, 0, 0, 1, 1, 2], [0], [0]>} : vector<4x16x16xbf16>, vector<4x16x16xbf16>, vector<4x16x16xf32> -> vector<4x16x16xf32>
    "tpu.trace_stop"() : () -> ()
    %35 = arith.addf %32, %34 : vector<4x16x16xf32>
    %c0_32 = arith.constant 0 : index
    %c0_33 = arith.constant 0 : index
    %c0_34 = arith.constant 0 : index
    %36 = vector.load %arg9[%c0_32, %c0_33, %c0_34] : memref<4x16x16xf32, #tpu.memory_space<vmem>>, vector<4x16x16xf32>
    tpu.vector_store %arg9[%c0_32, %c0_33, %c0_34], %35 {strides = array<i32>} : memref<4x16x16xf32, #tpu.memory_space<vmem>>, vector<4x16x16xf32>,
    %c0_35 = arith.constant 0 : index
    %c0_36 = arith.constant 0 : index
    %c0_37 = arith.constant 0 : index
    %37 = vector.load %arg7[%c0_35, %c0_36, %c0_37] : memref<4x16x1xf32, #tpu.memory_space<vmem>>, vector<4x16x1xf32>
    tpu.vector_store %arg7[%c0_35, %c0_36, %c0_37], %18 {strides = array<i32>} : memref<4x16x1xf32, #tpu.memory_space<vmem>>, vector<4x16x1xf32>,
    %c0_i32_38 = arith.constant 0 : i32
    %38 = arith.cmpi eq, %arg1, %c0_i32_38 : i32
    %39 = arith.extui %38 : i1 to i32
    %c0_i32_39 = arith.constant 0 : i32
    %40 = arith.cmpi ne, %39, %c0_i32_39 : i32
    scf.if %40 {
      %c0_40 = arith.constant 0 : index
      %c0_41 = arith.constant 0 : index
      %c0_42 = arith.constant 0 : index
      %41 = vector.load %arg8[%c0_40, %c0_41, %c0_42] : memref<4x16x1xf32, #tpu.memory_space<vmem>>, vector<1x16x1xf32>
      %42 = vector.shape_cast %41 : vector<1x16x1xf32> to vector<16x1xf32>
      %43 = tpu.reciprocal %42 {approx = true} : vector<16x1xf32> -> vector<16x1xf32>
      %c0_43 = arith.constant 0 : index
      %c0_44 = arith.constant 0 : index
      %c0_45 = arith.constant 0 : index
      %44 = vector.load %arg9[%c0_43, %c0_44, %c0_45] : memref<4x16x16xf32, #tpu.memory_space<vmem>>, vector<1x16x16xf32>
      %45 = vector.shape_cast %44 : vector<1x16x16xf32> to vector<16x16xf32>
      %46 = vector.broadcast %43 : vector<16x1xf32> to vector<16x16xf32>
      %47 = arith.mulf %45, %46 : vector<16x16xf32>
      %c0_46 = arith.constant 0 : index
      %c0_47 = arith.constant 0 : index
      %c0_48 = arith.constant 0 : index
      %48 = vector.load %arg6[%c0_46, %c0_47, %c0_48] : memref<1x16x64xf32, #tpu.memory_space<vmem>>, vector<1x16x16xf32>
      %49 = vector.shape_cast %48 : vector<1x16x16xf32> to vector<16x16xf32>
      %50 = vector.shape_cast %47 : vector<16x16xf32> to vector<1x16x16xf32>
      tpu.vector_store %arg6[%c0_46, %c0_47, %c0_48], %50 {strides = array<i32>} : memref<1x16x64xf32, #tpu.memory_space<vmem>>, vector<1x16x16xf32>,
      %c1 = arith.constant 1 : index
      %c0_49 = arith.constant 0 : index
      %c0_50 = arith.constant 0 : index
      %51 = vector.load %arg8[%c1, %c0_49, %c0_50] : memref<4x16x1xf32, #tpu.memory_space<vmem>>, vector<1x16x1xf32>
      %52 = vector.shape_cast %51 : vector<1x16x1xf32> to vector<16x1xf32>
      %53 = tpu.reciprocal %52 {approx = true} : vector<16x1xf32> -> vector<16x1xf32>
      %c1_51 = arith.constant 1 : index
      %c0_52 = arith.constant 0 : index
      %c0_53 = arith.constant 0 : index
      %54 = vector.load %arg9[%c1_51, %c0_52, %c0_53] : memref<4x16x16xf32, #tpu.memory_space<vmem>>, vector<1x16x16xf32>
      %55 = vector.shape_cast %54 : vector<1x16x16xf32> to vector<16x16xf32>
      %56 = vector.broadcast %53 : vector<16x1xf32> to vector<16x16xf32>
      %57 = arith.mulf %55, %56 : vector<16x16xf32>
      %c0_54 = arith.constant 0 : index
      %c0_55 = arith.constant 0 : index
      %c16 = arith.constant 16 : index
      %58 = vector.load %arg6[%c0_54, %c0_55, %c16] : memref<1x16x64xf32, #tpu.memory_space<vmem>>, vector<1x16x16xf32>
      %59 = vector.shape_cast %58 : vector<1x16x16xf32> to vector<16x16xf32>
      %60 = vector.shape_cast %57 : vector<16x16xf32> to vector<1x16x16xf32>
      tpu.vector_store %arg6[%c0_54, %c0_55, %c16], %60 {strides = array<i32>} : memref<1x16x64xf32, #tpu.memory_space<vmem>>, vector<1x16x16xf32>,
      %c2 = arith.constant 2 : index
      %c0_56 = arith.constant 0 : index
      %c0_57 = arith.constant 0 : index
      %61 = vector.load %arg8[%c2, %c0_56, %c0_57] : memref<4x16x1xf32, #tpu.memory_space<vmem>>, vector<1x16x1xf32>
      %62 = vector.shape_cast %61 : vector<1x16x1xf32> to vector<16x1xf32>
      %63 = tpu.reciprocal %62 {approx = true} : vector<16x1xf32> -> vector<16x1xf32>
      %c2_58 = arith.constant 2 : index
      %c0_59 = arith.constant 0 : index
      %c0_60 = arith.constant 0 : index
      %64 = vector.load %arg9[%c2_58, %c0_59, %c0_60] : memref<4x16x16xf32, #tpu.memory_space<vmem>>, vector<1x16x16xf32>
      %65 = vector.shape_cast %64 : vector<1x16x16xf32> to vector<16x16xf32>
      %66 = vector.broadcast %63 : vector<16x1xf32> to vector<16x16xf32>
      %67 = arith.mulf %65, %66 : vector<16x16xf32>
      %c0_61 = arith.constant 0 : index
      %c0_62 = arith.constant 0 : index
      %c32 = arith.constant 32 : index
      %68 = vector.load %arg6[%c0_61, %c0_62, %c32] : memref<1x16x64xf32, #tpu.memory_space<vmem>>, vector<1x16x16xf32>
      %69 = vector.shape_cast %68 : vector<1x16x16xf32> to vector<16x16xf32>
      %70 = vector.shape_cast %67 : vector<16x16xf32> to vector<1x16x16xf32>
      tpu.vector_store %arg6[%c0_61, %c0_62, %c32], %70 {strides = array<i32>} : memref<1x16x64xf32, #tpu.memory_space<vmem>>, vector<1x16x16xf32>,
      %c3 = arith.constant 3 : index
      %c0_63 = arith.constant 0 : index
      %c0_64 = arith.constant 0 : index
      %71 = vector.load %arg8[%c3, %c0_63, %c0_64] : memref<4x16x1xf32, #tpu.memory_space<vmem>>, vector<1x16x1xf32>
      %72 = vector.shape_cast %71 : vector<1x16x1xf32> to vector<16x1xf32>
      %73 = tpu.reciprocal %72 {approx = true} : vector<16x1xf32> -> vector<16x1xf32>
      %c3_65 = arith.constant 3 : index
      %c0_66 = arith.constant 0 : index
      %c0_67 = arith.constant 0 : index
      %74 = vector.load %arg9[%c3_65, %c0_66, %c0_67] : memref<4x16x16xf32, #tpu.memory_space<vmem>>, vector<1x16x16xf32>
      %75 = vector.shape_cast %74 : vector<1x16x16xf32> to vector<16x16xf32>
      %76 = vector.broadcast %73 : vector<16x1xf32> to vector<16x16xf32>
      %77 = arith.mulf %75, %76 : vector<16x16xf32>
      %c0_68 = arith.constant 0 : index
      %c0_69 = arith.constant 0 : index
      %c48 = arith.constant 48 : index
      %78 = vector.load %arg6[%c0_68, %c0_69, %c48] : memref<1x16x64xf32, #tpu.memory_space<vmem>>, vector<1x16x16xf32>
      %79 = vector.shape_cast %78 : vector<1x16x16xf32> to vector<16x16xf32>
      %80 = vector.shape_cast %77 : vector<16x16xf32> to vector<1x16x16xf32>
      tpu.vector_store %arg6[%c0_68, %c0_69, %c48], %80 {strides = array<i32>} : memref<1x16x64xf32, #tpu.memory_space<vmem>>, vector<1x16x16xf32>,
    } else {
    }
    return
  }
  func.func @transform_0(%arg0: i32, %arg1: i32) -> (i32, i32, i32, i32) {
    %c0_i32 = arith.constant 0 : i32
    %c0_i32_0 = arith.constant 0 : i32
    %c0_i32_1 = arith.constant 0 : i32
    %c0_i32_2 = arith.constant 0 : i32
    return %arg0, %c0_i32, %c0_i32_0, %c0_i32_1 : i32, i32, i32, i32
  }
  func.func @transform_1(%arg0: i32, %arg1: i32) -> (i32, i32, i32, i32) {
    %c0_i32 = arith.constant 0 : i32
    %c0_i32_0 = arith.constant 0 : i32
    %c0_i32_1 = arith.constant 0 : i32
    return %arg0, %c0_i32, %arg1, %c0_i32_0 : i32, i32, i32, i32
  }
  func.func @transform_2(%arg0: i32, %arg1: i32) -> (i32, i32, i32, i32) {
    %c0_i32 = arith.constant 0 : i32
    %c0_i32_0 = arith.constant 0 : i32
    %c0_i32_1 = arith.constant 0 : i32
    return %arg0, %c0_i32, %arg1, %c0_i32_0 : i32, i32, i32, i32
  }
  func.func @transform_3(%arg0: i32, %arg1: i32) -> (i32, i32, i32, i32) {
    %c0_i32 = arith.constant 0 : i32
    %c0_i32_0 = arith.constant 0 : i32
    %c0_i32_1 = arith.constant 0 : i32
    return %arg0, %c0_i32, %c0_i32_0, %arg1 : i32, i32, i32, i32
  }
  func.func @transform_4(%arg0: i32, %arg1: i32) -> (i32, i32, i32) {
    %c0_i32 = arith.constant 0 : i32
    %c0_i32_0 = arith.constant 0 : i32
    %c0_i32_1 = arith.constant 0 : i32
    return %arg0, %c0_i32, %c0_i32_0 : i32, i32, i32
  }
}

module attributes {stable_mosaic.version = 11 : i64} {
  func.func @_fused_linear_kernel(%arg0: i32, %arg1: memref<32x64xf32, #tpu.memory_space<vmem>>, %arg2: memref<64x64xbf16, #tpu.memory_space<vmem>>, %arg3: memref<1x64xf32, #tpu.memory_space<vmem>>, %arg4: memref<32x64xf32, #tpu.memory_space<vmem>>, %arg5: memref<32x64xf32, #tpu.memory_space<vmem>>) attributes {dimension_semantics = [#tpu.dimension_semantics<parallel>], iteration_bounds = array<i64: 1>, scalar_prefetch = 0 : i64, scratch_operands = 0 : i64, tpu.core_type = #tpu.core_type<tc>, window_params = [{transform_indices = @transform_0, window_bounds = array<i64: 32, 64>}, {pipeline_mode = #tpu.pipeline_mode<synchronous>, transform_indices = @transform_1, window_bounds = array<i64: 64, 64>}, {pipeline_mode = #tpu.pipeline_mode<synchronous>, transform_indices = @transform_2, window_bounds = array<i64: 1, 64>}, {transform_indices = @transform_3, window_bounds = array<i64: 32, 64>}, {transform_indices = @transform_4, window_bounds = array<i64: 32, 64>}]} {
    %c0 = arith.constant 0 : index
    %c0_0 = arith.constant 0 : index
    %0 = vector.load %arg1[%c0, %c0_0] : memref<32x64xf32, #tpu.memory_space<vmem>>, vector<32x64xf32>
    %1 = arith.truncf %0 : vector<32x64xf32> to vector<32x64xbf16>
    %c0_1 = arith.constant 0 : index
    %c0_2 = arith.constant 0 : index
    %2 = vector.load %arg2[%c0_1, %c0_2] : memref<64x64xbf16, #tpu.memory_space<vmem>>, vector<64x64xbf16>
    %cst = arith.constant dense<0.000000e+00> : vector<32x64xf32>
    %3 = tpu.matmul %1, %2, %cst {dimension_numbers = #tpu.dot_dimension_numbers<[1], [0], [0], [1], [0, 0, 1, 1], [], []>} : vector<32x64xbf16>, vector<64x64xbf16>, vector<32x64xf32> -> vector<32x64xf32>
    %c0_3 = arith.constant 0 : index
    %c0_4 = arith.constant 0 : index
    %4 = vector.load %arg3[%c0_3, %c0_4] : memref<1x64xf32, #tpu.memory_space<vmem>>, vector<1x64xf32>
    %5 = vector.broadcast %4 : vector<1x64xf32> to vector<32x64xf32>
    %6 = arith.addf %3, %5 : vector<32x64xf32>
    %c0_5 = arith.constant 0 : index
    %c0_6 = arith.constant 0 : index
    %7 = vector.load %arg4[%c0_5, %c0_6] : memref<32x64xf32, #tpu.memory_space<vmem>>, vector<32x64xf32>
    %cst_7 = arith.constant 1.000000e+00 : f32
    %8 = vector.broadcast %cst_7 : f32 to vector<32x64xf32>
    %9 = arith.mulf %8, %6 : vector<32x64xf32>
    %10 = arith.addf %7, %9 : vector<32x64xf32>
    %c0_8 = arith.constant 0 : index
    %c0_9 = arith.constant 0 : index
    %11 = vector.load %arg5[%c0_8, %c0_9] : memref<32x64xf32, #tpu.memory_space<vmem>>, vector<32x64xf32>
    tpu.vector_store %arg5[%c0_8, %c0_9], %10 {strides = array<i32>} : memref<32x64xf32, #tpu.memory_space<vmem>>, vector<32x64xf32>,
    return
  }
  func.func @transform_0(%arg0: i32) -> (i32, i32) {
    %c0_i32 = arith.constant 0 : i32
    %c0_i32_0 = arith.constant 0 : i32
    return %arg0, %c0_i32 : i32, i32
  }
  func.func @transform_1(%arg0: i32) -> (i32, i32) {
    %c0_i32 = arith.constant 0 : i32
    %c0_i32_0 = arith.constant 0 : i32
    %c0_i32_1 = arith.constant 0 : i32
    return %c0_i32, %c0_i32_0 : i32, i32
  }
  func.func @transform_2(%arg0: i32) -> (i32, i32) {
    %c0_i32 = arith.constant 0 : i32
    %c0_i32_0 = arith.constant 0 : i32
    %c0_i32_1 = arith.constant 0 : i32
    return %c0_i32, %c0_i32_0 : i32, i32
  }
  func.func @transform_3(%arg0: i32) -> (i32, i32) {
    %c0_i32 = arith.constant 0 : i32
    %c0_i32_0 = arith.constant 0 : i32
    return %arg0, %c0_i32 : i32, i32
  }
  func.func @transform_4(%arg0: i32) -> (i32, i32) {
    %c0_i32 = arith.constant 0 : i32
    %c0_i32_0 = arith.constant 0 : i32
    return %arg0, %c0_i32 : i32, i32
  }
}

module attributes {stable_mosaic.version = 11 : i64} {
  func.func @_fused_linear_kernel(%arg0: i32, %arg1: memref<32x64xf32, #tpu.memory_space<vmem>>, %arg2: memref<64x256xbf16, #tpu.memory_space<vmem>>, %arg3: memref<1x256xf32, #tpu.memory_space<vmem>>, %arg4: memref<1x64xf32, #tpu.memory_space<vmem>>, %arg5: memref<1x64xf32, #tpu.memory_space<vmem>>, %arg6: memref<32x256xf32, #tpu.memory_space<vmem>>) attributes {dimension_semantics = [#tpu.dimension_semantics<parallel>], iteration_bounds = array<i64: 1>, scalar_prefetch = 0 : i64, scratch_operands = 0 : i64, tpu.core_type = #tpu.core_type<tc>, window_params = [{transform_indices = @transform_0, window_bounds = array<i64: 32, 64>}, {pipeline_mode = #tpu.pipeline_mode<synchronous>, transform_indices = @transform_1, window_bounds = array<i64: 64, 256>}, {pipeline_mode = #tpu.pipeline_mode<synchronous>, transform_indices = @transform_2, window_bounds = array<i64: 1, 256>}, {pipeline_mode = #tpu.pipeline_mode<synchronous>, transform_indices = @transform_3, window_bounds = array<i64: 1, 64>}, {pipeline_mode = #tpu.pipeline_mode<synchronous>, transform_indices = @transform_4, window_bounds = array<i64: 1, 64>}, {transform_indices = @transform_5, window_bounds = array<i64: 32, 256>}]} {
    %c0 = arith.constant 0 : index
    %c0_0 = arith.constant 0 : index
    %0 = vector.load %arg1[%c0, %c0_0] : memref<32x64xf32, #tpu.memory_space<vmem>>, vector<32x64xf32>
    %cst = arith.constant dense<0.000000e+00> : vector<32xf32>
    %1 = vector.multi_reduction <add>, %0, %cst [1] : vector<32x64xf32> to vector<32xf32>
    %2 = vector.shape_cast %1 : vector<32xf32> to vector<32x1xf32>
    %cst_1 = arith.constant 6.400000e+01 : f32
    %3 = vector.broadcast %cst_1 : f32 to vector<32x1xf32>
    %4 = arith.divf %2, %3 : vector<32x1xf32>
    %5 = vector.broadcast %4 : vector<32x1xf32> to vector<32x64xf32>
    %6 = arith.subf %0, %5 : vector<32x64xf32>
    %7 = arith.mulf %6, %6 : vector<32x64xf32>
    %cst_2 = arith.constant dense<0.000000e+00> : vector<32xf32>
    %8 = vector.multi_reduction <add>, %7, %cst_2 [1] : vector<32x64xf32> to vector<32xf32>
    %9 = vector.shape_cast %8 : vector<32xf32> to vector<32x1xf32>
    %cst_3 = arith.constant 6.400000e+01 : f32
    %10 = vector.broadcast %cst_3 : f32 to vector<32x1xf32>
    %11 = arith.divf %9, %10 : vector<32x1xf32>
    %cst_4 = arith.constant 9.99999974E-6 : f32
    %12 = vector.broadcast %cst_4 : f32 to vector<32x1xf32>
    %13 = arith.addf %11, %12 : vector<32x1xf32>
    %14 = math.rsqrt %13 : vector<32x1xf32>
    %15 = vector.broadcast %14 : vector<32x1xf32> to vector<32x64xf32>
    %16 = arith.mulf %6, %15 : vector<32x64xf32>
    %c0_5 = arith.constant 0 : index
    %c0_6 = arith.constant 0 : index
    %17 = vector.load %arg4[%c0_5, %c0_6] : memref<1x64xf32, #tpu.memory_space<vmem>>, vector<1x64xf32>
    %18 = vector.broadcast %17 : vector<1x64xf32> to vector<32x64xf32>
    %19 = arith.mulf %16, %18 : vector<32x64xf32>
    %c0_7 = arith.constant 0 : index
    %c0_8 = arith.constant 0 : index
    %20 = vector.load %arg5[%c0_7, %c0_8] : memref<1x64xf32, #tpu.memory_space<vmem>>, vector<1x64xf32>
    %21 = vector.broadcast %20 : vector<1x64xf32> to vector<32x64xf32>
    %22 = arith.addf %19, %21 : vector<32x64xf32>
    %23 = arith.truncf %22 : vector<32x64xf32> to vector<32x64xbf16>
    %c0_9 = arith.constant 0 : index
    %c0_10 = arith.constant 0 : index
    %24 = vector.load %arg2[%c0_9, %c0_10] : memref<64x256xbf16, #tpu.memory_space<vmem>>, vector<64x256xbf16>
    %cst_11 = arith.constant dense<0.000000e+00> : vector<32x256xf32>
    %25 = tpu.matmul %23, %24, %cst_11 {dimension_numbers = #tpu.dot_dimension_numbers<[1], [0], [0], [1], [0, 0, 1, 1], [], []>} : vector<32x64xbf16>, vector<64x256xbf16>, vector<32x256xf32> -> vector<32x256xf32>
    %c0_12 = arith.constant 0 : index
    %c0_13 = arith.constant 0 : index
    %26 = vector.load %arg3[%c0_12, %c0_13] : memref<1x256xf32, #tpu.memory_space<vmem>>, vector<1x256xf32>
    %27 = vector.broadcast %26 : vector<1x256xf32> to vector<32x256xf32>
    %28 = arith.addf %25, %27 : vector<32x256xf32>
    %29 = arith.negf %28 : vector<32x256xf32>
    %30 = math.exp %29 : vector<32x256xf32>
    %cst_14 = arith.constant 1.000000e+00 : f32
    %31 = vector.broadcast %cst_14 : f32 to vector<32x256xf32>
    %32 = arith.addf %31, %30 : vector<32x256xf32>
    %33 = arith.divf %31, %32 : vector<32x256xf32>
    %34 = arith.mulf %28, %33 : vector<32x256xf32>
    %c0_15 = arith.constant 0 : index
    %c0_16 = arith.constant 0 : index
    %35 = vector.load %arg6[%c0_15, %c0_16] : memref<32x256xf32, #tpu.memory_space<vmem>>, vector<32x256xf32>
    tpu.vector_store %arg6[%c0_15, %c0_16], %34 {strides = array<i32>} : memref<32x256xf32, #tpu.memory_space<vmem>>, vector<32x256xf32>,
    return
  }
  func.func @transform_0(%arg0: i32) -> (i32, i32) {
    %c0_i32 = arith.constant 0 : i32
    %c0_i32_0 = arith.constant 0 : i32
    return %arg0, %c0_i32 : i32, i32
  }
  func.func @transform_1(%arg0: i32) -> (i32, i32) {
    %c0_i32 = arith.constant 0 : i32
    %c0_i32_0 = arith.constant 0 : i32
    %c0_i32_1 = arith.constant 0 : i32
    return %c0_i32, %c0_i32_0 : i32, i32
  }
  func.func @transform_2(%arg0: i32) -> (i32, i32) {
    %c0_i32 = arith.constant 0 : i32
    %c0_i32_0 = arith.constant 0 : i32
    %c0_i32_1 = arith.constant 0 : i32
    return %c0_i32, %c0_i32_0 : i32, i32
  }
  func.func @transform_3(%arg0: i32) -> (i32, i32) {
    %c0_i32 = arith.constant 0 : i32
    %c0_i32_0 = arith.constant 0 : i32
    %c0_i32_1 = arith.constant 0 : i32
    return %c0_i32, %c0_i32_0 : i32, i32
  }
  func.func @transform_4(%arg0: i32) -> (i32, i32) {
    %c0_i32 = arith.constant 0 : i32
    %c0_i32_0 = arith.constant 0 : i32
    %c0_i32_1 = arith.constant 0 : i32
    return %c0_i32, %c0_i32_0 : i32, i32
  }
  func.func @transform_5(%arg0: i32) -> (i32, i32) {
    %c0_i32 = arith.constant 0 : i32
    %c0_i32_0 = arith.constant 0 : i32
    return %arg0, %c0_i32 : i32, i32
  }
}

module attributes {stable_mosaic.version = 11 : i64} {
  func.func @_conv_module_kernel(%arg0: i32, %arg1: memref<1x16x128xbf16, #tpu.memory_space<vmem>>, %arg2: memref<7x128xf32, #tpu.memory_space<vmem>>, %arg3: memref<1x128xf32, #tpu.memory_space<vmem>>, %arg4: memref<1x128xf32, #tpu.memory_space<vmem>>, %arg5: memref<1x128xf32, #tpu.memory_space<vmem>>, %arg6: memref<128x64xbf16, #tpu.memory_space<vmem>>, %arg7: memref<1x64xf32, #tpu.memory_space<vmem>>, %arg8: memref<1x16x64xf32, #tpu.memory_space<vmem>>, %arg9: memref<1x16x64xf32, #tpu.memory_space<vmem>>, %arg10: memref<22x128xf32, #tpu.memory_space<vmem>>) attributes {dimension_semantics = [#tpu.dimension_semantics<parallel>], iteration_bounds = array<i64: 2>, scalar_prefetch = 0 : i64, scratch_operands = 1 : i64, tpu.core_type = #tpu.core_type<tc>, window_params = [{transform_indices = @transform_0, window_bounds = array<i64: 1, 16, 128>}, {pipeline_mode = #tpu.pipeline_mode<synchronous>, transform_indices = @transform_1, window_bounds = array<i64: 7, 128>}, {pipeline_mode = #tpu.pipeline_mode<synchronous>, transform_indices = @transform_2, window_bounds = array<i64: 1, 128>}, {pipeline_mode = #tpu.pipeline_mode<synchronous>, transform_indices = @transform_3, window_bounds = array<i64: 1, 128>}, {pipeline_mode = #tpu.pipeline_mode<synchronous>, transform_indices = @transform_4, window_bounds = array<i64: 1, 128>}, {pipeline_mode = #tpu.pipeline_mode<synchronous>, transform_indices = @transform_5, window_bounds = array<i64: 128, 64>}, {pipeline_mode = #tpu.pipeline_mode<synchronous>, transform_indices = @transform_6, window_bounds = array<i64: 1, 64>}, {transform_indices = @transform_7, window_bounds = array<i64: 1, 16, 64>}, {transform_indices = @transform_8, window_bounds = array<i64: 1, 16, 64>}]} {
    %cst = arith.constant 0.000000e+00 : f32
    %0 = vector.broadcast %cst : f32 to vector<22x128xf32>
    %c0 = arith.constant 0 : index
    %c0_0 = arith.constant 0 : index
    %1 = vector.load %arg10[%c0, %c0_0] : memref<22x128xf32, #tpu.memory_space<vmem>>, vector<22x128xf32>
    tpu.vector_store %arg10[%c0, %c0_0], %0 {strides = array<i32>} : memref<22x128xf32, #tpu.memory_space<vmem>>, vector<22x128xf32>,
    %c0_1 = arith.constant 0 : index
    %c0_2 = arith.constant 0 : index
    %c0_3 = arith.constant 0 : index
    %2 = vector.load %arg1[%c0_1, %c0_2, %c0_3] : memref<1x16x128xbf16, #tpu.memory_space<vmem>>, vector<1x16x128xbf16>
    %3 = vector.shape_cast %2 : vector<1x16x128xbf16> to vector<16x128xbf16>
    %4 = arith.extf %3 : vector<16x128xbf16> to vector<16x128xf32>
    %c3 = arith.constant 3 : index
    %c0_4 = arith.constant 0 : index
    %5 = vector.load %arg10[%c3, %c0_4] : memref<22x128xf32, #tpu.memory_space<vmem>>, vector<16x128xf32>
    tpu.vector_store %arg10[%c3, %c0_4], %4 {strides = array<i32>} : memref<22x128xf32, #tpu.memory_space<vmem>>, vector<16x128xf32>,
    %c0_5 = arith.constant 0 : index
    %c0_6 = arith.constant 0 : index
    %6 = vector.load %arg10[%c0_5, %c0_6] : memref<22x128xf32, #tpu.memory_space<vmem>>, vector<22x128xf32>
    %c0_7 = arith.constant 0 : index
    %c0_8 = arith.constant 0 : index
    %7 = vector.load %arg2[%c0_7, %c0_8] : memref<7x128xf32, #tpu.memory_space<vmem>>, vector<7x128xf32>
    %cst_9 = arith.constant 0.000000e+00 : f32
    %8 = vector.broadcast %cst_9 : f32 to vector<16x128xf32>
    %9 = vector.extract_strided_slice %6 {offsets = [0, 0], sizes = [16, 128], strides = [1, 1]} : vector<22x128xf32> to vector<16x128xf32>
    %10 = vector.extract_strided_slice %7 {offsets = [0, 0], sizes = [1, 128], strides = [1, 1]} : vector<7x128xf32> to vector<1x128xf32>
    %11 = vector.broadcast %10 : vector<1x128xf32> to vector<16x128xf32>
    %12 = arith.mulf %9, %11 : vector<16x128xf32>
    %13 = arith.addf %8, %12 : vector<16x128xf32>
    %14 = vector.extract_strided_slice %6 {offsets = [1, 0], sizes = [16, 128], strides = [1, 1]} : vector<22x128xf32> to vector<16x128xf32>
    %15 = vector.extract_strided_slice %7 {offsets = [1, 0], sizes = [1, 128], strides = [1, 1]} : vector<7x128xf32> to vector<1x128xf32>
    %16 = vector.broadcast %15 : vector<1x128xf32> to vector<16x128xf32>
    %17 = arith.mulf %14, %16 : vector<16x128xf32>
    %18 = arith.addf %13, %17 : vector<16x128xf32>
    %19 = vector.extract_strided_slice %6 {offsets = [2, 0], sizes = [16, 128], strides = [1, 1]} : vector<22x128xf32> to vector<16x128xf32>
    %20 = vector.extract_strided_slice %7 {offsets = [2, 0], sizes = [1, 128], strides = [1, 1]} : vector<7x128xf32> to vector<1x128xf32>
    %21 = vector.broadcast %20 : vector<1x128xf32> to vector<16x128xf32>
    %22 = arith.mulf %19, %21 : vector<16x128xf32>
    %23 = arith.addf %18, %22 : vector<16x128xf32>
    %24 = vector.extract_strided_slice %6 {offsets = [3, 0], sizes = [16, 128], strides = [1, 1]} : vector<22x128xf32> to vector<16x128xf32>
    %25 = vector.extract_strided_slice %7 {offsets = [3, 0], sizes = [1, 128], strides = [1, 1]} : vector<7x128xf32> to vector<1x128xf32>
    %26 = vector.broadcast %25 : vector<1x128xf32> to vector<16x128xf32>
    %27 = arith.mulf %24, %26 : vector<16x128xf32>
    %28 = arith.addf %23, %27 : vector<16x128xf32>
    %29 = vector.extract_strided_slice %6 {offsets = [4, 0], sizes = [16, 128], strides = [1, 1]} : vector<22x128xf32> to vector<16x128xf32>
    %30 = vector.extract_strided_slice %7 {offsets = [4, 0], sizes = [1, 128], strides = [1, 1]} : vector<7x128xf32> to vector<1x128xf32>
    %31 = vector.broadcast %30 : vector<1x128xf32> to vector<16x128xf32>
    %32 = arith.mulf %29, %31 : vector<16x128xf32>
    %33 = arith.addf %28, %32 : vector<16x128xf32>
    %34 = vector.extract_strided_slice %6 {offsets = [5, 0], sizes = [16, 128], strides = [1, 1]} : vector<22x128xf32> to vector<16x128xf32>
    %35 = vector.extract_strided_slice %7 {offsets = [5, 0], sizes = [1, 128], strides = [1, 1]} : vector<7x128xf32> to vector<1x128xf32>
    %36 = vector.broadcast %35 : vector<1x128xf32> to vector<16x128xf32>
    %37 = arith.mulf %34, %36 : vector<16x128xf32>
    %38 = arith.addf %33, %37 : vector<16x128xf32>
    %39 = vector.extract_strided_slice %6 {offsets = [6, 0], sizes = [16, 128], strides = [1, 1]} : vector<22x128xf32> to vector<16x128xf32>
    %40 = vector.extract_strided_slice %7 {offsets = [6, 0], sizes = [1, 128], strides = [1, 1]} : vector<7x128xf32> to vector<1x128xf32>
    %41 = vector.broadcast %40 : vector<1x128xf32> to vector<16x128xf32>
    %42 = arith.mulf %39, %41 : vector<16x128xf32>
    %43 = arith.addf %38, %42 : vector<16x128xf32>
    %c0_10 = arith.constant 0 : index
    %c0_11 = arith.constant 0 : index
    %44 = vector.load %arg3[%c0_10, %c0_11] : memref<1x128xf32, #tpu.memory_space<vmem>>, vector<1x128xf32>
    %45 = vector.broadcast %44 : vector<1x128xf32> to vector<16x128xf32>
    %46 = arith.addf %43, %45 : vector<16x128xf32>
    %c0_12 = arith.constant 0 : index
    %c0_13 = arith.constant 0 : index
    %47 = vector.load %arg4[%c0_12, %c0_13] : memref<1x128xf32, #tpu.memory_space<vmem>>, vector<1x128xf32>
    %48 = vector.broadcast %47 : vector<1x128xf32> to vector<16x128xf32>
    %49 = arith.mulf %46, %48 : vector<16x128xf32>
    %c0_14 = arith.constant 0 : index
    %c0_15 = arith.constant 0 : index
    %50 = vector.load %arg5[%c0_14, %c0_15] : memref<1x128xf32, #tpu.memory_space<vmem>>, vector<1x128xf32>
    %51 = vector.broadcast %50 : vector<1x128xf32> to vector<16x128xf32>
    %52 = arith.addf %49, %51 : vector<16x128xf32>
    %53 = arith.negf %52 : vector<16x128xf32>
    %54 = math.exp %53 : vector<16x128xf32>
    %cst_16 = arith.constant 1.000000e+00 : f32
    %55 = vector.broadcast %cst_16 : f32 to vector<16x128xf32>
    %56 = arith.addf %55, %54 : vector<16x128xf32>
    %57 = arith.divf %55, %56 : vector<16x128xf32>
    %58 = arith.mulf %52, %57 : vector<16x128xf32>
    %59 = arith.truncf %58 : vector<16x128xf32> to vector<16x128xbf16>
    %c0_17 = arith.constant 0 : index
    %c0_18 = arith.constant 0 : index
    %60 = vector.load %arg6[%c0_17, %c0_18] : memref<128x64xbf16, #tpu.memory_space<vmem>>, vector<128x64xbf16>
    %cst_19 = arith.constant dense<0.000000e+00> : vector<16x64xf32>
    %61 = tpu.matmul %59, %60, %cst_19 {dimension_numbers = #tpu.dot_dimension_numbers<[1], [0], [0], [1], [0, 0, 1, 1], [], []>} : vector<16x128xbf16>, vector<128x64xbf16>, vector<16x64xf32> -> vector<16x64xf32>
    %c0_20 = arith.constant 0 : index
    %c0_21 = arith.constant 0 : index
    %62 = vector.load %arg7[%c0_20, %c0_21] : memref<1x64xf32, #tpu.memory_space<vmem>>, vector<1x64xf32>
    %63 = vector.broadcast %62 : vector<1x64xf32> to vector<16x64xf32>
    %64 = arith.addf %61, %63 : vector<16x64xf32>
    %c0_22 = arith.constant 0 : index
    %c0_23 = arith.constant 0 : index
    %c0_24 = arith.constant 0 : index
    %65 = vector.load %arg8[%c0_22, %c0_23, %c0_24] : memref<1x16x64xf32, #tpu.memory_space<vmem>>, vector<1x16x64xf32>
    %66 = vector.shape_cast %65 : vector<1x16x64xf32> to vector<16x64xf32>
    %67 = arith.addf %64, %66 : vector<16x64xf32>
    %c0_25 = arith.constant 0 : index
    %c0_26 = arith.constant 0 : index
    %c0_27 = arith.constant 0 : index
    %68 = vector.load %arg9[%c0_25, %c0_26, %c0_27] : memref<1x16x64xf32, #tpu.memory_space<vmem>>, vector<1x16x64xf32>
    %69 = vector.shape_cast %68 : vector<1x16x64xf32> to vector<16x64xf32>
    %70 = vector.shape_cast %67 : vector<16x64xf32> to vector<1x16x64xf32>
    tpu.vector_store %arg9[%c0_25, %c0_26, %c0_27], %70 {strides = array<i32>} : memref<1x16x64xf32, #tpu.memory_space<vmem>>, vector<1x16x64xf32>,
    return
  }
  func.func @transform_0(%arg0: i32) -> (i32, i32, i32) {
    %c0_i32 = arith.constant 0 : i32
    %c0_i32_0 = arith.constant 0 : i32
    %c0_i32_1 = arith.constant 0 : i32
    return %arg0, %c0_i32, %c0_i32_0 : i32, i32, i32
  }
  func.func @transform_1(%arg0: i32) -> (i32, i32) {
    %c0_i32 = arith.constant 0 : i32
    %c0_i32_0 = arith.constant 0 : i32
    %c0_i32_1 = arith.constant 0 : i32
    return %c0_i32, %c0_i32_0 : i32, i32
  }
  func.func @transform_2(%arg0: i32) -> (i32, i32) {
    %c0_i32 = arith.constant 0 : i32
    %c0_i32_0 = arith.constant 0 : i32
    %c0_i32_1 = arith.constant 0 : i32
    return %c0_i32, %c0_i32_0 : i32, i32
  }
  func.func @transform_3(%arg0: i32) -> (i32, i32) {
    %c0_i32 = arith.constant 0 : i32
    %c0_i32_0 = arith.constant 0 : i32
    %c0_i32_1 = arith.constant 0 : i32
    return %c0_i32, %c0_i32_0 : i32, i32
  }
  func.func @transform_4(%arg0: i32) -> (i32, i32) {
    %c0_i32 = arith.constant 0 : i32
    %c0_i32_0 = arith.constant 0 : i32
    %c0_i32_1 = arith.constant 0 : i32
    return %c0_i32, %c0_i32_0 : i32, i32
  }
  func.func @transform_5(%arg0: i32) -> (i32, i32) {
    %c0_i32 = arith.constant 0 : i32
    %c0_i32_0 = arith.constant 0 : i32
    %c0_i32_1 = arith.constant 0 : i32
    return %c0_i32, %c0_i32_0 : i32, i32
  }
  func.func @transform_6(%arg0: i32) -> (i32, i32) {
    %c0_i32 = arith.constant 0 : i32
    %c0_i32_0 = arith.constant 0 : i32
    %c0_i32_1 = arith.constant 0 : i32
    return %c0_i32, %c0_i32_0 : i32, i32
  }
  func.func @transform_7(%arg0: i32) -> (i32, i32, i32) {
    %c0_i32 = arith.constant 0 : i32
    %c0_i32_0 = arith.constant 0 : i32
    %c0_i32_1 = arith.constant 0 : i32
    return %arg0, %c0_i32, %c0_i32_0 : i32, i32, i32
  }
  func.func @transform_8(%arg0: i32) -> (i32, i32, i32) {
    %c0_i32 = arith.constant 0 : i32
    %c0_i32_0 = arith.constant 0 : i32
    %c0_i32_1 = arith.constant 0 : i32
    return %arg0, %c0_i32, %c0_i32_0 : i32, i32, i32
  }
}

module attributes {stable_mosaic.version = 11 : i64} {
  func.func @_fused_linear_kernel(%arg0: i32, %arg1: memref<32x256xf32, #tpu.memory_space<vmem>>, %arg2: memref<256x64xbf16, #tpu.memory_space<vmem>>, %arg3: memref<1x64xf32, #tpu.memory_space<vmem>>, %arg4: memref<32x64xf32, #tpu.memory_space<vmem>>, %arg5: memref<1x64xf32, #tpu.memory_space<vmem>>, %arg6: memref<1x64xf32, #tpu.memory_space<vmem>>, %arg7: memref<32x64xf32, #tpu.memory_space<vmem>>) attributes {dimension_semantics = [#tpu.dimension_semantics<parallel>], iteration_bounds = array<i64: 1>, scalar_prefetch = 0 : i64, scratch_operands = 0 : i64, tpu.core_type = #tpu.core_type<tc>, window_params = [{transform_indices = @transform_0, window_bounds = array<i64: 32, 256>}, {pipeline_mode = #tpu.pipeline_mode<synchronous>, transform_indices = @transform_1, window_bounds = array<i64: 256, 64>}, {pipeline_mode = #tpu.pipeline_mode<synchronous>, transform_indices = @transform_2, window_bounds = array<i64: 1, 64>}, {transform_indices = @transform_3, window_bounds = array<i64: 32, 64>}, {pipeline_mode = #tpu.pipeline_mode<synchronous>, transform_indices = @transform_4, window_bounds = array<i64: 1, 64>}, {pipeline_mode = #tpu.pipeline_mode<synchronous>, transform_indices = @transform_5, window_bounds = array<i64: 1, 64>}, {transform_indices = @transform_6, window_bounds = array<i64: 32, 64>}]} {
    %c0 = arith.constant 0 : index
    %c0_0 = arith.constant 0 : index
    %0 = vector.load %arg1[%c0, %c0_0] : memref<32x256xf32, #tpu.memory_space<vmem>>, vector<32x256xf32>
    %1 = arith.truncf %0 : vector<32x256xf32> to vector<32x256xbf16>
    %c0_1 = arith.constant 0 : index
    %c0_2 = arith.constant 0 : index
    %2 = vector.load %arg2[%c0_1, %c0_2] : memref<256x64xbf16, #tpu.memory_space<vmem>>, vector<256x64xbf16>
    %cst = arith.constant dense<0.000000e+00> : vector<32x64xf32>
    %3 = tpu.matmul %1, %2, %cst {dimension_numbers = #tpu.dot_dimension_numbers<[1], [0], [0], [1], [0, 0, 1, 1], [], []>} : vector<32x256xbf16>, vector<256x64xbf16>, vector<32x64xf32> -> vector<32x64xf32>
    %c0_3 = arith.constant 0 : index
    %c0_4 = arith.constant 0 : index
    %4 = vector.load %arg3[%c0_3, %c0_4] : memref<1x64xf32, #tpu.memory_space<vmem>>, vector<1x64xf32>
    %5 = vector.broadcast %4 : vector<1x64xf32> to vector<32x64xf32>
    %6 = arith.addf %3, %5 : vector<32x64xf32>
    %c0_5 = arith.constant 0 : index
    %c0_6 = arith.constant 0 : index
    %7 = vector.load %arg4[%c0_5, %c0_6] : memref<32x64xf32, #tpu.memory_space<vmem>>, vector<32x64xf32>
    %cst_7 = arith.constant 5.000000e-01 : f32
    %8 = vector.broadcast %cst_7 : f32 to vector<32x64xf32>
    %9 = arith.mulf %8, %6 : vector<32x64xf32>
    %10 = arith.addf %7, %9 : vector<32x64xf32>
    %cst_8 = arith.constant dense<0.000000e+00> : vector<32xf32>
    %11 = vector.multi_reduction <add>, %10, %cst_8 [1] : vector<32x64xf32> to vector<32xf32>
    %12 = vector.shape_cast %11 : vector<32xf32> to vector<32x1xf32>
    %cst_9 = arith.constant 6.400000e+01 : f32
    %13 = vector.broadcast %cst_9 : f32 to vector<32x1xf32>
    %14 = arith.divf %12, %13 : vector<32x1xf32>
    %15 = vector.broadcast %14 : vector<32x1xf32> to vector<32x64xf32>
    %16 = arith.subf %10, %15 : vector<32x64xf32>
    %17 = arith.mulf %16, %16 : vector<32x64xf32>
    %cst_10 = arith.constant dense<0.000000e+00> : vector<32xf32>
    %18 = vector.multi_reduction <add>, %17, %cst_10 [1] : vector<32x64xf32> to vector<32xf32>
    %19 = vector.shape_cast %18 : vector<32xf32> to vector<32x1xf32>
    %cst_11 = arith.constant 6.400000e+01 : f32
    %20 = vector.broadcast %cst_11 : f32 to vector<32x1xf32>
    %21 = arith.divf %19, %20 : vector<32x1xf32>
    %cst_12 = arith.constant 9.99999974E-6 : f32
    %22 = vector.broadcast %cst_12 : f32 to vector<32x1xf32>
    %23 = arith.addf %21, %22 : vector<32x1xf32>
    %24 = math.rsqrt %23 : vector<32x1xf32>
    %25 = vector.broadcast %24 : vector<32x1xf32> to vector<32x64xf32>
    %26 = arith.mulf %16, %25 : vector<32x64xf32>
    %c0_13 = arith.constant 0 : index
    %c0_14 = arith.constant 0 : index
    %27 = vector.load %arg5[%c0_13, %c0_14] : memref<1x64xf32, #tpu.memory_space<vmem>>, vector<1x64xf32>
    %28 = vector.broadcast %27 : vector<1x64xf32> to vector<32x64xf32>
    %29 = arith.mulf %26, %28 : vector<32x64xf32>
    %c0_15 = arith.constant 0 : index
    %c0_16 = arith.constant 0 : index
    %30 = vector.load %arg6[%c0_15, %c0_16] : memref<1x64xf32, #tpu.memory_space<vmem>>, vector<1x64xf32>
    %31 = vector.broadcast %30 : vector<1x64xf32> to vector<32x64xf32>
    %32 = arith.addf %29, %31 : vector<32x64xf32>
    %c0_17 = arith.constant 0 : index
    %c0_18 = arith.constant 0 : index
    %33 = vector.load %arg7[%c0_17, %c0_18] : memref<32x64xf32, #tpu.memory_space<vmem>>, vector<32x64xf32>
    tpu.vector_store %arg7[%c0_17, %c0_18], %32 {strides = array<i32>} : memref<32x64xf32, #tpu.memory_space<vmem>>, vector<32x64xf32>,
    return
  }
  func.func @transform_0(%arg0: i32) -> (i32, i32) {
    %c0_i32 = arith.constant 0 : i32
    %c0_i32_0 = arith.constant 0 : i32
    return %arg0, %c0_i32 : i32, i32
  }
  func.func @transform_1(%arg0: i32) -> (i32, i32) {
    %c0_i32 = arith.constant 0 : i32
    %c0_i32_0 = arith.constant 0 : i32
    %c0_i32_1 = arith.constant 0 : i32
    return %c0_i32, %c0_i32_0 : i32, i32
  }
  func.func @transform_2(%arg0: i32) -> (i32, i32) {
    %c0_i32 = arith.constant 0 : i32
    %c0_i32_0 = arith.constant 0 : i32
    %c0_i32_1 = arith.constant 0 : i32
    return %c0_i32, %c0_i32_0 : i32, i32
  }
  func.func @transform_3(%arg0: i32) -> (i32, i32) {
    %c0_i32 = arith.constant 0 : i32
    %c0_i32_0 = arith.constant 0 : i32
    return %arg0, %c0_i32 : i32, i32
  }
  func.func @transform_4(%arg0: i32) -> (i32, i32) {
    %c0_i32 = arith.constant 0 : i32
    %c0_i32_0 = arith.constant 0 : i32
    %c0_i32_1 = arith.constant 0 : i32
    return %c0_i32, %c0_i32_0 : i32, i32
  }
  func.func @transform_5(%arg0: i32) -> (i32, i32) {
    %c0_i32 = arith.constant 0 : i32
    %c0_i32_0 = arith.constant 0 : i32
    %c0_i32_1 = arith.constant 0 : i32
    return %c0_i32, %c0_i32_0 : i32, i32
  }
  func.func @transform_6(%arg0: i32) -> (i32, i32) {
    %c0_i32 = arith.constant 0 : i32
    %c0_i32_0 = arith.constant 0 : i32
    return %arg0, %c0_i32 : i32, i32
  }
}

module attributes {stable_mosaic.version = 11 : i64} {
  func.func @_fused_linear_kernel(%arg0: i32, %arg1: memref<32x64xf32, #tpu.memory_space<vmem>>, %arg2: memref<64x128xbf16, #tpu.memory_space<vmem>>, %arg3: memref<1x128xf32, #tpu.memory_space<vmem>>, %arg4: memref<32x128xf32, #tpu.memory_space<vmem>>) attributes {dimension_semantics = [#tpu.dimension_semantics<parallel>], iteration_bounds = array<i64: 1>, scalar_prefetch = 0 : i64, scratch_operands = 0 : i64, tpu.core_type = #tpu.core_type<tc>, window_params = [{transform_indices = @transform_0, window_bounds = array<i64: 32, 64>}, {pipeline_mode = #tpu.pipeline_mode<synchronous>, transform_indices = @transform_1, window_bounds = array<i64: 64, 128>}, {pipeline_mode = #tpu.pipeline_mode<synchronous>, transform_indices = @transform_2, window_bounds = array<i64: 1, 128>}, {transform_indices = @transform_3, window_bounds = array<i64: 32, 128>}]} {
    %c0 = arith.constant 0 : index
    %c0_0 = arith.constant 0 : index
    %0 = vector.load %arg1[%c0, %c0_0] : memref<32x64xf32, #tpu.memory_space<vmem>>, vector<32x64xf32>
    %1 = arith.truncf %0 : vector<32x64xf32> to vector<32x64xbf16>
    %c0_1 = arith.constant 0 : index
    %c0_2 = arith.constant 0 : index
    %2 = vector.load %arg2[%c0_1, %c0_2] : memref<64x128xbf16, #tpu.memory_space<vmem>>, vector<64x128xbf16>
    %cst = arith.constant dense<0.000000e+00> : vector<32x128xf32>
    %3 = tpu.matmul %1, %2, %cst {dimension_numbers = #tpu.dot_dimension_numbers<[1], [0], [0], [1], [0, 0, 1, 1], [], []>} : vector<32x64xbf16>, vector<64x128xbf16>, vector<32x128xf32> -> vector<32x128xf32>
    %c0_3 = arith.constant 0 : index
    %c0_4 = arith.constant 0 : index
    %4 = vector.load %arg3[%c0_3, %c0_4] : memref<1x128xf32, #tpu.memory_space<vmem>>, vector<1x128xf32>
    %5 = vector.broadcast %4 : vector<1x128xf32> to vector<32x128xf32>
    %6 = arith.addf %3, %5 : vector<32x128xf32>
    %c0_5 = arith.constant 0 : index
    %c0_6 = arith.constant 0 : index
    %7 = vector.load %arg4[%c0_5, %c0_6] : memref<32x128xf32, #tpu.memory_space<vmem>>, vector<32x128xf32>
    tpu.vector_store %arg4[%c0_5, %c0_6], %6 {strides = array<i32>} : memref<32x128xf32, #tpu.memory_space<vmem>>, vector<32x128xf32>,
    return
  }
  func.func @transform_0(%arg0: i32) -> (i32, i32) {
    %c0_i32 = arith.constant 0 : i32
    %c0_i32_0 = arith.constant 0 : i32
    return %arg0, %c0_i32 : i32, i32
  }
  func.func @transform_1(%arg0: i32) -> (i32, i32) {
    %c0_i32 = arith.constant 0 : i32
    %c0_i32_0 = arith.constant 0 : i32
    %c0_i32_1 = arith.constant 0 : i32
    return %c0_i32, %c0_i32_0 : i32, i32
  }
  func.func @transform_2(%arg0: i32) -> (i32, i32) {
    %c0_i32 = arith.constant 0 : i32
    %c0_i32_0 = arith.constant 0 : i32
    %c0_i32_1 = arith.constant 0 : i32
    return %c0_i32, %c0_i32_0 : i32, i32
  }
  func.func @transform_3(%arg0: i32) -> (i32, i32) {
    %c0_i32 = arith.constant 0 : i32
    %c0_i32_0 = arith.constant 0 : i32
    return %arg0, %c0_i32 : i32, i32
  }
}

</mosaic_0001>

<llo_original>
// kernel: conformer_ctc_forward.21
$region0: #{conformer_ctc_forward.21}
  #allocation0 [shape = 'u32[]', space=smem, size = 0x4, offset = 0x4, fixed_abs, tag = 'smem constant byte address 0x4 - core index']
  #allocation1 [shape = 'u32[72,128]{1,0:T(1,128)}', space=vmem, size = 0x9000, scoped, tag = 'internal scratch']
  %s0 = inlined_call_operand.vmem [shape: f32[32,64], index: 0, kind: input, shape index: {}]
  %s1 = inlined_call_operand.hbm [shape: bf16[64,256], index: 1, kind: input, shape index: {}]
  %s2 = inlined_call_operand.vmem [shape: f32[1,256], index: 2, kind: input, shape index: {}]
  %s3 = inlined_call_operand.vmem [shape: f32[1,64], index: 3, kind: input, shape index: {}]
  %s4 = inlined_call_operand.hbm [shape: f32[1,64], index: 4, kind: input, shape index: {}]
  %s5 = inlined_call_operand.vmem [shape: f32[32,256], index: 5, kind: output, shape index: {}]
  %s6 = sld [smem:[#allocation0]]
  $region38: #{conformer_ctc_forward.21} parent=0
    _
  %s8 = ssub.s32 1, %s6
  %s9 = scalar_select 0, %s8, %s6
  $region1: #{conformer_ctc_forward.21} parent=0
    #allocation2 [shape = 'u8[32768]{0}', space=vmem, size = 0x8000, scoped, tag = 'input window, operand 1, single buffered']
    #allocation3 [shape = 's32[1]{0}', space=sflag, size = 0x4, scoped, tag = 'scoped memory for conformer_ctc_forward.21']
    #allocation4 [shape = 'u8[512]{0}', space=vmem, size = 0x400, scoped, tag = 'input window, operand 4, single buffered']
    #allocation5 [shape = 's32[1]{0}', space=sflag, size = 0x4, scoped, tag = 'scoped memory for conformer_ctc_forward.21']
    %10 = vsyncpa [#allocation3], 0
    %11 = vsyncpa [#allocation5], 0
    // Predicated region
    $region2: #{conformer_ctc_forward.21} parent=1 // pred_check
      _
    $region3: #{conformer_ctc_forward.21} parent=1 // pred_check_branch
      %13 = sbr.rel (0) target = $region5
    $region4: #{conformer_ctc_forward.21} parent=1 // pred_region
      _
    $region5: #{conformer_ctc_forward.21} parent=1 // pred_fallthru
      _
    // Predicated region
    $region6: #{conformer_ctc_forward.21} parent=1 // pred_check
      _
    $region7: #{conformer_ctc_forward.21} parent=1 // pred_check_branch
      %15 = sbr.rel (0) target = $region9
    $region8: #{conformer_ctc_forward.21} parent=1 // pred_region
      %17 = vsyncadd [#allocation3], 0
      %s18 = sshll.u32 %s1, 4
      %s19 = int_to_ptr.hbm [resolvable:$true] %s18
      %s20 = sshll.u32 [#allocation2], 4
      %s21 = int_to_ptr.vmem [resolvable:$true] %s20
      %26 = dma.hbm_to_vmem [thread:$0]  %s19, 1024, %s21, [#allocation3], 128, 128, 8
    $region9: #{conformer_ctc_forward.21} parent=1 // pred_fallthru
      _
    // Predicated region
    $region10: #{conformer_ctc_forward.21} parent=1 // pred_check
      _
    $region11: #{conformer_ctc_forward.21} parent=1 // pred_check_branch
      %28 = sbr.rel (0) target = $region13
    $region12: #{conformer_ctc_forward.21} parent=1 // pred_region
      _
    $region13: #{conformer_ctc_forward.21} parent=1 // pred_fallthru
      _
    // Predicated region
    $region14: #{conformer_ctc_forward.21} parent=1 // pred_check
      _
    $region15: #{conformer_ctc_forward.21} parent=1 // pred_check_branch
      %30 = sbr.rel (0) target = $region17
    $region16: #{conformer_ctc_forward.21} parent=1 // pred_region
      _
    $region17: #{conformer_ctc_forward.21} parent=1 // pred_fallthru
      _
    // Predicated region
    $region18: #{conformer_ctc_forward.21} parent=1 // pred_check
      _
    $region19: #{conformer_ctc_forward.21} parent=1 // pred_check_branch
      %32 = sbr.rel (0) target = $region21
    $region20: #{conformer_ctc_forward.21} parent=1 // pred_region
      %34 = vsyncadd [#allocation5], 0
      %s36 = sshll.u32 %s4, 4
      %s37 = int_to_ptr.hbm [resolvable:$true] %s36
      %s38 = sshll.u32 [#allocation4], 4
      %s39 = int_to_ptr.vmem [resolvable:$true] %s38
      %41 = dma.hbm_to_vmem [thread:$0]  %s37, 16, %s39, [#allocation5]
    $region21: #{conformer_ctc_forward.21} parent=1 // pred_fallthru
      _
    // Predicated region
    $region22: #{conformer_ctc_forward.21} parent=1 // pred_check
      _
    $region23: #{conformer_ctc_forward.21} parent=1 // pred_check_branch
      %43 = sbr.rel (0) target = $region25
    $region24: #{conformer_ctc_forward.21} parent=1 // pred_region
      %45 = dma.done [#allocation3], 1024
    $region25: #{conformer_ctc_forward.21} parent=1 // pred_fallthru
      _
    // Predicated region
    $region26: #{conformer_ctc_forward.21} parent=1 // pred_check
      _
    $region27: #{conformer_ctc_forward.21} parent=1 // pred_check_branch
      %47 = sbr.rel (0) target = $region29
    $region28: #{conformer_ctc_forward.21} parent=1 // pred_region
      %49 = dma.done [#allocation5], 16
    $region29: #{conformer_ctc_forward.21} parent=1 // pred_fallthru
      _
    %v51 = vld [vmem:[%s0] sm:$0xff]
    %v52 = vld [vmem:[%s0 + $0x8] sm:$0xff]
    %v53 = vld [vmem:[%s0 + $0x10] sm:$0xff]
    %v54 = vld [vmem:[%s0 + $0x18] sm:$0xff]
    %vm55 = vcmask 523264
    %v56 = vsel %vm55, %v51, 0.0
    %57 = vadd.xlane.f32.xlu0 %v56
    %v58 = vpop.xlane.xlu0 %57
    %v59 = vsel %vm55, %v52, 0.0
    %60 = vadd.xlane.f32.xlu0 %v59
    %v61 = vpop.xlane.xlu0 %60
    %v62 = vsel %vm55, %v53, 0.0
    %63 = vadd.xlane.f32.xlu0 %v62
    %v64 = vpop.xlane.xlu0 %63
    %v65 = vsel %vm55, %v54, 0.0
    %66 = vadd.xlane.f32.xlu0 %v65
    %v67 = vpop.xlane.xlu0 %66
    %v68 = vrcp.pop 64.0
    %v69 = vmul.f32 64.0, %v68
    %v70 = vsub.f32 1.0, %v69
    %v71 = vmul.f32 %v68, %v70
    %v72 = vadd.f32 %v68, %v71
    %vm73 = vweird.f32 %v68
    %v74 = vsel %vm73, %v68, %v72
    %v75 = vmul.f32 %v58, %v74
    %v76 = vmul.f32 %v61, %v74
    %v77 = vmul.f32 %v64, %v74
    %v78 = vmul.f32 %v67, %v74
    %v79 = vsub.f32 %v51, %v75
    %v80 = vsub.f32 %v52, %v76
    %v81 = vsub.f32 %v53, %v77
    %v82 = vsub.f32 %v54, %v78
    %v83 = vmul.f32 %v79, %v79
    %v84 = vmul.f32 %v80, %v80
    %v85 = vmul.f32 %v81, %v81
    %v86 = vmul.f32 %v82, %v82
    %v87 = vsel %vm55, %v83, 0.0
    %88 = vadd.xlane.f32.xlu0 %v87
    %v89 = vpop.xlane.xlu0 %88
    %v90 = vsel %vm55, %v84, 0.0
    %91 = vadd.xlane.f32.xlu0 %v90
    %v92 = vpop.xlane.xlu0 %91
    %v93 = vsel %vm55, %v85, 0.0
    %94 = vadd.xlane.f32.xlu0 %v93
    %v95 = vpop.xlane.xlu0 %94
    %v96 = vsel %vm55, %v86, 0.0
    %97 = vadd.xlane.f32.xlu0 %v96
    %v98 = vpop.xlane.xlu0 %97
    %v99 = vmul.f32 %v89, %v74
    %v100 = vmul.f32 %v92, %v74
    %v101 = vmul.f32 %v95, %v74
    %v102 = vmul.f32 %v98, %v74
    %v103 = vadd.f32 %v99, 1e-05
    %v104 = vadd.f32 %v100, 1e-05
    %v105 = vadd.f32 %v101, 1e-05
    %v106 = vadd.f32 %v102, 1e-05
    %v107 = vrsqrt.pop %v103
    %v108 = vmul.f32 %v107, %v103
    %v109 = vmul.f32 %v108, %v107
    %v110 = vmul.f32 0.5, %v109
    %v111 = vsub.f32 1.5, %v110
    %v112 = vmul.f32 %v107, %v111
    %vm113 = vweird.f32 %v103
    %vm114 = vweird.f32 %v107
    %vm115 = vmor %vm113, %vm114
    %v116 = vsel %vm115, %v107, %v112
    %v117 = vrsqrt.pop %v104
    %v118 = vmul.f32 %v117, %v104
    %v119 = vmul.f32 %v118, %v117
    %v120 = vmul.f32 0.5, %v119
    %v121 = vsub.f32 1.5, %v120
    %v122 = vmul.f32 %v117, %v121
    %vm123 = vweird.f32 %v104
    %vm124 = vweird.f32 %v117
    %vm125 = vmor %vm123, %vm124
    %v126 = vsel %vm125, %v117, %v122
    %v127 = vrsqrt.pop %v105
    %v128 = vmul.f32 %v127, %v105
    %v129 = vmul.f32 %v128, %v127
    %v130 = vmul.f32 0.5, %v129
    %v131 = vsub.f32 1.5, %v130
    %v132 = vmul.f32 %v127, %v131
    %vm133 = vweird.f32 %v105
    %vm134 = vweird.f32 %v127
    %vm135 = vmor %vm133, %vm134
    %v136 = vsel %vm135, %v127, %v132
    %v137 = vrsqrt.pop %v106
    %v138 = vmul.f32 %v137, %v106
    %v139 = vmul.f32 %v138, %v137
    %v140 = vmul.f32 0.5, %v139
    %v141 = vsub.f32 1.5, %v140
    %v142 = vmul.f32 %v137, %v141
    %vm143 = vweird.f32 %v106
    %vm144 = vweird.f32 %v137
    %vm145 = vmor %vm143, %vm144
    %v146 = vsel %vm145, %v137, %v142
    %v147 = vmul.f32 %v79, %v116
    %v148 = vmul.f32 %v80, %v126
    %v149 = vmul.f32 %v81, %v136
    %v150 = vmul.f32 %v82, %v146
    %v151 = vld [vmem:[%s3] sm:$0x1]
    %v153 = vperm.slane %v151, 0
    %v155 = vmul.f32 %v147, %v153
    %v156 = vmul.f32 %v148, %v153
    %v157 = vmul.f32 %v149, %v153
    %v158 = vmul.f32 %v150, %v153
    %v159 = vld [vmem:[#allocation4] sm:$0x1]
    %v161 = vperm.slane %v159, 0
    %v163 = vadd.f32 %v155, %v161
    %v164 = vadd.f32 %v156, %v161
    %v165 = vadd.f32 %v157, %v161
    %v166 = vadd.f32 %v158, %v161
    %v167 = vpack.c.bf16 %v164, %v163
    %v168 = vpack.c.bf16 %v166, %v165
    %v169 = vld [vmem:[#allocation2] sm:$0xff]
    %v170 = vld [vmem:[#allocation2 + $0x8] sm:$0xff]
    %v171 = vld [vmem:[#allocation2 + $0x10] sm:$0xff]
    %v172 = vld [vmem:[#allocation2 + $0x18] sm:$0xff]
    %v173 = vld [vmem:[#allocation2 + $0x20] sm:$0xff]
    %v174 = vld [vmem:[#allocation2 + $0x28] sm:$0xff]
    %v175 = vld [vmem:[#allocation2 + $0x30] sm:$0xff]
    %v176 = vld [vmem:[#allocation2 + $0x38] sm:$0xff]
    %v177 = vld [vmem:[%s2] sm:$0x3]
    %v179 = vperm.slane %v177, 0
    %v180 = vperm.slane %v177, 1
    %v191 = vunpack.c.l.b16 %v169
    %v192 = vunpack.c.h.b16 %v169
    %v193 = vunpack.c.l.b16 %v170
    %v194 = vunpack.c.h.b16 %v170
    %v195 = vunpack.c.l.b16 %v171
    %v196 = vunpack.c.h.b16 %v171
    %v197 = vunpack.c.l.b16 %v172
    %v198 = vunpack.c.h.b16 %v172
    %v199 = vunpack.c.l.b16 %v173
    %v200 = vunpack.c.h.b16 %v173
    %v201 = vunpack.c.l.b16 %v174
    %v202 = vunpack.c.h.b16 %v174
    %v203 = vunpack.c.l.b16 %v175
    %v204 = vunpack.c.h.b16 %v175
    %v205 = vunpack.c.l.b16 %v176
    %v206 = vunpack.c.h.b16 %v176
    %v207 = vpack.c.b16 %v193, %v191
    %v208 = vpack.c.b16 %v194, %v192
    %v209 = vpack.c.b16 %v197, %v195
    %v210 = vpack.c.b16 %v198, %v196
    %v211 = vpack.c.b16 %v201, %v199
    %v212 = vpack.c.b16 %v202, %v200
    %v213 = vpack.c.b16 %v205, %v203
    %v214 = vpack.c.b16 %v206, %v204
    %v224 = vsel %vm55, %v167, 0
    %v227 = vsel %vm55, %v168, 0
    %229 = vmatpush.bf16.msra.mxu0 0
    %230 = vmatpush.bf16.msra.mxu0 0
    %231 = vmatpush.bf16.msra.mxu0 0
    %232 = vmatpush.bf16.msra.mxu0 0
    %233 = vmatpush.bf16.msra.mxu0 %v213
    %234 = vmatpush.bf16.msra.mxu0 %v211
    %235 = vmatpush.bf16.msra.mxu0 %v209
    %236 = vmatpush.bf16.msra.mxu0 %v207
    %237 = vmatmul.bf16.gmra.mxu0 %v224
    %v238 = vpop.f32.mrf.mxu0
    %v239 = vadd.f32 %v179, %v238
    %v240 = vpop.f32.mrf.mxu0
    %v241 = vadd.f32 %v179, %v240
    %242 = vmatmul.bf16.gmra.mxu0 %v227
    %v243 = vpop.f32.mrf.mxu0
    %v244 = vadd.f32 %v179, %v243
    %v245 = vpop.f32.mrf.mxu0
    %v246 = vadd.f32 %v179, %v245
    %247 = vdwg.mxu0
    %248 = vmatpush.bf16.msra.mxu0 0
    %249 = vmatpush.bf16.msra.mxu0 0
    %250 = vmatpush.bf16.msra.mxu0 0
    %251 = vmatpush.bf16.msra.mxu0 0
    %252 = vmatpush.bf16.msra.mxu0 %v214
    %253 = vmatpush.bf16.msra.mxu0 %v212
    %254 = vmatpush.bf16.msra.mxu0 %v210
    %255 = vmatpush.bf16.msra.mxu0 %v208
    %256 = vmatmul.bf16.gmra.mxu0 %v224
    %v257 = vpop.f32.mrf.mxu0
    %v258 = vadd.f32 %v180, %v257
    %v259 = vpop.f32.mrf.mxu0
    %v260 = vadd.f32 %v180, %v259
    %261 = vmatmul.bf16.gmra.mxu0 %v227
    %v262 = vpop.f32.mrf.mxu0
    %v263 = vadd.f32 %v180, %v262
    %v264 = vpop.f32.mrf.mxu0
    %v265 = vadd.f32 %v180, %v264
    %266 = vdwg.mxu0
    %v267 = vxor.u32 %v239, 2147483648
    %v268 = vxor.u32 %v258, 2147483648
    %v269 = vxor.u32 %v241, 2147483648
    %v270 = vxor.u32 %v260, 2147483648
    %v271 = vxor.u32 %v244, 2147483648
    %v272 = vxor.u32 %v263, 2147483648
    %v273 = vxor.u32 %v246, 2147483648
    %v274 = vxor.u32 %v265, 2147483648
    %v275 = vmul.f32 %v267, 1.442695
    %v276 = vpow.pop %v275
    %v277 = vmul.f32 %v268, 1.442695
    %v278 = vpow.pop %v277
    %v279 = vmul.f32 %v269, 1.442695
    %v280 = vpow.pop %v279
    %v281 = vmul.f32 %v270, 1.442695
    %v282 = vpow.pop %v281
    %v283 = vmul.f32 %v271, 1.442695
    %v284 = vpow.pop %v283
    %v285 = vmul.f32 %v272, 1.442695
    %v286 = vpow.pop %v285
    %v287 = vmul.f32 %v273, 1.442695
    %v288 = vpow.pop %v287
    %v289 = vmul.f32 %v274, 1.442695
    %v290 = vpow.pop %v289
    %v291 = vadd.f32 %v276, 1.0
    %v292 = vadd.f32 %v278, 1.0
    %v293 = vadd.f32 %v280, 1.0
    %v294 = vadd.f32 %v282, 1.0
    %v295 = vadd.f32 %v284, 1.0
    %v296 = vadd.f32 %v286, 1.0
    %v297 = vadd.f32 %v288, 1.0
    %v298 = vadd.f32 %v290, 1.0
    %v299 = vrcp.pop %v291
    %v300 = vmul.f32 %v291, %v299
    %v301 = vsub.f32 1.0, %v300
    %v302 = vmul.f32 %v299, %v301
    %v303 = vadd.f32 %v299, %v302
    %vm304 = vweird.f32 %v291
    %vm305 = vweird.f32 %v299
    %vm306 = vmor %vm304, %vm305
    %v307 = vsel %vm306, %v299, %v303
    %v308 = vand.u32 2147483647, %v291
    %vm309 = vcmp.eq.f32.partialorder %v308, 8.507059e+37
    %v310 = vand.u32 %v291, 2147483648
    %v311 = vor.u32 1.1754944e-38, %v310
    %v312 = vsel %vm309, %v311, %v307
    %v313 = vmul.f32 1.0, %v312
    %v314 = vrcp.pop %v292
    %v315 = vmul.f32 %v292, %v314
    %v316 = vsub.f32 1.0, %v315
    %v317 = vmul.f32 %v314, %v316
    %v318 = vadd.f32 %v314, %v317
    %vm319 = vweird.f32 %v292
    %vm320 = vweird.f32 %v314
    %vm321 = vmor %vm319, %vm320
    %v322 = vsel %vm321, %v314, %v318
    %v323 = vand.u32 2147483647, %v292
    %vm324 = vcmp.eq.f32.partialorder %v323, 8.507059e+37
    %v325 = vand.u32 %v292, 2147483648
    %v326 = vor.u32 1.1754944e-38, %v325
    %v327 = vsel %vm324, %v326, %v322
    %v328 = vmul.f32 1.0, %v327
    %v329 = vrcp.pop %v293
    %v330 = vmul.f32 %v293, %v329
    %v331 = vsub.f32 1.0, %v330
    %v332 = vmul.f32 %v329, %v331
    %v333 = vadd.f32 %v329, %v332
    %vm334 = vweird.f32 %v293
    %vm335 = vweird.f32 %v329
    %vm336 = vmor %vm334, %vm335
    %v337 = vsel %vm336, %v329, %v333
    %v338 = vand.u32 2147483647, %v293
    %vm339 = vcmp.eq.f32.partialorder %v338, 8.507059e+37
    %v340 = vand.u32 %v293, 2147483648
    %v341 = vor.u32 1.1754944e-38, %v340
    %v342 = vsel %vm339, %v341, %v337
    %v343 = vmul.f32 1.0, %v342
    %v344 = vrcp.pop %v294
    %v345 = vmul.f32 %v294, %v344
    %v346 = vsub.f32 1.0, %v345
    %v347 = vmul.f32 %v344, %v346
    %v348 = vadd.f32 %v344, %v347
    %vm349 = vweird.f32 %v294
    %vm350 = vweird.f32 %v344
    %vm351 = vmor %vm349, %vm350
    %v352 = vsel %vm351, %v344, %v348
    %v353 = vand.u32 2147483647, %v294
    %vm354 = vcmp.eq.f32.partialorder %v353, 8.507059e+37
    %v355 = vand.u32 %v294, 2147483648
    %v356 = vor.u32 1.1754944e-38, %v355
    %v357 = vsel %vm354, %v356, %v352
    %v358 = vmul.f32 1.0, %v357
    %v359 = vrcp.pop %v295
    %v360 = vmul.f32 %v295, %v359
    %v361 = vsub.f32 1.0, %v360
    %v362 = vmul.f32 %v359, %v361
    %v363 = vadd.f32 %v359, %v362
    %vm364 = vweird.f32 %v295
    %vm365 = vweird.f32 %v359
    %vm366 = vmor %vm364, %vm365
    %v367 = vsel %vm366, %v359, %v363
    %v368 = vand.u32 2147483647, %v295
    %vm369 = vcmp.eq.f32.partialorder %v368, 8.507059e+37
    %v370 = vand.u32 %v295, 2147483648
    %v371 = vor.u32 1.1754944e-38, %v370
    %v372 = vsel %vm369, %v371, %v367
    %v373 = vmul.f32 1.0, %v372
    %v374 = vrcp.pop %v296
    %v375 = vmul.f32 %v296, %v374
    %v376 = vsub.f32 1.0, %v375
    %v377 = vmul.f32 %v374, %v376
    %v378 = vadd.f32 %v374, %v377
    %vm379 = vweird.f32 %v296
    %vm380 = vweird.f32 %v374
    %vm381 = vmor %vm379, %vm380
    %v382 = vsel %vm381, %v374, %v378
    %v383 = vand.u32 2147483647, %v296
    %vm384 = vcmp.eq.f32.partialorder %v383, 8.507059e+37
    %v385 = vand.u32 %v296, 2147483648
    %v386 = vor.u32 1.1754944e-38, %v385
    %v387 = vsel %vm384, %v386, %v382
    %v388 = vmul.f32 1.0, %v387
    %v389 = vrcp.pop %v297
    %v390 = vmul.f32 %v297, %v389
    %v391 = vsub.f32 1.0, %v390
    %v392 = vmul.f32 %v389, %v391
    %v393 = vadd.f32 %v389, %v392
    %vm394 = vweird.f32 %v297
    %vm395 = vweird.f32 %v389
    %vm396 = vmor %vm394, %vm395
    %v397 = vsel %vm396, %v389, %v393
    %v398 = vand.u32 2147483647, %v297
    %vm399 = vcmp.eq.f32.partialorder %v398, 8.507059e+37
    %v400 = vand.u32 %v297, 2147483648
    %v401 = vor.u32 1.1754944e-38, %v400
    %v402 = vsel %vm399, %v401, %v397
    %v403 = vmul.f32 1.0, %v402
    %v404 = vrcp.pop %v298
    %v405 = vmul.f32 %v298, %v404
    %v406 = vsub.f32 1.0, %v405
    %v407 = vmul.f32 %v404, %v406
    %v408 = vadd.f32 %v404, %v407
    %vm409 = vweird.f32 %v298
    %vm410 = vweird.f32 %v404
    %vm411 = vmor %vm409, %vm410
    %v412 = vsel %vm411, %v404, %v408
    %v413 = vand.u32 2147483647, %v298
    %vm414 = vcmp.eq.f32.partialorder %v413, 8.507059e+37
    %v415 = vand.u32 %v298, 2147483648
    %v416 = vor.u32 1.1754944e-38, %v415
    %v417 = vsel %vm414, %v416, %v412
    %v418 = vmul.f32 1.0, %v417
    %v419 = vmul.f32 %v239, %v313
    %v420 = vmul.f32 %v258, %v328
    %v421 = vmul.f32 %v241, %v343
    %v422 = vmul.f32 %v260, %v358
    %v423 = vmul.f32 %v244, %v373
    %v424 = vmul.f32 %v263, %v388
    %v425 = vmul.f32 %v246, %v403
    %v426 = vmul.f32 %v265, %v418
    %427 = vst [vmem:[%s5] sm:$0xff] %v419
    %428 = vst [vmem:[%s5 + $0x8] sm:$0xff] %v420
    %429 = vst [vmem:[%s5 + $0x10] sm:$0xff] %v421
    %430 = vst [vmem:[%s5 + $0x18] sm:$0xff] %v422
    %431 = vst [vmem:[%s5 + $0x20] sm:$0xff] %v423
    %432 = vst [vmem:[%s5 + $0x28] sm:$0xff] %v424
    %433 = vst [vmem:[%s5 + $0x30] sm:$0xff] %v425
    %434 = vst [vmem:[%s5 + $0x38] sm:$0xff] %v426
    // Predicated region
    $region30: #{conformer_ctc_forward.21} parent=1 // pred_check
      _
    $region31: #{conformer_ctc_forward.21} parent=1 // pred_check_branch
      %436 = sbr.rel (0) target = $region33
    $region32: #{conformer_ctc_forward.21} parent=1 // pred_region
      _
    $region33: #{conformer_ctc_forward.21} parent=1 // pred_fallthru
      _
    // Predicated region
    $region34: #{conformer_ctc_forward.21} parent=1 // pred_check
      _
    $region35: #{conformer_ctc_forward.21} parent=1 // pred_check_branch
      %438 = sbr.rel (0) target = $region37
    $region36: #{conformer_ctc_forward.21} parent=1 // pred_region
      _
    $region37: #{conformer_ctc_forward.21} parent=1 // pred_fallthru
      _
    %439 = vsyncpa [#allocation3], 1
    %440 = vsyncpa [#allocation5], 1

// kernel: conformer_ctc_forward.20
$region0: #{conformer_ctc_forward.20}
  #allocation0 [shape = 'u32[]', space=smem, size = 0x4, offset = 0x4, fixed_abs, tag = 'smem constant byte address 0x4 - core index']
  #allocation1 [shape = 'u32[72,128]{1,0:T(1,128)}', space=vmem, size = 0x9000, scoped, tag = 'internal scratch']
  %s0 = inlined_call_operand.hbm [shape: f32[32,40], index: 0, kind: input, shape index: {}]
  %s1 = inlined_call_operand.hbm [shape: bf16[40,64], index: 1, kind: input, shape index: {}]
  %s2 = inlined_call_operand.vmem [shape: f32[1,64], index: 2, kind: input, shape index: {}]
  %s3 = inlined_call_operand.vmem [shape: f32[32,64], index: 3, kind: output, shape index: {}]
  %s4 = sld [smem:[#allocation0]]
  $region30: #{conformer_ctc_forward.20} parent=0
    _
  %s6 = ssub.s32 1, %s4
  %s7 = scalar_select 0, %s6, %s4
  $region1: #{conformer_ctc_forward.20} parent=0
    #allocation2 [shape = 'u8[16384]{0}', space=vmem, size = 0x4000, scoped, tag = 'input window, operand 0, single buffered']
    #allocation3 [shape = 's32[1]{0}', space=sflag, size = 0x4, scoped, tag = 'scoped memory for conformer_ctc_forward.20']
    #allocation4 [shape = 'u8[10240]{0}', space=vmem, size = 0x2800, scoped, tag = 'input window, operand 1, single buffered']
    #allocation5 [shape = 's32[1]{0}', space=sflag, size = 0x4, scoped, tag = 'scoped memory for conformer_ctc_forward.20']
    %8 = vsyncpa [#allocation3], 0
    %9 = vsyncpa [#allocation5], 0
    // Predicated region
    $region2: #{conformer_ctc_forward.20} parent=1 // pred_check
      _
    $region3: #{conformer_ctc_forward.20} parent=1 // pred_check_branch
      %11 = sbr.rel (0) target = $region5
    $region4: #{conformer_ctc_forward.20} parent=1 // pred_region
      %13 = vsyncadd [#allocation3], 0
      %s14 = sshll.u32 %s0, 4
      %s15 = int_to_ptr.hbm [resolvable:$true] %s14
      %s16 = sshll.u32 [#allocation2], 4
      %s17 = int_to_ptr.vmem [resolvable:$true] %s16
      %22 = dma.hbm_to_vmem [thread:$0]  %s15, 512, %s17, [#allocation3], 128, 128, 8
    $region5: #{conformer_ctc_forward.20} parent=1 // pred_fallthru
      _
    // Predicated region
    $region6: #{conformer_ctc_forward.20} parent=1 // pred_check
      _
    $region7: #{conformer_ctc_forward.20} parent=1 // pred_check_branch
      %24 = sbr.rel (0) target = $region9
    $region8: #{conformer_ctc_forward.20} parent=1 // pred_region
      %26 = vsyncadd [#allocation5], 0
      %s27 = sshll.u32 %s1, 4
      %s28 = int_to_ptr.hbm [resolvable:$true] %s27
      %s29 = sshll.u32 [#allocation4], 4
      %s30 = int_to_ptr.vmem [resolvable:$true] %s29
      %35 = dma.hbm_to_vmem [thread:$0]  %s28, 320, %s30, [#allocation5], 64, 64, 4
    $region9: #{conformer_ctc_forward.20} parent=1 // pred_fallthru
      _
    // Predicated region
    $region10: #{conformer_ctc_forward.20} parent=1 // pred_check
      _
    $region11: #{conformer_ctc_forward.20} parent=1 // pred_check_branch
      %37 = sbr.rel (0) target = $region13
    $region12: #{conformer_ctc_forward.20} parent=1 // pred_region
      _
    $region13: #{conformer_ctc_forward.20} parent=1 // pred_fallthru
      _
    // Predicated region
    $region14: #{conformer_ctc_forward.20} parent=1 // pred_check
      _
    $region15: #{conformer_ctc_forward.20} parent=1 // pred_check_branch
      %39 = sbr.rel (0) target = $region17
    $region16: #{conformer_ctc_forward.20} parent=1 // pred_region
      %41 = dma.done [#allocation3], 512
    $region17: #{conformer_ctc_forward.20} parent=1 // pred_fallthru
      _
    // Predicated region
    $region18: #{conformer_ctc_forward.20} parent=1 // pred_check
      _
    $region19: #{conformer_ctc_forward.20} parent=1 // pred_check_branch
      %43 = sbr.rel (0) target = $region21
    $region20: #{conformer_ctc_forward.20} parent=1 // pred_region
      %45 = dma.done [#allocation5], 320
    $region21: #{conformer_ctc_forward.20} parent=1 // pred_fallthru
      _
    %v47 = vld [vmem:[#allocation2] sm:$0xff]
    %v48 = vld [vmem:[#allocation2 + $0x8] sm:$0xff]
    %v49 = vld [vmem:[#allocation2 + $0x10] sm:$0xff]
    %v50 = vld [vmem:[#allocation2 + $0x18] sm:$0xff]
    %v51 = vpack.c.bf16 %v48, %v47
    %v52 = vpack.c.bf16 %v50, %v49
    %v53 = vld [vmem:[#allocation4] sm:$0xf]
    %v54 = vld [vmem:[#allocation4 + $0x4] sm:$0xf]
    %v55 = vld [vmem:[#allocation4 + $0x8] sm:$0xf]
    %v56 = vld [vmem:[#allocation4 + $0xc] sm:$0xf]
    %v57 = vld [vmem:[#allocation4 + $0x10] sm:$0xf]
    %v58 = vld [vmem:[%s2] sm:$0x1]
    %v60 = vperm.slane %v58, 0
    %v67 = vunpack.c.l.b16 %v53
    %v68 = vunpack.c.l.b16 %v54
    %v69 = vunpack.c.l.b16 %v55
    %v70 = vunpack.c.l.b16 %v56
    %v71 = vunpack.c.l.b16 %v57
    %v72 = vpack.c.b16 %v68, %v67
    %v73 = vpack.c.b16 %v70, %v69
    %v74 = vpack.c.b16 %v71, %v71
    %vm77 = vcmask 326656
    %v79 = vsel %vm77, %v51, 0
    %v82 = vsel %vm77, %v52, 0
    %vm84 = vcmask 1043456
    %v86 = vsel %vm84, %v74, 0
    %88 = vmatpush.bf16.msra.mxu0 0
    %89 = vmatpush.bf16.msra.mxu0 0
    %90 = vmatpush.bf16.msra.mxu0 0
    %91 = vmatpush.bf16.msra.mxu0 0
    %92 = vmatpush.bf16.msra.mxu0 0
    %93 = vmatpush.bf16.msra.mxu0 %v86
    %94 = vmatpush.bf16.msra.mxu0 %v73
    %95 = vmatpush.bf16.msra.mxu0 %v72
    %96 = vmatmul.bf16.gmra.mxu0 %v79
    %v97 = vpop.f32.mrf.mxu0
    %v98 = vadd.f32 %v60, %v97
    %v99 = vpop.f32.mrf.mxu0
    %v100 = vadd.f32 %v60, %v99
    %101 = vmatmul.bf16.gmra.mxu0 %v82
    %v102 = vpop.f32.mrf.mxu0
    %v103 = vadd.f32 %v60, %v102
    %v104 = vpop.f32.mrf.mxu0
    %v105 = vadd.f32 %v60, %v104
    %106 = vdwg.mxu0
    %vm107 = vcmask 523264
    %108 = vst.msk [vmem:[%s3] sm:$0xff] %vm107, %v98
    %109 = vst.msk [vmem:[%s3 + $0x8] sm:$0xff] %vm107, %v100
    %110 = vst.msk [vmem:[%s3 + $0x10] sm:$0xff] %vm107, %v103
    %111 = vst.msk [vmem:[%s3 + $0x18] sm:$0xff] %vm107, %v105
    // Predicated region
    $region22: #{conformer_ctc_forward.20} parent=1 // pred_check
      _
    $region23: #{conformer_ctc_forward.20} parent=1 // pred_check_branch
      %113 = sbr.rel (0) target = $region25
    $region24: #{conformer_ctc_forward.20} parent=1 // pred_region
      _
    $region25: #{conformer_ctc_forward.20} parent=1 // pred_fallthru
      _
    // Predicated region
    $region26: #{conformer_ctc_forward.20} parent=1 // pred_check
      _
    $region27: #{conformer_ctc_forward.20} parent=1 // pred_check_branch
      %115 = sbr.rel (0) target = $region29
    $region28: #{conformer_ctc_forward.20} parent=1 // pred_region
      _
    $region29: #{conformer_ctc_forward.20} parent=1 // pred_fallthru
      _
    %116 = vsyncpa [#allocation3], 1
    %117 = vsyncpa [#allocation5], 1

// kernel: conformer_ctc_forward.22
$region0: #{conformer_ctc_forward.22}
  #allocation0 [shape = 'u32[]', space=smem, size = 0x4, offset = 0x4, fixed_abs, tag = 'smem constant byte address 0x4 - core index']
  #allocation1 [shape = 'u32[72,128]{1,0:T(1,128)}', space=vmem, size = 0x9000, scoped, tag = 'internal scratch']
  %s0 = inlined_call_operand.vmem [shape: f32[32,256], index: 0, kind: input, shape index: {}]
  %s1 = inlined_call_operand.vmem [shape: bf16[256,64], index: 1, kind: input, shape index: {}]
  %s2 = inlined_call_operand.vmem [shape: f32[1,64], index: 2, kind: input, shape index: {}]
  %s3 = inlined_call_operand.vmem [shape: f32[32,64], index: 3, kind: input, shape index: {}]
  %s4 = inlined_call_operand.vmem [shape: f32[32,64], index: 4, kind: output, shape index: {}]
  %s5 = sld [smem:[#allocation0]]
  $region26: #{conformer_ctc_forward.22} parent=0
    _
  %s7 = ssub.s32 1, %s5
  %s8 = scalar_select 0, %s7, %s5
  // Predicated region
  $region2: #{conformer_ctc_forward.22} parent=0 // pred_check
    _
  $region3: #{conformer_ctc_forward.22} parent=0 // pred_check_branch
    %10 = sbr.rel (0) target = $region5
  $region4: #{conformer_ctc_forward.22} parent=0 // pred_region
    _
  $region5: #{conformer_ctc_forward.22} parent=0 // pred_fallthru
    _
  // Predicated region
  $region6: #{conformer_ctc_forward.22} parent=0 // pred_check
    _
  $region7: #{conformer_ctc_forward.22} parent=0 // pred_check_branch
    %12 = sbr.rel (0) target = $region9
  $region8: #{conformer_ctc_forward.22} parent=0 // pred_region
    _
  $region9: #{conformer_ctc_forward.22} parent=0 // pred_fallthru
    _
  // Predicated region
  $region10: #{conformer_ctc_forward.22} parent=0 // pred_check
    _
  $region11: #{conformer_ctc_forward.22} parent=0 // pred_check_branch
    %14 = sbr.rel (0) target = $region13
  $region12: #{conformer_ctc_forward.22} parent=0 // pred_region
    _
  $region13: #{conformer_ctc_forward.22} parent=0 // pred_fallthru
    _
  // Predicated region
  $region14: #{conformer_ctc_forward.22} parent=0 // pred_check
    _
  $region15: #{conformer_ctc_forward.22} parent=0 // pred_check_branch
    %16 = sbr.rel (0) target = $region17
  $region16: #{conformer_ctc_forward.22} parent=0 // pred_region
    _
  $region17: #{conformer_ctc_forward.22} parent=0 // pred_fallthru
    _
  %v17 = vld [vmem:[%s0] sm:$0xff]
  %v18 = vld [vmem:[%s0 + $0x8] sm:$0xff]
  %v19 = vld [vmem:[%s0 + $0x10] sm:$0xff]
  %v20 = vld [vmem:[%s0 + $0x18] sm:$0xff]
  %v21 = vld [vmem:[%s0 + $0x20] sm:$0xff]
  %v22 = vld [vmem:[%s0 + $0x28] sm:$0xff]
  %v23 = vld [vmem:[%s0 + $0x30] sm:$0xff]
  %v24 = vld [vmem:[%s0 + $0x38] sm:$0xff]
  %v25 = vpack.c.bf16 %v19, %v17
  %v26 = vpack.c.bf16 %v20, %v18
  %v27 = vpack.c.bf16 %v23, %v21
  %v28 = vpack.c.bf16 %v24, %v22
  %v29 = vld [vmem:[%s1] sm:$0xf]
  %v30 = vld [vmem:[%s1 + $0x4] sm:$0xf]
  %v31 = vld [vmem:[%s1 + $0x8] sm:$0xf]
  %v32 = vld [vmem:[%s1 + $0xc] sm:$0xf]
  %v33 = vld [vmem:[%s1 + $0x10] sm:$0xf]
  %v34 = vld [vmem:[%s1 + $0x14] sm:$0xf]
  %v35 = vld [vmem:[%s1 + $0x18] sm:$0xf]
  %v36 = vld [vmem:[%s1 + $0x1c] sm:$0xf]
  %v37 = vld [vmem:[%s1 + $0x20] sm:$0xf]
  %v38 = vld [vmem:[%s1 + $0x24] sm:$0xf]
  %v39 = vld [vmem:[%s1 + $0x28] sm:$0xf]
  %v40 = vld [vmem:[%s1 + $0x2c] sm:$0xf]
  %v41 = vld [vmem:[%s1 + $0x30] sm:$0xf]
  %v42 = vld [vmem:[%s1 + $0x34] sm:$0xf]
  %v43 = vld [vmem:[%s1 + $0x38] sm:$0xf]
  %v44 = vld [vmem:[%s1 + $0x3c] sm:$0xf]
  %v45 = vld [vmem:[%s1 + $0x40] sm:$0xf]
  %v46 = vld [vmem:[%s1 + $0x44] sm:$0xf]
  %v47 = vld [vmem:[%s1 + $0x48] sm:$0xf]
  %v48 = vld [vmem:[%s1 + $0x4c] sm:$0xf]
  %v49 = vld [vmem:[%s1 + $0x50] sm:$0xf]
  %v50 = vld [vmem:[%s1 + $0x54] sm:$0xf]
  %v51 = vld [vmem:[%s1 + $0x58] sm:$0xf]
  %v52 = vld [vmem:[%s1 + $0x5c] sm:$0xf]
  %v53 = vld [vmem:[%s1 + $0x60] sm:$0xf]
  %v54 = vld [vmem:[%s1 + $0x64] sm:$0xf]
  %v55 = vld [vmem:[%s1 + $0x68] sm:$0xf]
  %v56 = vld [vmem:[%s1 + $0x6c] sm:$0xf]
  %v57 = vld [vmem:[%s1 + $0x70] sm:$0xf]
  %v58 = vld [vmem:[%s1 + $0x74] sm:$0xf]
  %v59 = vld [vmem:[%s1 + $0x78] sm:$0xf]
  %v60 = vld [vmem:[%s1 + $0x7c] sm:$0xf]
  %v61 = vld [vmem:[%s2] sm:$0x1]
  %v63 = vperm.slane %v61, 0
  %v97 = vunpack.c.l.b16 %v29
  %v98 = vunpack.c.l.b16 %v30
  %v99 = vunpack.c.l.b16 %v31
  %v100 = vunpack.c.l.b16 %v32
  %v101 = vunpack.c.l.b16 %v33
  %v102 = vunpack.c.l.b16 %v34
  %v103 = vunpack.c.l.b16 %v35
  %v104 = vunpack.c.l.b16 %v36
  %v105 = vunpack.c.l.b16 %v37
  %v106 = vunpack.c.l.b16 %v38
  %v107 = vunpack.c.l.b16 %v39
  %v108 = vunpack.c.l.b16 %v40
  %v109 = vunpack.c.l.b16 %v41
  %v110 = vunpack.c.l.b16 %v42
  %v111 = vunpack.c.l.b16 %v43
  %v112 = vunpack.c.l.b16 %v44
  %v113 = vunpack.c.l.b16 %v45
  %v114 = vunpack.c.l.b16 %v46
  %v115 = vunpack.c.l.b16 %v47
  %v116 = vunpack.c.l.b16 %v48
  %v117 = vunpack.c.l.b16 %v49
  %v118 = vunpack.c.l.b16 %v50
  %v119 = vunpack.c.l.b16 %v51
  %v120 = vunpack.c.l.b16 %v52
  %v121 = vunpack.c.l.b16 %v53
  %v122 = vunpack.c.l.b16 %v54
  %v123 = vunpack.c.l.b16 %v55
  %v124 = vunpack.c.l.b16 %v56
  %v125 = vunpack.c.l.b16 %v57
  %v126 = vunpack.c.l.b16 %v58
  %v127 = vunpack.c.l.b16 %v59
  %v128 = vunpack.c.l.b16 %v60
  %v129 = vpack.c.b16 %v98, %v97
  %v130 = vpack.c.b16 %v100, %v99
  %v131 = vpack.c.b16 %v102, %v101
  %v132 = vpack.c.b16 %v104, %v103
  %v133 = vpack.c.b16 %v106, %v105
  %v134 = vpack.c.b16 %v108, %v107
  %v135 = vpack.c.b16 %v110, %v109
  %v136 = vpack.c.b16 %v112, %v111
  %v137 = vpack.c.b16 %v114, %v113
  %v138 = vpack.c.b16 %v116, %v115
  %v139 = vpack.c.b16 %v118, %v117
  %v140 = vpack.c.b16 %v120, %v119
  %v141 = vpack.c.b16 %v122, %v121
  %v142 = vpack.c.b16 %v124, %v123
  %v143 = vpack.c.b16 %v126, %v125
  %v144 = vpack.c.b16 %v128, %v127
  %161 = vmatpush.bf16.msra.mxu0 %v136
  %162 = vmatpush.bf16.msra.mxu0 %v135
  %163 = vmatpush.bf16.msra.mxu0 %v134
  %164 = vmatpush.bf16.msra.mxu0 %v133
  %165 = vmatpush.bf16.msra.mxu0 %v132
  %166 = vmatpush.bf16.msra.mxu0 %v131
  %167 = vmatpush.bf16.msra.mxu0 %v130
  %168 = vmatpush.bf16.msra.mxu0 %v129
  %169 = vmatmul.bf16.gmra.mxu0 %v25
  %v170 = vpop.f32.mrf.mxu0
  %v171 = vadd.f32 %v63, %v170
  %v172 = vpop.f32.mrf.mxu0
  %v173 = vadd.f32 %v63, %v172
  %174 = vmatmul.bf16.gmra.mxu0 %v27
  %v175 = vpop.f32.mrf.mxu0
  %v176 = vadd.f32 %v63, %v175
  %v177 = vpop.f32.mrf.mxu0
  %v178 = vadd.f32 %v63, %v177
  %179 = vdwg.mxu0
  %180 = vmatpush.bf16.msra.mxu0 %v144
  %181 = vmatpush.bf16.msra.mxu0 %v143
  %182 = vmatpush.bf16.msra.mxu0 %v142
  %183 = vmatpush.bf16.msra.mxu0 %v141
  %184 = vmatpush.bf16.msra.mxu0 %v140
  %185 = vmatpush.bf16.msra.mxu0 %v139
  %186 = vmatpush.bf16.msra.mxu0 %v138
  %187 = vmatpush.bf16.msra.mxu0 %v137
  %188 = vmatmul.bf16.gmra.mxu0 %v26
  %v189 = vpop.f32.mrf.mxu0
  %v190 = vadd.f32 %v171, %v189
  %v191 = vpop.f32.mrf.mxu0
  %v192 = vadd.f32 %v173, %v191
  %193 = vmatmul.bf16.gmra.mxu0 %v28
  %v194 = vpop.f32.mrf.mxu0
  %v195 = vadd.f32 %v176, %v194
  %v196 = vpop.f32.mrf.mxu0
  %v197 = vadd.f32 %v178, %v196
  %198 = vdwg.mxu0
  %v199 = vld [vmem:[%s3] sm:$0xff]
  %v200 = vld [vmem:[%s3 + $0x8] sm:$0xff]
  %v201 = vld [vmem:[%s3 + $0x10] sm:$0xff]
  %v202 = vld [vmem:[%s3 + $0x18] sm:$0xff]
  %v203 = vmul.f32 %v190, 0.5
  %v204 = vmul.f32 %v192, 0.5
  %v205 = vmul.f32 %v195, 0.5
  %v206 = vmul.f32 %v197, 0.5
  %v207 = vadd.f32 %v199, %v203
  %v208 = vadd.f32 %v200, %v204
  %v209 = vadd.f32 %v201, %v205
  %v210 = vadd.f32 %v202, %v206
  %vm211 = vcmask 523264
  %212 = vst.msk [vmem:[%s4] sm:$0xff] %vm211, %v207
  %213 = vst.msk [vmem:[%s4 + $0x8] sm:$0xff] %vm211, %v208
  %214 = vst.msk [vmem:[%s4 + $0x10] sm:$0xff] %vm211, %v209
  %215 = vst.msk [vmem:[%s4 + $0x18] sm:$0xff] %vm211, %v210
  // Predicated region
  $region18: #{conformer_ctc_forward.22} parent=0 // pred_check
    _
  $region19: #{conformer_ctc_forward.22} parent=0 // pred_check_branch
    %217 = sbr.rel (0) target = $region21
  $region20: #{conformer_ctc_forward.22} parent=0 // pred_region
    _
  $region21: #{conformer_ctc_forward.22} parent=0 // pred_fallthru
    _
  // Predicated region
  $region22: #{conformer_ctc_forward.22} parent=0 // pred_check
    _
  $region23: #{conformer_ctc_forward.22} parent=0 // pred_check_branch
    %219 = sbr.rel (0) target = $region25
  $region24: #{conformer_ctc_forward.22} parent=0 // pred_region
    _
  $region25: #{conformer_ctc_forward.22} parent=0 // pred_fallthru
    _

// kernel: conformer_ctc_forward.23
$region0: #{conformer_ctc_forward.23}
  #allocation0 [shape = 'u32[]', space=smem, size = 0x4, offset = 0x4, fixed_abs, tag = 'smem constant byte address 0x4 - core index']
  #allocation1 [shape = 'u32[72,128]{1,0:T(1,128)}', space=vmem, size = 0x9000, scoped, tag = 'internal scratch']
  %s0 = inlined_call_operand.vmem [shape: f32[32,64], index: 0, kind: input, shape index: {}]
  %s1 = inlined_call_operand.vmem [shape: bf16[64,192], index: 1, kind: input, shape index: {}]
  %s2 = inlined_call_operand.vmem [shape: f32[1,192], index: 2, kind: input, shape index: {}]
  %s3 = inlined_call_operand.vmem [shape: f32[1,64], index: 3, kind: input, shape index: {}]
  %s4 = inlined_call_operand.vmem [shape: f32[1,64], index: 4, kind: input, shape index: {}]
  %s5 = inlined_call_operand.vmem [shape: bf16[32,192], index: 5, kind: output, shape index: {}]
  %s6 = sld [smem:[#allocation0]]
  $region30: #{conformer_ctc_forward.23} parent=0
    _
  %s8 = ssub.s32 1, %s6
  %s9 = scalar_select 0, %s8, %s6
  // Predicated region
  $region2: #{conformer_ctc_forward.23} parent=0 // pred_check
    _
  $region3: #{conformer_ctc_forward.23} parent=0 // pred_check_branch
    %11 = sbr.rel (0) target = $region5
  $region4: #{conformer_ctc_forward.23} parent=0 // pred_region
    _
  $region5: #{conformer_ctc_forward.23} parent=0 // pred_fallthru
    _
  // Predicated region
  $region6: #{conformer_ctc_forward.23} parent=0 // pred_check
    _
  $region7: #{conformer_ctc_forward.23} parent=0 // pred_check_branch
    %13 = sbr.rel (0) target = $region9
  $region8: #{conformer_ctc_forward.23} parent=0 // pred_region
    _
  $region9: #{conformer_ctc_forward.23} parent=0 // pred_fallthru
    _
  // Predicated region
  $region10: #{conformer_ctc_forward.23} parent=0 // pred_check
    _
  $region11: #{conformer_ctc_forward.23} parent=0 // pred_check_branch
    %15 = sbr.rel (0) target = $region13
  $region12: #{conformer_ctc_forward.23} parent=0 // pred_region
    _
  $region13: #{conformer_ctc_forward.23} parent=0 // pred_fallthru
    _
  // Predicated region
  $region14: #{conformer_ctc_forward.23} parent=0 // pred_check
    _
  $region15: #{conformer_ctc_forward.23} parent=0 // pred_check_branch
    %17 = sbr.rel (0) target = $region17
  $region16: #{conformer_ctc_forward.23} parent=0 // pred_region
    _
  $region17: #{conformer_ctc_forward.23} parent=0 // pred_fallthru
    _
  // Predicated region
  $region18: #{conformer_ctc_forward.23} parent=0 // pred_check
    _
  $region19: #{conformer_ctc_forward.23} parent=0 // pred_check_branch
    %19 = sbr.rel (0) target = $region21
  $region20: #{conformer_ctc_forward.23} parent=0 // pred_region
    _
  $region21: #{conformer_ctc_forward.23} parent=0 // pred_fallthru
    _
  %v21 = vld [vmem:[%s0] sm:$0xff]
  %v22 = vld [vmem:[%s0 + $0x8] sm:$0xff]
  %v23 = vld [vmem:[%s0 + $0x10] sm:$0xff]
  %v24 = vld [vmem:[%s0 + $0x18] sm:$0xff]
  %vm25 = vcmask 523264
  %v26 = vsel %vm25, %v21, 0.0
  %27 = vadd.xlane.f32.xlu0 %v26
  %v28 = vpop.xlane.xlu0 %27
  %v29 = vsel %vm25, %v22, 0.0
  %30 = vadd.xlane.f32.xlu0 %v29
  %v31 = vpop.xlane.xlu0 %30
  %v32 = vsel %vm25, %v23, 0.0
  %33 = vadd.xlane.f32.xlu0 %v32
  %v34 = vpop.xlane.xlu0 %33
  %v35 = vsel %vm25, %v24, 0.0
  %36 = vadd.xlane.f32.xlu0 %v35
  %v37 = vpop.xlane.xlu0 %36
  %v38 = vrcp.pop 64.0
  %v39 = vmul.f32 64.0, %v38
  %v40 = vsub.f32 1.0, %v39
  %v41 = vmul.f32 %v38, %v40
  %v42 = vadd.f32 %v38, %v41
  %vm43 = vweird.f32 %v38
  %v44 = vsel %vm43, %v38, %v42
  %v45 = vmul.f32 %v28, %v44
  %v46 = vmul.f32 %v31, %v44
  %v47 = vmul.f32 %v34, %v44
  %v48 = vmul.f32 %v37, %v44
  %v49 = vsub.f32 %v21, %v45
  %v50 = vsub.f32 %v22, %v46
  %v51 = vsub.f32 %v23, %v47
  %v52 = vsub.f32 %v24, %v48
  %v53 = vmul.f32 %v49, %v49
  %v54 = vmul.f32 %v50, %v50
  %v55 = vmul.f32 %v51, %v51
  %v56 = vmul.f32 %v52, %v52
  %v57 = vsel %vm25, %v53, 0.0
  %58 = vadd.xlane.f32.xlu0 %v57
  %v59 = vpop.xlane.xlu0 %58
  %v60 = vsel %vm25, %v54, 0.0
  %61 = vadd.xlane.f32.xlu0 %v60
  %v62 = vpop.xlane.xlu0 %61
  %v63 = vsel %vm25, %v55, 0.0
  %64 = vadd.xlane.f32.xlu0 %v63
  %v65 = vpop.xlane.xlu0 %64
  %v66 = vsel %vm25, %v56, 0.0
  %67 = vadd.xlane.f32.xlu0 %v66
  %v68 = vpop.xlane.xlu0 %67
  %v69 = vmul.f32 %v59, %v44
  %v70 = vmul.f32 %v62, %v44
  %v71 = vmul.f32 %v65, %v44
  %v72 = vmul.f32 %v68, %v44
  %v73 = vadd.f32 %v69, 1e-05
  %v74 = vadd.f32 %v70, 1e-05
  %v75 = vadd.f32 %v71, 1e-05
  %v76 = vadd.f32 %v72, 1e-05
  %v77 = vrsqrt.pop %v73
  %v78 = vmul.f32 %v77, %v73
  %v79 = vmul.f32 %v78, %v77
  %v80 = vmul.f32 0.5, %v79
  %v81 = vsub.f32 1.5, %v80
  %v82 = vmul.f32 %v77, %v81
  %vm83 = vweird.f32 %v73
  %vm84 = vweird.f32 %v77
  %vm85 = vmor %vm83, %vm84
  %v86 = vsel %vm85, %v77, %v82
  %v87 = vrsqrt.pop %v74
  %v88 = vmul.f32 %v87, %v74
  %v89 = vmul.f32 %v88, %v87
  %v90 = vmul.f32 0.5, %v89
  %v91 = vsub.f32 1.5, %v90
  %v92 = vmul.f32 %v87, %v91
  %vm93 = vweird.f32 %v74
  %vm94 = vweird.f32 %v87
  %vm95 = vmor %vm93, %vm94
  %v96 = vsel %vm95, %v87, %v92
  %v97 = vrsqrt.pop %v75
  %v98 = vmul.f32 %v97, %v75
  %v99 = vmul.f32 %v98, %v97
  %v100 = vmul.f32 0.5, %v99
  %v101 = vsub.f32 1.5, %v100
  %v102 = vmul.f32 %v97, %v101
  %vm103 = vweird.f32 %v75
  %vm104 = vweird.f32 %v97
  %vm105 = vmor %vm103, %vm104
  %v106 = vsel %vm105, %v97, %v102
  %v107 = vrsqrt.pop %v76
  %v108 = vmul.f32 %v107, %v76
  %v109 = vmul.f32 %v108, %v107
  %v110 = vmul.f32 0.5, %v109
  %v111 = vsub.f32 1.5, %v110
  %v112 = vmul.f32 %v107, %v111
  %vm113 = vweird.f32 %v76
  %vm114 = vweird.f32 %v107
  %vm115 = vmor %vm113, %vm114
  %v116 = vsel %vm115, %v107, %v112
  %v117 = vmul.f32 %v49, %v86
  %v118 = vmul.f32 %v50, %v96
  %v119 = vmul.f32 %v51, %v106
  %v120 = vmul.f32 %v52, %v116
  %v121 = vld [vmem:[%s3] sm:$0x1]
  %v123 = vperm.slane %v121, 0
  %v125 = vmul.f32 %v117, %v123
  %v126 = vmul.f32 %v118, %v123
  %v127 = vmul.f32 %v119, %v123
  %v128 = vmul.f32 %v120, %v123
  %v129 = vld [vmem:[%s4] sm:$0x1]
  %v131 = vperm.slane %v129, 0
  %v133 = vadd.f32 %v125, %v131
  %v134 = vadd.f32 %v126, %v131
  %v135 = vadd.f32 %v127, %v131
  %v136 = vadd.f32 %v128, %v131
  %v137 = vpack.c.bf16 %v134, %v133
  %v138 = vpack.c.bf16 %v136, %v135
  %v139 = vld [vmem:[%s1] sm:$0xff]
  %v140 = vld [vmem:[%s1 + $0x8] sm:$0xff]
  %v141 = vld [vmem:[%s1 + $0x10] sm:$0xff]
  %v142 = vld [vmem:[%s1 + $0x18] sm:$0xff]
  %v143 = vld [vmem:[%s1 + $0x20] sm:$0xff]
  %v144 = vld [vmem:[%s1 + $0x28] sm:$0xff]
  %v145 = vld [vmem:[%s1 + $0x30] sm:$0xff]
  %v146 = vld [vmem:[%s1 + $0x38] sm:$0xff]
  %v147 = vld [vmem:[%s2] sm:$0x3]
  %v149 = vperm.slane %v147, 0
  %v150 = vperm.slane %v147, 1
  %v161 = vunpack.c.l.b16 %v139
  %v162 = vunpack.c.h.b16 %v139
  %v163 = vunpack.c.l.b16 %v140
  %v164 = vunpack.c.h.b16 %v140
  %v165 = vunpack.c.l.b16 %v141
  %v166 = vunpack.c.h.b16 %v141
  %v167 = vunpack.c.l.b16 %v142
  %v168 = vunpack.c.h.b16 %v142
  %v169 = vunpack.c.l.b16 %v143
  %v170 = vunpack.c.h.b16 %v143
  %v171 = vunpack.c.l.b16 %v144
  %v172 = vunpack.c.h.b16 %v144
  %v173 = vunpack.c.l.b16 %v145
  %v174 = vunpack.c.h.b16 %v145
  %v175 = vunpack.c.l.b16 %v146
  %v176 = vunpack.c.h.b16 %v146
  %v177 = vpack.c.b16 %v163, %v161
  %v178 = vpack.c.b16 %v164, %v162
  %v179 = vpack.c.b16 %v167, %v165
  %v180 = vpack.c.b16 %v168, %v166
  %v181 = vpack.c.b16 %v171, %v169
  %v182 = vpack.c.b16 %v172, %v170
  %v183 = vpack.c.b16 %v175, %v173
  %v184 = vpack.c.b16 %v176, %v174
  %v194 = vsel %vm25, %v137, 0
  %v197 = vsel %vm25, %v138, 0
  %199 = vmatpush.bf16.msra.mxu0 0
  %200 = vmatpush.bf16.msra.mxu0 0
  %201 = vmatpush.bf16.msra.mxu0 0
  %202 = vmatpush.bf16.msra.mxu0 0
  %203 = vmatpush.bf16.msra.mxu0 %v183
  %204 = vmatpush.bf16.msra.mxu0 %v181
  %205 = vmatpush.bf16.msra.mxu0 %v179
  %206 = vmatpush.bf16.msra.mxu0 %v177
  %207 = vmatmul.bf16.gmra.mxu0 %v194
  %v208 = vpop.f32.mrf.mxu0
  %v209 = vadd.f32 %v149, %v208
  %v210 = vpop.f32.mrf.mxu0
  %v211 = vadd.f32 %v149, %v210
  %212 = vmatmul.bf16.gmra.mxu0 %v197
  %v213 = vpop.f32.mrf.mxu0
  %v214 = vadd.f32 %v149, %v213
  %v215 = vpop.f32.mrf.mxu0
  %v216 = vadd.f32 %v149, %v215
  %217 = vdwg.mxu0
  %218 = vmatpush.bf16.msra.mxu0 0
  %219 = vmatpush.bf16.msra.mxu0 0
  %220 = vmatpush.bf16.msra.mxu0 0
  %221 = vmatpush.bf16.msra.mxu0 0
  %222 = vmatpush.bf16.msra.mxu0 %v184
  %223 = vmatpush.bf16.msra.mxu0 %v182
  %224 = vmatpush.bf16.msra.mxu0 %v180
  %225 = vmatpush.bf16.msra.mxu0 %v178
  %226 = vmatmul.bf16.gmra.mxu0 %v194
  %v227 = vpop.f32.mrf.mxu0
  %v228 = vadd.f32 %v150, %v227
  %v229 = vpop.f32.mrf.mxu0
  %v230 = vadd.f32 %v150, %v229
  %231 = vmatmul.bf16.gmra.mxu0 %v197
  %v232 = vpop.f32.mrf.mxu0
  %v233 = vadd.f32 %v150, %v232
  %v234 = vpop.f32.mrf.mxu0
  %v235 = vadd.f32 %v150, %v234
  %236 = vdwg.mxu0
  %v237 = vpack.c.bf16 %v228, %v209
  %v238 = vpack.c.bf16 %v230, %v211
  %v239 = vpack.c.bf16 %v233, %v214
  %v240 = vpack.c.bf16 %v235, %v216
  %vm241 = vcmask 1043456
  %vm242 = vcmask 523268
  %vm243 = vmor %vm242, %vm241
  %244 = vst.msk [vmem:[%s5] sm:$0xff] %vm243, %v237
  %245 = vst.msk [vmem:[%s5 + $0x8] sm:$0xff] %vm243, %v238
  %246 = vst.msk [vmem:[%s5 + $0x10] sm:$0xff] %vm243, %v239
  %247 = vst.msk [vmem:[%s5 + $0x18] sm:$0xff] %vm243, %v240
  // Predicated region
  $region22: #{conformer_ctc_forward.23} parent=0 // pred_check
    _
  $region23: #{conformer_ctc_forward.23} parent=0 // pred_check_branch
    %249 = sbr.rel (0) target = $region25
  $region24: #{conformer_ctc_forward.23} parent=0 // pred_region
    _
  $region25: #{conformer_ctc_forward.23} parent=0 // pred_fallthru
    _
  // Predicated region
  $region26: #{conformer_ctc_forward.23} parent=0 // pred_check
    _
  $region27: #{conformer_ctc_forward.23} parent=0 // pred_check_branch
    %251 = sbr.rel (0) target = $region29
  $region28: #{conformer_ctc_forward.23} parent=0 // pred_region
    _
  $region29: #{conformer_ctc_forward.23} parent=0 // pred_fallthru
    _

// kernel: conformer_ctc_forward.25
$region0: #{conformer_ctc_forward.25}
  #allocation0 [shape = 'u32[]', space=smem, size = 0x4, offset = 0x4, fixed_abs, tag = 'smem constant byte address 0x4 - core index']
  #allocation1 [shape = 'u32[72,128]{1,0:T(1,128)}', space=vmem, size = 0x9000, scoped, tag = 'internal scratch']
  %s0 = inlined_call_operand.vmem [shape: f32[32,64], index: 0, kind: input, shape index: {}]
  %s1 = inlined_call_operand.vmem [shape: bf16[64,64], index: 1, kind: input, shape index: {}]
  %s2 = inlined_call_operand.vmem [shape: f32[1,64], index: 2, kind: input, shape index: {}]
  %s3 = inlined_call_operand.vmem [shape: f32[32,64], index: 3, kind: input, shape index: {}]
  %s4 = inlined_call_operand.vmem [shape: f32[32,64], index: 4, kind: output, shape index: {}]
  %s5 = sld [smem:[#allocation0]]
  $region26: #{conformer_ctc_forward.25} parent=0
    _
  %s7 = ssub.s32 1, %s5
  %s8 = scalar_select 0, %s7, %s5
  // Predicated region
  $region2: #{conformer_ctc_forward.25} parent=0 // pred_check
    _
  $region3: #{conformer_ctc_forward.25} parent=0 // pred_check_branch
    %10 = sbr.rel (0) target = $region5
  $region4: #{conformer_ctc_forward.25} parent=0 // pred_region
    _
  $region5: #{conformer_ctc_forward.25} parent=0 // pred_fallthru
    _
  // Predicated region
  $region6: #{conformer_ctc_forward.25} parent=0 // pred_check
    _
  $region7: #{conformer_ctc_forward.25} parent=0 // pred_check_branch
    %12 = sbr.rel (0) target = $region9
  $region8: #{conformer_ctc_forward.25} parent=0 // pred_region
    _
  $region9: #{conformer_ctc_forward.25} parent=0 // pred_fallthru
    _
  // Predicated region
  $region10: #{conformer_ctc_forward.25} parent=0 // pred_check
    _
  $region11: #{conformer_ctc_forward.25} parent=0 // pred_check_branch
    %14 = sbr.rel (0) target = $region13
  $region12: #{conformer_ctc_forward.25} parent=0 // pred_region
    _
  $region13: #{conformer_ctc_forward.25} parent=0 // pred_fallthru
    _
  // Predicated region
  $region14: #{conformer_ctc_forward.25} parent=0 // pred_check
    _
  $region15: #{conformer_ctc_forward.25} parent=0 // pred_check_branch
    %16 = sbr.rel (0) target = $region17
  $region16: #{conformer_ctc_forward.25} parent=0 // pred_region
    _
  $region17: #{conformer_ctc_forward.25} parent=0 // pred_fallthru
    _
  %v18 = vld [vmem:[%s0] sm:$0xff]
  %v19 = vld [vmem:[%s0 + $0x8] sm:$0xff]
  %v20 = vld [vmem:[%s0 + $0x10] sm:$0xff]
  %v21 = vld [vmem:[%s0 + $0x18] sm:$0xff]
  %v22 = vpack.c.bf16 %v19, %v18
  %v23 = vpack.c.bf16 %v21, %v20
  %v24 = vld [vmem:[%s1] sm:$0xf]
  %v25 = vld [vmem:[%s1 + $0x4] sm:$0xf]
  %v26 = vld [vmem:[%s1 + $0x8] sm:$0xf]
  %v27 = vld [vmem:[%s1 + $0xc] sm:$0xf]
  %v28 = vld [vmem:[%s1 + $0x10] sm:$0xf]
  %v29 = vld [vmem:[%s1 + $0x14] sm:$0xf]
  %v30 = vld [vmem:[%s1 + $0x18] sm:$0xf]
  %v31 = vld [vmem:[%s1 + $0x1c] sm:$0xf]
  %v32 = vld [vmem:[%s2] sm:$0x1]
  %v34 = vperm.slane %v32, 0
  %v44 = vunpack.c.l.b16 %v24
  %v45 = vunpack.c.l.b16 %v25
  %v46 = vunpack.c.l.b16 %v26
  %v47 = vunpack.c.l.b16 %v27
  %v48 = vunpack.c.l.b16 %v28
  %v49 = vunpack.c.l.b16 %v29
  %v50 = vunpack.c.l.b16 %v30
  %v51 = vunpack.c.l.b16 %v31
  %v52 = vpack.c.b16 %v45, %v44
  %v53 = vpack.c.b16 %v47, %v46
  %v54 = vpack.c.b16 %v49, %v48
  %v55 = vpack.c.b16 %v51, %v50
  %vm60 = vcmask 523264
  %v62 = vsel %vm60, %v22, 0
  %v65 = vsel %vm60, %v23, 0
  %67 = vmatpush.bf16.msra.mxu0 0
  %68 = vmatpush.bf16.msra.mxu0 0
  %69 = vmatpush.bf16.msra.mxu0 0
  %70 = vmatpush.bf16.msra.mxu0 0
  %71 = vmatpush.bf16.msra.mxu0 %v55
  %72 = vmatpush.bf16.msra.mxu0 %v54
  %73 = vmatpush.bf16.msra.mxu0 %v53
  %74 = vmatpush.bf16.msra.mxu0 %v52
  %75 = vmatmul.bf16.gmra.mxu0 %v62
  %v76 = vpop.f32.mrf.mxu0
  %v77 = vadd.f32 %v34, %v76
  %v78 = vpop.f32.mrf.mxu0
  %v79 = vadd.f32 %v34, %v78
  %80 = vmatmul.bf16.gmra.mxu0 %v65
  %v81 = vpop.f32.mrf.mxu0
  %v82 = vadd.f32 %v34, %v81
  %v83 = vpop.f32.mrf.mxu0
  %v84 = vadd.f32 %v34, %v83
  %85 = vdwg.mxu0
  %v86 = vld [vmem:[%s3] sm:$0xff]
  %v87 = vld [vmem:[%s3 + $0x8] sm:$0xff]
  %v88 = vld [vmem:[%s3 + $0x10] sm:$0xff]
  %v89 = vld [vmem:[%s3 + $0x18] sm:$0xff]
  %v90 = vadd.f32 %v86, %v77
  %v91 = vadd.f32 %v87, %v79
  %v92 = vadd.f32 %v88, %v82
  %v93 = vadd.f32 %v89, %v84
  %94 = vst.msk [vmem:[%s4] sm:$0xff] %vm60, %v90
  %95 = vst.msk [vmem:[%s4 + $0x8] sm:$0xff] %vm60, %v91
  %96 = vst.msk [vmem:[%s4 + $0x10] sm:$0xff] %vm60, %v92
  %97 = vst.msk [vmem:[%s4 + $0x18] sm:$0xff] %vm60, %v93
  // Predicated region
  $region18: #{conformer_ctc_forward.25} parent=0 // pred_check
    _
  $region19: #{conformer_ctc_forward.25} parent=0 // pred_check_branch
    %99 = sbr.rel (0) target = $region21
  $region20: #{conformer_ctc_forward.25} parent=0 // pred_region
    _
  $region21: #{conformer_ctc_forward.25} parent=0 // pred_fallthru
    _
  // Predicated region
  $region22: #{conformer_ctc_forward.25} parent=0 // pred_check
    _
  $region23: #{conformer_ctc_forward.25} parent=0 // pred_check_branch
    %101 = sbr.rel (0) target = $region25
  $region24: #{conformer_ctc_forward.25} parent=0 // pred_region
    _
  $region25: #{conformer_ctc_forward.25} parent=0 // pred_fallthru
    _

// kernel: conformer_ctc_forward.26
$region0: #{conformer_ctc_forward.26}
  #allocation0 [shape = 'u32[]', space=smem, size = 0x4, offset = 0x4, fixed_abs, tag = 'smem constant byte address 0x4 - core index']
  #allocation1 [shape = 'u32[72,128]{1,0:T(1,128)}', space=vmem, size = 0x9000, scoped, tag = 'internal scratch']
  %s0 = inlined_call_operand.vmem [shape: f32[32,64], index: 0, kind: input, shape index: {}]
  %s1 = inlined_call_operand.vmem [shape: bf16[64,256], index: 1, kind: input, shape index: {}]
  %s2 = inlined_call_operand.vmem [shape: f32[1,256], index: 2, kind: input, shape index: {}]
  %s3 = inlined_call_operand.vmem [shape: f32[1,64], index: 3, kind: input, shape index: {}]
  %s4 = inlined_call_operand.vmem [shape: f32[1,64], index: 4, kind: input, shape index: {}]
  %s5 = inlined_call_operand.vmem [shape: bf16[32,128], index: 5, kind: output, shape index: {}]
  %s6 = sld [smem:[#allocation0]]
  $region30: #{conformer_ctc_forward.26} parent=0
    _
  %s8 = ssub.s32 1, %s6
  %s9 = scalar_select 0, %s8, %s6
  // Predicated region
  $region2: #{conformer_ctc_forward.26} parent=0 // pred_check
    _
  $region3: #{conformer_ctc_forward.26} parent=0 // pred_check_branch
    %11 = sbr.rel (0) target = $region5
  $region4: #{conformer_ctc_forward.26} parent=0 // pred_region
    _
  $region5: #{conformer_ctc_forward.26} parent=0 // pred_fallthru
    _
  // Predicated region
  $region6: #{conformer_ctc_forward.26} parent=0 // pred_check
    _
  $region7: #{conformer_ctc_forward.26} parent=0 // pred_check_branch
    %13 = sbr.rel (0) target = $region9
  $region8: #{conformer_ctc_forward.26} parent=0 // pred_region
    _
  $region9: #{conformer_ctc_forward.26} parent=0 // pred_fallthru
    _
  // Predicated region
  $region10: #{conformer_ctc_forward.26} parent=0 // pred_check
    _
  $region11: #{conformer_ctc_forward.26} parent=0 // pred_check_branch
    %15 = sbr.rel (0) target = $region13
  $region12: #{conformer_ctc_forward.26} parent=0 // pred_region
    _
  $region13: #{conformer_ctc_forward.26} parent=0 // pred_fallthru
    _
  // Predicated region
  $region14: #{conformer_ctc_forward.26} parent=0 // pred_check
    _
  $region15: #{conformer_ctc_forward.26} parent=0 // pred_check_branch
    %17 = sbr.rel (0) target = $region17
  $region16: #{conformer_ctc_forward.26} parent=0 // pred_region
    _
  $region17: #{conformer_ctc_forward.26} parent=0 // pred_fallthru
    _
  // Predicated region
  $region18: #{conformer_ctc_forward.26} parent=0 // pred_check
    _
  $region19: #{conformer_ctc_forward.26} parent=0 // pred_check_branch
    %19 = sbr.rel (0) target = $region21
  $region20: #{conformer_ctc_forward.26} parent=0 // pred_region
    _
  $region21: #{conformer_ctc_forward.26} parent=0 // pred_fallthru
    _
  %v21 = vld [vmem:[%s0] sm:$0xff]
  %v22 = vld [vmem:[%s0 + $0x8] sm:$0xff]
  %v23 = vld [vmem:[%s0 + $0x10] sm:$0xff]
  %v24 = vld [vmem:[%s0 + $0x18] sm:$0xff]
  %vm25 = vcmask 523264
  %v26 = vsel %vm25, %v21, 0.0
  %27 = vadd.xlane.f32.xlu0 %v26
  %v28 = vpop.xlane.xlu0 %27
  %v29 = vsel %vm25, %v22, 0.0
  %30 = vadd.xlane.f32.xlu0 %v29
  %v31 = vpop.xlane.xlu0 %30
  %v32 = vsel %vm25, %v23, 0.0
  %33 = vadd.xlane.f32.xlu0 %v32
  %v34 = vpop.xlane.xlu0 %33
  %v35 = vsel %vm25, %v24, 0.0
  %36 = vadd.xlane.f32.xlu0 %v35
  %v37 = vpop.xlane.xlu0 %36
  %v38 = vrcp.pop 64.0
  %v39 = vmul.f32 64.0, %v38
  %v40 = vsub.f32 1.0, %v39
  %v41 = vmul.f32 %v38, %v40
  %v42 = vadd.f32 %v38, %v41
  %vm43 = vweird.f32 %v38
  %v44 = vsel %vm43, %v38, %v42
  %v45 = vmul.f32 %v28, %v44
  %v46 = vmul.f32 %v31, %v44
  %v47 = vmul.f32 %v34, %v44
  %v48 = vmul.f32 %v37, %v44
  %v49 = vsub.f32 %v21, %v45
  %v50 = vsub.f32 %v22, %v46
  %v51 = vsub.f32 %v23, %v47
  %v52 = vsub.f32 %v24, %v48
  %v53 = vmul.f32 %v49, %v49
  %v54 = vmul.f32 %v50, %v50
  %v55 = vmul.f32 %v51, %v51
  %v56 = vmul.f32 %v52, %v52
  %v57 = vsel %vm25, %v53, 0.0
  %58 = vadd.xlane.f32.xlu0 %v57
  %v59 = vpop.xlane.xlu0 %58
  %v60 = vsel %vm25, %v54, 0.0
  %61 = vadd.xlane.f32.xlu0 %v60
  %v62 = vpop.xlane.xlu0 %61
  %v63 = vsel %vm25, %v55, 0.0
  %64 = vadd.xlane.f32.xlu0 %v63
  %v65 = vpop.xlane.xlu0 %64
  %v66 = vsel %vm25, %v56, 0.0
  %67 = vadd.xlane.f32.xlu0 %v66
  %v68 = vpop.xlane.xlu0 %67
  %v69 = vmul.f32 %v59, %v44
  %v70 = vmul.f32 %v62, %v44
  %v71 = vmul.f32 %v65, %v44
  %v72 = vmul.f32 %v68, %v44
  %v73 = vadd.f32 %v69, 1e-05
  %v74 = vadd.f32 %v70, 1e-05
  %v75 = vadd.f32 %v71, 1e-05
  %v76 = vadd.f32 %v72, 1e-05
  %v77 = vrsqrt.pop %v73
  %v78 = vmul.f32 %v77, %v73
  %v79 = vmul.f32 %v78, %v77
  %v80 = vmul.f32 0.5, %v79
  %v81 = vsub.f32 1.5, %v80
  %v82 = vmul.f32 %v77, %v81
  %vm83 = vweird.f32 %v73
  %vm84 = vweird.f32 %v77
  %vm85 = vmor %vm83, %vm84
  %v86 = vsel %vm85, %v77, %v82
  %v87 = vrsqrt.pop %v74
  %v88 = vmul.f32 %v87, %v74
  %v89 = vmul.f32 %v88, %v87
  %v90 = vmul.f32 0.5, %v89
  %v91 = vsub.f32 1.5, %v90
  %v92 = vmul.f32 %v87, %v91
  %vm93 = vweird.f32 %v74
  %vm94 = vweird.f32 %v87
  %vm95 = vmor %vm93, %vm94
  %v96 = vsel %vm95, %v87, %v92
  %v97 = vrsqrt.pop %v75
  %v98 = vmul.f32 %v97, %v75
  %v99 = vmul.f32 %v98, %v97
  %v100 = vmul.f32 0.5, %v99
  %v101 = vsub.f32 1.5, %v100
  %v102 = vmul.f32 %v97, %v101
  %vm103 = vweird.f32 %v75
  %vm104 = vweird.f32 %v97
  %vm105 = vmor %vm103, %vm104
  %v106 = vsel %vm105, %v97, %v102
  %v107 = vrsqrt.pop %v76
  %v108 = vmul.f32 %v107, %v76
  %v109 = vmul.f32 %v108, %v107
  %v110 = vmul.f32 0.5, %v109
  %v111 = vsub.f32 1.5, %v110
  %v112 = vmul.f32 %v107, %v111
  %vm113 = vweird.f32 %v76
  %vm114 = vweird.f32 %v107
  %vm115 = vmor %vm113, %vm114
  %v116 = vsel %vm115, %v107, %v112
  %v117 = vmul.f32 %v49, %v86
  %v118 = vmul.f32 %v50, %v96
  %v119 = vmul.f32 %v51, %v106
  %v120 = vmul.f32 %v52, %v116
  %v121 = vld [vmem:[%s3] sm:$0x1]
  %v123 = vperm.slane %v121, 0
  %v125 = vmul.f32 %v117, %v123
  %v126 = vmul.f32 %v118, %v123
  %v127 = vmul.f32 %v119, %v123
  %v128 = vmul.f32 %v120, %v123
  %v129 = vld [vmem:[%s4] sm:$0x1]
  %v131 = vperm.slane %v129, 0
  %v133 = vadd.f32 %v125, %v131
  %v134 = vadd.f32 %v126, %v131
  %v135 = vadd.f32 %v127, %v131
  %v136 = vadd.f32 %v128, %v131
  %v137 = vpack.c.bf16 %v134, %v133
  %v138 = vpack.c.bf16 %v136, %v135
  %v139 = vld [vmem:[%s1] sm:$0xff]
  %v140 = vld [vmem:[%s1 + $0x8] sm:$0xff]
  %v141 = vld [vmem:[%s1 + $0x10] sm:$0xff]
  %v142 = vld [vmem:[%s1 + $0x18] sm:$0xff]
  %v143 = vld [vmem:[%s1 + $0x20] sm:$0xff]
  %v144 = vld [vmem:[%s1 + $0x28] sm:$0xff]
  %v145 = vld [vmem:[%s1 + $0x30] sm:$0xff]
  %v146 = vld [vmem:[%s1 + $0x38] sm:$0xff]
  %v147 = vld [vmem:[%s2] sm:$0x3]
  %v149 = vperm.slane %v147, 0
  %v150 = vperm.slane %v147, 1
  %v161 = vunpack.c.l.b16 %v139
  %v162 = vunpack.c.h.b16 %v139
  %v163 = vunpack.c.l.b16 %v140
  %v164 = vunpack.c.h.b16 %v140
  %v165 = vunpack.c.l.b16 %v141
  %v166 = vunpack.c.h.b16 %v141
  %v167 = vunpack.c.l.b16 %v142
  %v168 = vunpack.c.h.b16 %v142
  %v169 = vunpack.c.l.b16 %v143
  %v170 = vunpack.c.h.b16 %v143
  %v171 = vunpack.c.l.b16 %v144
  %v172 = vunpack.c.h.b16 %v144
  %v173 = vunpack.c.l.b16 %v145
  %v174 = vunpack.c.h.b16 %v145
  %v175 = vunpack.c.l.b16 %v146
  %v176 = vunpack.c.h.b16 %v146
  %v177 = vpack.c.b16 %v163, %v161
  %v178 = vpack.c.b16 %v164, %v162
  %v179 = vpack.c.b16 %v167, %v165
  %v180 = vpack.c.b16 %v168, %v166
  %v181 = vpack.c.b16 %v171, %v169
  %v182 = vpack.c.b16 %v172, %v170
  %v183 = vpack.c.b16 %v175, %v173
  %v184 = vpack.c.b16 %v176, %v174
  %v194 = vsel %vm25, %v137, 0
  %v197 = vsel %vm25, %v138, 0
  %199 = vmatpush.bf16.msra.mxu0 0
  %200 = vmatpush.bf16.msra.mxu0 0
  %201 = vmatpush.bf16.msra.mxu0 0
  %202 = vmatpush.bf16.msra.mxu0 0
  %203 = vmatpush.bf16.msra.mxu0 %v183
  %204 = vmatpush.bf16.msra.mxu0 %v181
  %205 = vmatpush.bf16.msra.mxu0 %v179
  %206 = vmatpush.bf16.msra.mxu0 %v177
  %207 = vmatmul.bf16.gmra.mxu0 %v194
  %v208 = vpop.f32.mrf.mxu0
  %v209 = vadd.f32 %v149, %v208
  %v210 = vpop.f32.mrf.mxu0
  %v211 = vadd.f32 %v149, %v210
  %212 = vmatmul.bf16.gmra.mxu0 %v197
  %v213 = vpop.f32.mrf.mxu0
  %v214 = vadd.f32 %v149, %v213
  %v215 = vpop.f32.mrf.mxu0
  %v216 = vadd.f32 %v149, %v215
  %217 = vdwg.mxu0
  %218 = vmatpush.bf16.msra.mxu0 0
  %219 = vmatpush.bf16.msra.mxu0 0
  %220 = vmatpush.bf16.msra.mxu0 0
  %221 = vmatpush.bf16.msra.mxu0 0
  %222 = vmatpush.bf16.msra.mxu0 %v184
  %223 = vmatpush.bf16.msra.mxu0 %v182
  %224 = vmatpush.bf16.msra.mxu0 %v180
  %225 = vmatpush.bf16.msra.mxu0 %v178
  %226 = vmatmul.bf16.gmra.mxu0 %v194
  %v227 = vpop.f32.mrf.mxu0
  %v228 = vadd.f32 %v150, %v227
  %v229 = vpop.f32.mrf.mxu0
  %v230 = vadd.f32 %v150, %v229
  %231 = vmatmul.bf16.gmra.mxu0 %v197
  %v232 = vpop.f32.mrf.mxu0
  %v233 = vadd.f32 %v150, %v232
  %v234 = vpop.f32.mrf.mxu0
  %v235 = vadd.f32 %v150, %v234
  %236 = vdwg.mxu0
  %v237 = vxor.u32 %v228, 2147483648
  %v238 = vxor.u32 %v230, 2147483648
  %v239 = vxor.u32 %v233, 2147483648
  %v240 = vxor.u32 %v235, 2147483648
  %v241 = vmul.f32 %v237, 1.442695
  %v242 = vpow.pop %v241
  %v243 = vmul.f32 %v238, 1.442695
  %v244 = vpow.pop %v243
  %v245 = vmul.f32 %v239, 1.442695
  %v246 = vpow.pop %v245
  %v247 = vmul.f32 %v240, 1.442695
  %v248 = vpow.pop %v247
  %v249 = vadd.f32 %v242, 1.0
  %v250 = vadd.f32 %v244, 1.0
  %v251 = vadd.f32 %v246, 1.0
  %v252 = vadd.f32 %v248, 1.0
  %v253 = vrcp.pop %v249
  %v254 = vmul.f32 %v249, %v253
  %v255 = vsub.f32 1.0, %v254
  %v256 = vmul.f32 %v253, %v255
  %v257 = vadd.f32 %v253, %v256
  %vm258 = vweird.f32 %v249
  %vm259 = vweird.f32 %v253
  %vm260 = vmor %vm258, %vm259
  %v261 = vsel %vm260, %v253, %v257
  %v262 = vand.u32 2147483647, %v249
  %vm263 = vcmp.eq.f32.partialorder %v262, 8.507059e+37
  %v264 = vand.u32 %v249, 2147483648
  %v265 = vor.u32 1.1754944e-38, %v264
  %v266 = vsel %vm263, %v265, %v261
  %v267 = vmul.f32 1.0, %v266
  %v268 = vrcp.pop %v250
  %v269 = vmul.f32 %v250, %v268
  %v270 = vsub.f32 1.0, %v269
  %v271 = vmul.f32 %v268, %v270
  %v272 = vadd.f32 %v268, %v271
  %vm273 = vweird.f32 %v250
  %vm274 = vweird.f32 %v268
  %vm275 = vmor %vm273, %vm274
  %v276 = vsel %vm275, %v268, %v272
  %v277 = vand.u32 2147483647, %v250
  %vm278 = vcmp.eq.f32.partialorder %v277, 8.507059e+37
  %v279 = vand.u32 %v250, 2147483648
  %v280 = vor.u32 1.1754944e-38, %v279
  %v281 = vsel %vm278, %v280, %v276
  %v282 = vmul.f32 1.0, %v281
  %v283 = vrcp.pop %v251
  %v284 = vmul.f32 %v251, %v283
  %v285 = vsub.f32 1.0, %v284
  %v286 = vmul.f32 %v283, %v285
  %v287 = vadd.f32 %v283, %v286
  %vm288 = vweird.f32 %v251
  %vm289 = vweird.f32 %v283
  %vm290 = vmor %vm288, %vm289
  %v291 = vsel %vm290, %v283, %v287
  %v292 = vand.u32 2147483647, %v251
  %vm293 = vcmp.eq.f32.partialorder %v292, 8.507059e+37
  %v294 = vand.u32 %v251, 2147483648
  %v295 = vor.u32 1.1754944e-38, %v294
  %v296 = vsel %vm293, %v295, %v291
  %v297 = vmul.f32 1.0, %v296
  %v298 = vrcp.pop %v252
  %v299 = vmul.f32 %v252, %v298
  %v300 = vsub.f32 1.0, %v299
  %v301 = vmul.f32 %v298, %v300
  %v302 = vadd.f32 %v298, %v301
  %vm303 = vweird.f32 %v252
  %vm304 = vweird.f32 %v298
  %vm305 = vmor %vm303, %vm304
  %v306 = vsel %vm305, %v298, %v302
  %v307 = vand.u32 2147483647, %v252
  %vm308 = vcmp.eq.f32.partialorder %v307, 8.507059e+37
  %v309 = vand.u32 %v252, 2147483648
  %v310 = vor.u32 1.1754944e-38, %v309
  %v311 = vsel %vm308, %v310, %v306
  %v312 = vmul.f32 1.0, %v311
  %v313 = vmul.f32 %v209, %v267
  %v314 = vmul.f32 %v211, %v282
  %v315 = vmul.f32 %v214, %v297
  %v316 = vmul.f32 %v216, %v312
  %v317 = vpack.c.bf16 %v313, %v313
  %v318 = vpack.c.bf16 %v314, %v314
  %v319 = vpack.c.bf16 %v315, %v315
  %v320 = vpack.c.bf16 %v316, %v316
  %321 = vst [vmem:[%s5] sm:$0xf] %v317
  %322 = vst [vmem:[%s5 + $0x4] sm:$0xf] %v318
  %323 = vst [vmem:[%s5 + $0x8] sm:$0xf] %v319
  %324 = vst [vmem:[%s5 + $0xc] sm:$0xf] %v320
  // Predicated region
  $region22: #{conformer_ctc_forward.26} parent=0 // pred_check
    _
  $region23: #{conformer_ctc_forward.26} parent=0 // pred_check_branch
    %326 = sbr.rel (0) target = $region25
  $region24: #{conformer_ctc_forward.26} parent=0 // pred_region
    _
  $region25: #{conformer_ctc_forward.26} parent=0 // pred_fallthru
    _
  // Predicated region
  $region26: #{conformer_ctc_forward.26} parent=0 // pred_check
    _
  $region27: #{conformer_ctc_forward.26} parent=0 // pred_check_branch
    %328 = sbr.rel (0) target = $region29
  $region28: #{conformer_ctc_forward.26} parent=0 // pred_region
    _
  $region29: #{conformer_ctc_forward.26} parent=0 // pred_fallthru
    _

// kernel: conformer_ctc_forward.24
$region0: #{conformer_ctc_forward.24}
  #allocation0 [shape = 'u32[]', space=smem, size = 0x4, offset = 0x4, fixed_abs, tag = 'smem constant byte address 0x4 - core index']
  #allocation1 [shape = 'u32[72,128]{1,0:T(1,128)}', space=vmem, size = 0x9000, scoped, tag = 'internal scratch']
  #allocation2 [shape = 'f32[4,16,1]{2,1,0:T(8,128)}', space=vmem, size = 0x8000, scoped, tag = 'scratch operand']
  #allocation3 [shape = 'f32[4,16,1]{2,1,0:T(8,128)}', space=vmem, size = 0x8000, scoped, tag = 'scratch operand']
  #allocation4 [shape = 'f32[4,16,16]{2,1,0:T(8,128)}', space=vmem, size = 0x8000, scoped, tag = 'scratch operand']
  %s0 = inlined_call_operand.vmem [shape: bf16[2,4,16,16], index: 0, kind: input, shape index: {}]
  %s1 = inlined_call_operand.vmem [shape: bf16[2,4,16,16], index: 1, kind: input, shape index: {}]
  %s2 = inlined_call_operand.vmem [shape: bf16[2,4,16,16], index: 2, kind: input, shape index: {}]
  %s3 = inlined_call_operand.vmem [shape: f32[2,4,16,16], index: 3, kind: input, shape index: {}]
  %s4 = inlined_call_operand.vmem [shape: f32[2,16,64], index: 4, kind: output, shape index: {}]
  %s5 = sld [smem:[#allocation0]]
  $region57: #{conformer_ctc_forward.24} parent=0
    _
  %s7 = ssub.s32 1, %s5
  %s8 = scalar_select 0, %s7, %s5
  loop: start=0, step=1, limit=4
  $region2: #{conformer_ctc_forward.24} parent=0 // loop_pre_header
    _
  $region3: #{conformer_ctc_forward.24} parent=0 // loop_header
    %s10 = sphi 0, %s14
    %p11 = scmp.ge.s32.totalorder %s10, 4
    %s17 = sphi 0, %s29
    %s18 = sphi 0, %s25
    %s19 = sphi 0, %s17
    %s20 = sphi 0, %s18
    %s21 = sphi 0, %s19
    %s22 = sphi 0, %s20
    %s32 = sphi 0, %s34
    %s35 = sphi 0, %s32
    %s36 = sphi 0, %s35
    %s52 = sphi 0, %s36
    %s60 = sphi 0, %s62
    %s63 = sphi 0, %s60
    %s64 = sphi 0, %s63
    %s80 = sphi 0, %s64
    %s88 = sphi 0, %s90
    %s91 = sphi 0, %s88
    %s92 = sphi 0, %s91
    %s108 = sphi 0, %s92
    %s116 = sphi 0, %s118
    %s119 = sphi 0, %s116
    %s120 = sphi 0, %s119
    %s136 = sphi 0, %s120
    %s142 = sphi 0, %s144
    %s145 = sphi 0, %s142
    %s146 = sphi 0, %s145
    %s162 = sphi 0, %s146
  $region4: #{conformer_ctc_forward.24} parent=0 // loop_header_branch
    %13 = sbr.rel (%p11) target = $region8
  $region5: #{conformer_ctc_forward.24} parent=0 // loop_body
    %s15 = ssub.s32 %s10, 1
    %s16 = ssub.s32 %s10, 2
    %s23 = sadd.s32 1, %s18
    %p24 = scmp.ge.s32.totalorder %s23, 1
    %s25 = scalar_select %p24, 0, %s23
    %s26 = sadd.s32 1, %s17
    %s27 = scalar_select %p24, %s26, %s17
    %p28 = scmp.ge.s32.totalorder %s27, 2
    %s29 = scalar_select %p28, 0, %s27
    %s30 = ssub.s32 %s17, %s29
    %p31 = scmp.eq.s32.totalorder %s30, 0
    %s33 = sadd.s32 %s32, 1
    %s34 = scalar_select %p31, %s32, %s33
    %p37 = pneg %p31
    %p38 = scmp.eq.s32.totalorder %s10, 1
    %p39 = por %p37, %p38
    %p40 = scmp.ne.s32.totalorder %s32, %s35
    %p41 = scmp.eq.s32.totalorder %s10, 0
    %p42 = por %p40, %p41
    %p43 = scmp.ne.s32.totalorder %s32, %s35
    %p44 = scmp.eq.s32.totalorder %s15, 1
    %p45 = por %p43, %p44
    %p46 = scmp.ne.s32.totalorder %s35, %s36
    %p47 = scmp.eq.s32.totalorder %s15, 0
    %p48 = por %p46, %p47
    %p49 = scmp.ne.s32.totalorder %s35, %s36
    %p50 = scmp.eq.s32.totalorder %s16, 1
    %p51 = por %p49, %p50
    %p53 = scmp.ne.s32.totalorder %s36, %s52
    %p54 = scmp.eq.s32.totalorder %s16, 0
    %p55 = por %p53, %p54
    %s56 = ssub.s32 %s17, %s29
    %s57 = ssub.s32 %s18, %s25
    %s58 = sor.u32 %s56, %s57
    %p59 = scmp.eq.s32.totalorder %s58, 0
    %s61 = sadd.s32 %s60, 1
    %s62 = scalar_select %p59, %s60, %s61
    %p65 = pneg %p59
    %p66 = scmp.eq.s32.totalorder %s10, 1
    %p67 = por %p65, %p66
    %p68 = scmp.ne.s32.totalorder %s60, %s63
    %p69 = scmp.eq.s32.totalorder %s10, 0
    %p70 = por %p68, %p69
    %p71 = scmp.ne.s32.totalorder %s60, %s63
    %p72 = scmp.eq.s32.totalorder %s15, 1
    %p73 = por %p71, %p72
    %p74 = scmp.ne.s32.totalorder %s63, %s64
    %p75 = scmp.eq.s32.totalorder %s15, 0
    %p76 = por %p74, %p75
    %p77 = scmp.ne.s32.totalorder %s63, %s64
    %p78 = scmp.eq.s32.totalorder %s16, 1
    %p79 = por %p77, %p78
    %p81 = scmp.ne.s32.totalorder %s64, %s80
    %p82 = scmp.eq.s32.totalorder %s16, 0
    %p83 = por %p81, %p82
    %s84 = ssub.s32 %s17, %s29
    %s85 = ssub.s32 %s18, %s25
    %s86 = sor.u32 %s84, %s85
    %p87 = scmp.eq.s32.totalorder %s86, 0
    %s89 = sadd.s32 %s88, 1
    %s90 = scalar_select %p87, %s88, %s89
    %p93 = pneg %p87
    %p94 = scmp.eq.s32.totalorder %s10, 1
    %p95 = por %p93, %p94
    %p96 = scmp.ne.s32.totalorder %s88, %s91
    %p97 = scmp.eq.s32.totalorder %s10, 0
    %p98 = por %p96, %p97
    %p99 = scmp.ne.s32.totalorder %s88, %s91
    %p100 = scmp.eq.s32.totalorder %s15, 1
    %p101 = por %p99, %p100
    %p102 = scmp.ne.s32.totalorder %s91, %s92
    %p103 = scmp.eq.s32.totalorder %s15, 0
    %p104 = por %p102, %p103
    %p105 = scmp.ne.s32.totalorder %s91, %s92
    %p106 = scmp.eq.s32.totalorder %s16, 1
    %p107 = por %p105, %p106
    %p109 = scmp.ne.s32.totalorder %s92, %s108
    %p110 = scmp.eq.s32.totalorder %s16, 0
    %p111 = por %p109, %p110
    %s112 = ssub.s32 %s17, %s29
    %s113 = ssub.s32 %s18, %s25
    %s114 = sor.u32 %s112, %s113
    %p115 = scmp.eq.s32.totalorder %s114, 0
    %s117 = sadd.s32 %s116, 1
    %s118 = scalar_select %p115, %s116, %s117
    %p121 = pneg %p115
    %p122 = scmp.eq.s32.totalorder %s10, 1
    %p123 = por %p121, %p122
    %p124 = scmp.ne.s32.totalorder %s116, %s119
    %p125 = scmp.eq.s32.totalorder %s10, 0
    %p126 = por %p124, %p125
    %p127 = scmp.ne.s32.totalorder %s116, %s119
    %p128 = scmp.eq.s32.totalorder %s15, 1
    %p129 = por %p127, %p128
    %p130 = scmp.ne.s32.totalorder %s119, %s120
    %p131 = scmp.eq.s32.totalorder %s15, 0
    %p132 = por %p130, %p131
    %p133 = scmp.ne.s32.totalorder %s119, %s120
    %p134 = scmp.eq.s32.totalorder %s16, 1
    %p135 = por %p133, %p134
    %p137 = scmp.ne.s32.totalorder %s120, %s136
    %p138 = scmp.eq.s32.totalorder %s16, 0
    %p139 = por %p137, %p138
    %s140 = ssub.s32 %s17, %s29
    %p141 = scmp.eq.s32.totalorder %s140, 0
    %s143 = sadd.s32 %s142, 1
    %s144 = scalar_select %p141, %s142, %s143
    %p147 = pneg %p141
    %p148 = scmp.eq.s32.totalorder %s10, 1
    %p149 = por %p147, %p148
    %p150 = scmp.ne.s32.totalorder %s142, %s145
    %p151 = scmp.eq.s32.totalorder %s10, 0
    %p152 = por %p150, %p151
    %p153 = scmp.ne.s32.totalorder %s142, %s145
    %p154 = scmp.eq.s32.totalorder %s15, 1
    %p155 = por %p153, %p154
    %p156 = scmp.ne.s32.totalorder %s145, %s146
    %p157 = scmp.eq.s32.totalorder %s15, 0
    %p158 = por %p156, %p157
    %p159 = scmp.ne.s32.totalorder %s145, %s146
    %p160 = scmp.eq.s32.totalorder %s16, 1
    %p161 = por %p159, %p160
    %p163 = scmp.ne.s32.totalorder %s146, %s162
    %p164 = scmp.eq.s32.totalorder %s16, 0
    %p165 = por %p163, %p164
    %p166 = scmp.le.s32.totalorder 1, %s10
    %p167 = scmp.lt.s32.totalorder %s10, 3
    %p168 = pnand %p166, %p167
    %p169 = pneg %p168
    // Predicated region
    $region9: #{conformer_ctc_forward.24} parent=5 // pred_check
      _
    $region10: #{conformer_ctc_forward.24} parent=5 // pred_check_branch
      %171 = sbr.rel (%p168) target = $region12
    $region11: #{conformer_ctc_forward.24} parent=5 // pred_region
      %s172 = ssub.s32 %s10, 1
    $region12: #{conformer_ctc_forward.24} parent=5 // pred_fallthru
      _
    %p173 = scmp.lt.s32.totalorder %s10, 2
    // Predicated region
    $region13: #{conformer_ctc_forward.24} parent=5 // pred_check
      %p174 = pneg %p173
    $region14: #{conformer_ctc_forward.24} parent=5 // pred_check_branch
      %176 = sbr.rel (%p174) target = $region16
    $region15: #{conformer_ctc_forward.24} parent=5 // pred_region
      // Predicated region
      $region17: #{conformer_ctc_forward.24} parent=15 // pred_check
        %p177 = pneg %p42
      $region18: #{conformer_ctc_forward.24} parent=15 // pred_check_branch
        %179 = sbr.rel (%p177) target = $region20
      $region19: #{conformer_ctc_forward.24} parent=15 // pred_region
        %p180 = scmp.lt.s32.totalorder %s17, 1
        %s181 = scalar_select %p180, %s17, 1
        %s182 = smul.addr %s181, 8
        %s183 = smul.addr %s182, 4
        %s184 = scalar_lea.vmem %s0, %s183
      $region20: #{conformer_ctc_forward.24} parent=15 // pred_fallthru
        _
      // Predicated region
      $region21: #{conformer_ctc_forward.24} parent=15 // pred_check
        %p185 = pneg %p70
      $region22: #{conformer_ctc_forward.24} parent=15 // pred_check_branch
        %187 = sbr.rel (%p185) target = $region24
      $region23: #{conformer_ctc_forward.24} parent=15 // pred_region
        %s188 = smul.u32 2, %s18
        %p189 = scmp.lt.s32.totalorder %s17, 1
        %s190 = scalar_select %p189, %s17, 1
        %p191 = scmp.lt.s32.totalorder %s188, 1
        %s192 = scalar_select %p191, %s188, 1
        %s193 = smul.addr %s190, 8
        %s194 = sadd.s32 %s192, %s193
        %s195 = smul.addr %s194, 4
        %s196 = scalar_lea.vmem %s1, %s195
        %s197 = smul.u32 2, %s18
      $region24: #{conformer_ctc_forward.24} parent=15 // pred_fallthru
        _
      // Predicated region
      $region25: #{conformer_ctc_forward.24} parent=15 // pred_check
        %p198 = pneg %p98
      $region26: #{conformer_ctc_forward.24} parent=15 // pred_check_branch
        %200 = sbr.rel (%p198) target = $region28
      $region27: #{conformer_ctc_forward.24} parent=15 // pred_region
        %s201 = smul.u32 2, %s18
        %p202 = scmp.lt.s32.totalorder %s17, 1
        %s203 = scalar_select %p202, %s17, 1
        %p204 = scmp.lt.s32.totalorder %s201, 1
        %s205 = scalar_select %p204, %s201, 1
        %s206 = smul.addr %s203, 8
        %s207 = sadd.s32 %s205, %s206
        %s208 = smul.addr %s207, 4
        %s209 = scalar_lea.vmem %s2, %s208
        %s210 = smul.u32 2, %s18
      $region28: #{conformer_ctc_forward.24} parent=15 // pred_fallthru
        _
      // Predicated region
      $region29: #{conformer_ctc_forward.24} parent=15 // pred_check
        %p211 = pneg %p126
      $region30: #{conformer_ctc_forward.24} parent=15 // pred_check_branch
        %213 = sbr.rel (%p211) target = $region32
      $region31: #{conformer_ctc_forward.24} parent=15 // pred_region
        %p214 = scmp.lt.s32.totalorder %s17, 1
        %s215 = scalar_select %p214, %s17, 1
        %p216 = scmp.lt.s32.totalorder %s18, 0
        %s217 = scalar_select %p216, %s18, 0
        %s218 = smul.addr %s215, 8
        %s219 = sadd.s32 %s217, %s218
        %s220 = smul.addr %s219, 8
        %s221 = scalar_lea.vmem %s3, %s220
      $region32: #{conformer_ctc_forward.24} parent=15 // pred_fallthru
        _
    $region16: #{conformer_ctc_forward.24} parent=5 // pred_fallthru
      _
    %p222 = scmp.le.s32.totalorder 1, %s10
    %p223 = scmp.lt.s32.totalorder %s10, 3
    %p224 = pnand %p222, %p223
    %p225 = pneg %p224
    // Predicated region
    $region33: #{conformer_ctc_forward.24} parent=5 // pred_check
      _
    $region34: #{conformer_ctc_forward.24} parent=5 // pred_check_branch
      %227 = sbr.rel (%p224) target = $region36
    $region35: #{conformer_ctc_forward.24} parent=5 // pred_region
      %s228 = ssub.s32 %s10, 1
      %p229 = scmp.lt.s32.totalorder %s19, 1
      %s230 = scalar_select %p229, %s19, 1
      %s231 = smul.addr %s230, 8
      %s232 = smul.addr %s231, 4
      %s233 = scalar_lea.vmem %s0, %s232
      %p234 = pneg %p48
      %p235 = pneg %p45
      %s236 = smul.u32 2, %s20
      %p237 = scmp.lt.s32.totalorder %s19, 1
      %s238 = scalar_select %p237, %s19, 1
      %p239 = scmp.lt.s32.totalorder %s236, 1
      %s240 = scalar_select %p239, %s236, 1
      %s241 = smul.addr %s238, 8
      %s242 = sadd.s32 %s240, %s241
      %s243 = smul.addr %s242, 4
      %s244 = scalar_lea.vmem %s1, %s243
      %p245 = pneg %p76
      %p246 = pneg %p73
      %s247 = smul.u32 2, %s20
      %p248 = scmp.lt.s32.totalorder %s19, 1
      %s249 = scalar_select %p248, %s19, 1
      %p250 = scmp.lt.s32.totalorder %s247, 1
      %s251 = scalar_select %p250, %s247, 1
      %s252 = smul.addr %s249, 8
      %s253 = sadd.s32 %s251, %s252
      %s254 = smul.addr %s253, 4
      %s255 = scalar_lea.vmem %s2, %s254
      %p256 = pneg %p104
      %p257 = pneg %p101
      %p258 = scmp.lt.s32.totalorder %s19, 1
      %s259 = scalar_select %p258, %s19, 1
      %p260 = scmp.lt.s32.totalorder %s20, 0
      %s261 = scalar_select %p260, %s20, 0
      %s262 = smul.addr %s259, 8
      %s263 = sadd.s32 %s261, %s262
      %s264 = smul.addr %s263, 8
      %s265 = scalar_lea.vmem %s3, %s264
      %p266 = pneg %p132
      %p267 = pneg %p129
      %p268 = pneg %p158
      %p269 = pneg %p155
      %p270 = scmp.lt.s32.totalorder %s19, 1
      %s271 = scalar_select %p270, %s19, 1
      %s272 = smul.addr %s271, 2
      %s273 = smul.addr %s272, 8
      %s274 = scalar_lea.vmem %s4, %s273
      %p275 = scmp.lt.s32.totalorder %s19, 1
      %s276 = scalar_select %p275, %s19, 1
      %s277 = smul.addr %s276, 8
      %s278 = smul.addr %s277, 4
      %s279 = scalar_lea.vmem %s0, %s278
      %s280 = smul.u32 2, %s20
      %p281 = scmp.lt.s32.totalorder %s19, 1
      %s282 = scalar_select %p281, %s19, 1
      %p283 = scmp.lt.s32.totalorder %s280, 1
      %s284 = scalar_select %p283, %s280, 1
      %s285 = smul.addr %s282, 8
      %s286 = sadd.s32 %s284, %s285
      %s287 = smul.addr %s286, 4
      %s288 = scalar_lea.vmem %s1, %s287
      %s289 = smul.u32 2, %s20
      %s290 = smul.u32 2, %s20
      %p291 = scmp.lt.s32.totalorder %s19, 1
      %s292 = scalar_select %p291, %s19, 1
      %p293 = scmp.lt.s32.totalorder %s290, 1
      %s294 = scalar_select %p293, %s290, 1
      %s295 = smul.addr %s292, 8
      %s296 = sadd.s32 %s294, %s295
      %s297 = smul.addr %s296, 4
      %s298 = scalar_lea.vmem %s2, %s297
      %s299 = smul.u32 2, %s20
      %p300 = scmp.lt.s32.totalorder %s19, 1
      %s301 = scalar_select %p300, %s19, 1
      %p302 = scmp.lt.s32.totalorder %s20, 0
      %s303 = scalar_select %p302, %s20, 0
      %s304 = smul.addr %s301, 8
      %s305 = sadd.s32 %s303, %s304
      %s306 = smul.addr %s305, 8
      %s307 = scalar_lea.vmem %s3, %s306
      %p308 = scmp.lt.s32.totalorder %s19, 1
      %s309 = scalar_select %p308, %s19, 1
      %s310 = smul.addr %s309, 2
      %s311 = smul.addr %s310, 8
      %s312 = scalar_lea.vmem %s4, %s311
      %p314 = scmp.eq.s32.totalorder %s20, 0
      // Predicated region
      $region37: #{conformer_ctc_forward.24} parent=35 // pred_check
        %p315 = pneg %p314
      $region38: #{conformer_ctc_forward.24} parent=35 // pred_check_branch
        %317 = sbr.rel (%p315) target = $region40
      $region39: #{conformer_ctc_forward.24} parent=35 // pred_region
        %vm318 = vcmask 7168
        %319 = vst.msk [vmem:[#allocation2] sm:$0xff] %vm318, -1e+30
        %320 = vst.msk [vmem:[#allocation2 + $0x8] sm:$0xff] %vm318, -1e+30
        %321 = vst.msk [vmem:[#allocation2 + $0x10] sm:$0xff] %vm318, -1e+30
        %322 = vst.msk [vmem:[#allocation2 + $0x18] sm:$0xff] %vm318, -1e+30
        %323 = vst.msk [vmem:[#allocation2 + $0x20] sm:$0xff] %vm318, -1e+30
        %324 = vst.msk [vmem:[#allocation2 + $0x28] sm:$0xff] %vm318, -1e+30
        %325 = vst.msk [vmem:[#allocation2 + $0x30] sm:$0xff] %vm318, -1e+30
        %326 = vst.msk [vmem:[#allocation2 + $0x38] sm:$0xff] %vm318, -1e+30
        %327 = vst.msk [vmem:[#allocation3] sm:$0xff] %vm318, 0.0
        %328 = vst.msk [vmem:[#allocation3 + $0x8] sm:$0xff] %vm318, 0.0
        %329 = vst.msk [vmem:[#allocation3 + $0x10] sm:$0xff] %vm318, 0.0
        %330 = vst.msk [vmem:[#allocation3 + $0x18] sm:$0xff] %vm318, 0.0
        %331 = vst.msk [vmem:[#allocation3 + $0x20] sm:$0xff] %vm318, 0.0
        %332 = vst.msk [vmem:[#allocation3 + $0x28] sm:$0xff] %vm318, 0.0
        %333 = vst.msk [vmem:[#allocation3 + $0x30] sm:$0xff] %vm318, 0.0
        %334 = vst.msk [vmem:[#allocation3 + $0x38] sm:$0xff] %vm318, 0.0
        %vm335 = vcmask 130048
        %336 = vst.msk [vmem:[#allocation4] sm:$0xff] %vm335, 0.0
        %337 = vst.msk [vmem:[#allocation4 + $0x8] sm:$0xff] %vm335, 0.0
        %338 = vst.msk [vmem:[#allocation4 + $0x10] sm:$0xff] %vm335, 0.0
        %339 = vst.msk [vmem:[#allocation4 + $0x18] sm:$0xff] %vm335, 0.0
        %340 = vst.msk [vmem:[#allocation4 + $0x20] sm:$0xff] %vm335, 0.0
        %341 = vst.msk [vmem:[#allocation4 + $0x28] sm:$0xff] %vm335, 0.0
        %342 = vst.msk [vmem:[#allocation4 + $0x30] sm:$0xff] %vm335, 0.0
        %343 = vst.msk [vmem:[#allocation4 + $0x38] sm:$0xff] %vm335, 0.0
      $region40: #{conformer_ctc_forward.24} parent=35 // pred_fallthru
        _
      %v344 = vld [vmem:[%s279] sm:$0xf]
      %v345 = vld [vmem:[%s279 + $0x4] sm:$0xf]
      %v346 = vld [vmem:[%s279 + $0x8] sm:$0xf]
      %v347 = vld [vmem:[%s279 + $0xc] sm:$0xf]
      %v348 = vld [vmem:[%s279 + $0x10] sm:$0xf]
      %v349 = vld [vmem:[%s279 + $0x14] sm:$0xf]
      %v350 = vld [vmem:[%s279 + $0x18] sm:$0xf]
      %v351 = vld [vmem:[%s279 + $0x1c] sm:$0xf]
      %v352 = vld [vmem:[%s288] sm:$0xf]
      %v353 = vld [vmem:[%s288 + $0x4] sm:$0xf]
      %v354 = vld [vmem:[%s288 + $0x8] sm:$0xf]
      %v355 = vld [vmem:[%s288 + $0xc] sm:$0xf]
      %v356 = vld [vmem:[%s288 + $0x10] sm:$0xf]
      %v357 = vld [vmem:[%s288 + $0x14] sm:$0xf]
      %v358 = vld [vmem:[%s288 + $0x18] sm:$0xf]
      %v359 = vld [vmem:[%s288 + $0x1c] sm:$0xf]
      %v360 = vld [vmem:[%s298] sm:$0xf]
      %v361 = vld [vmem:[%s298 + $0x4] sm:$0xf]
      %v362 = vld [vmem:[%s298 + $0x8] sm:$0xf]
      %v363 = vld [vmem:[%s298 + $0xc] sm:$0xf]
      %v364 = vld [vmem:[%s298 + $0x10] sm:$0xf]
      %v365 = vld [vmem:[%s298 + $0x14] sm:$0xf]
      %v366 = vld [vmem:[%s298 + $0x18] sm:$0xf]
      %v367 = vld [vmem:[%s298 + $0x1c] sm:$0xf]
      %v370 = vunpack.c.l.b16 %v344
      %v371 = vunpack.c.l.b16 %v345
      %v372 = vpack.c.b16 %v371, %v370
      %v375 = vunpack.c.l.b16 %v352
      %v376 = vunpack.c.l.b16 %v353
      %v377 = vpack.c.b16 %v376, %v375
      %vm378 = vcmask 130048
      %v380 = vsel %vm378, %v372, 0
      %v383 = vsel %vm378, %v377, 0
      %385 = vmatpush.bf16.xpose.msra.mxu0 0
      %386 = vmatpush.bf16.xpose.msra.mxu0 0
      %387 = vmatpush.bf16.xpose.msra.mxu0 0
      %388 = vmatpush.bf16.xpose.msra.mxu0 0
      %389 = vmatpush.bf16.xpose.msra.mxu0 0
      %390 = vmatpush.bf16.xpose.msra.mxu0 0
      %391 = vmatpush.bf16.xpose.msra.mxu0 0
      %392 = vmatpush.bf16.xpose.msra.mxu0 %v383
      %393 = vmatmul.bf16.gmra.mxu0 %v380
      %v394 = vpop.f32.mrf.mxu0
      %v395 = vadd.f32 0.0, %v394
      %v396 = vpop.f32.mrf.mxu0
      %v397 = vadd.f32 0.0, %v396
      %398 = vdwg.mxu0
      %v401 = vunpack.c.l.b16 %v346
      %v402 = vunpack.c.l.b16 %v347
      %v403 = vpack.c.b16 %v402, %v401
      %v406 = vunpack.c.l.b16 %v354
      %v407 = vunpack.c.l.b16 %v355
      %v408 = vpack.c.b16 %v407, %v406
      %v410 = vsel %vm378, %v403, 0
      %v413 = vsel %vm378, %v408, 0
      %415 = vmatpush.bf16.xpose.msra.mxu0 0
      %416 = vmatpush.bf16.xpose.msra.mxu0 0
      %417 = vmatpush.bf16.xpose.msra.mxu0 0
      %418 = vmatpush.bf16.xpose.msra.mxu0 0
      %419 = vmatpush.bf16.xpose.msra.mxu0 0
      %420 = vmatpush.bf16.xpose.msra.mxu0 0
      %421 = vmatpush.bf16.xpose.msra.mxu0 0
      %422 = vmatpush.bf16.xpose.msra.mxu0 %v413
      %423 = vmatmul.bf16.gmra.mxu0 %v410
      %v424 = vpop.f32.mrf.mxu0
      %v425 = vadd.f32 0.0, %v424
      %v426 = vpop.f32.mrf.mxu0
      %v427 = vadd.f32 0.0, %v426
      %428 = vdwg.mxu0
      %v431 = vunpack.c.l.b16 %v348
      %v432 = vunpack.c.l.b16 %v349
      %v433 = vpack.c.b16 %v432, %v431
      %v436 = vunpack.c.l.b16 %v356
      %v437 = vunpack.c.l.b16 %v357
      %v438 = vpack.c.b16 %v437, %v436
      %v440 = vsel %vm378, %v433, 0
      %v443 = vsel %vm378, %v438, 0
      %445 = vmatpush.bf16.xpose.msra.mxu0 0
      %446 = vmatpush.bf16.xpose.msra.mxu0 0
      %447 = vmatpush.bf16.xpose.msra.mxu0 0
      %448 = vmatpush.bf16.xpose.msra.mxu0 0
      %449 = vmatpush.bf16.xpose.msra.mxu0 0
      %450 = vmatpush.bf16.xpose.msra.mxu0 0
      %451 = vmatpush.bf16.xpose.msra.mxu0 0
      %452 = vmatpush.bf16.xpose.msra.mxu0 %v443
      %453 = vmatmul.bf16.gmra.mxu0 %v440
      %v454 = vpop.f32.mrf.mxu0
      %v455 = vadd.f32 0.0, %v454
      %v456 = vpop.f32.mrf.mxu0
      %v457 = vadd.f32 0.0, %v456
      %458 = vdwg.mxu0
      %v461 = vunpack.c.l.b16 %v350
      %v462 = vunpack.c.l.b16 %v351
      %v463 = vpack.c.b16 %v462, %v461
      %v466 = vunpack.c.l.b16 %v358
      %v467 = vunpack.c.l.b16 %v359
      %v468 = vpack.c.b16 %v467, %v466
      %v470 = vsel %vm378, %v463, 0
      %v473 = vsel %vm378, %v468, 0
      %475 = vmatpush.bf16.xpose.msra.mxu0 0
      %476 = vmatpush.bf16.xpose.msra.mxu0 0
      %477 = vmatpush.bf16.xpose.msra.mxu0 0
      %478 = vmatpush.bf16.xpose.msra.mxu0 0
      %479 = vmatpush.bf16.xpose.msra.mxu0 0
      %480 = vmatpush.bf16.xpose.msra.mxu0 0
      %481 = vmatpush.bf16.xpose.msra.mxu0 0
      %482 = vmatpush.bf16.xpose.msra.mxu0 %v473
      %483 = vmatmul.bf16.gmra.mxu0 %v470
      %v484 = vpop.f32.mrf.mxu0
      %v485 = vadd.f32 0.0, %v484
      %v486 = vpop.f32.mrf.mxu0
      %v487 = vadd.f32 0.0, %v486
      %488 = vdwg.mxu0
      %v489 = vmul.f32 %v395, 0.25
      %v490 = vmul.f32 %v397, 0.25
      %v491 = vmul.f32 %v425, 0.25
      %v492 = vmul.f32 %v427, 0.25
      %v493 = vmul.f32 %v455, 0.25
      %v494 = vmul.f32 %v457, 0.25
      %v495 = vmul.f32 %v485, 0.25
      %v496 = vmul.f32 %v487, 0.25
      %v497 = vld [vmem:[%s307] sm:$0xff]
      %v498 = vld [vmem:[%s307 + $0x8] sm:$0xff]
      %v499 = vld [vmem:[%s307 + $0x10] sm:$0xff]
      %v500 = vld [vmem:[%s307 + $0x18] sm:$0xff]
      %v501 = vld [vmem:[%s307 + $0x20] sm:$0xff]
      %v502 = vld [vmem:[%s307 + $0x28] sm:$0xff]
      %v503 = vld [vmem:[%s307 + $0x30] sm:$0xff]
      %v504 = vld [vmem:[%s307 + $0x38] sm:$0xff]
      %v505 = vadd.f32 %v489, %v497
      %v506 = vadd.f32 %v490, %v498
      %v507 = vadd.f32 %v491, %v499
      %v508 = vadd.f32 %v492, %v500
      %v509 = vadd.f32 %v493, %v501
      %v510 = vadd.f32 %v494, %v502
      %v511 = vadd.f32 %v495, %v503
      %v512 = vadd.f32 %v496, %v504
      %v513 = vld [vmem:[#allocation2] sm:$0xff]
      %v514 = vld [vmem:[#allocation2 + $0x8] sm:$0xff]
      %v515 = vld [vmem:[#allocation2 + $0x10] sm:$0xff]
      %v516 = vld [vmem:[#allocation2 + $0x18] sm:$0xff]
      %v517 = vld [vmem:[#allocation2 + $0x20] sm:$0xff]
      %v518 = vld [vmem:[#allocation2 + $0x28] sm:$0xff]
      %v519 = vld [vmem:[#allocation2 + $0x30] sm:$0xff]
      %v520 = vld [vmem:[#allocation2 + $0x38] sm:$0xff]
      %v521 = vsel %vm378, %v505, -inf
      %522 = vmax.xlane.f32.xlu0 %v521
      %v523 = vpop.xlane.xlu0 %522
      %v524 = vsel %vm378, %v506, -inf
      %525 = vmax.xlane.f32.xlu0 %v524
      %v526 = vpop.xlane.xlu0 %525
      %v527 = vsel %vm378, %v507, -inf
      %528 = vmax.xlane.f32.xlu0 %v527
      %v529 = vpop.xlane.xlu0 %528
      %v530 = vsel %vm378, %v508, -inf
      %531 = vmax.xlane.f32.xlu0 %v530
      %v532 = vpop.xlane.xlu0 %531
      %v533 = vsel %vm378, %v509, -inf
      %534 = vmax.xlane.f32.xlu0 %v533
      %v535 = vpop.xlane.xlu0 %534
      %v536 = vsel %vm378, %v510, -inf
      %537 = vmax.xlane.f32.xlu0 %v536
      %v538 = vpop.xlane.xlu0 %537
      %v539 = vsel %vm378, %v511, -inf
      %540 = vmax.xlane.f32.xlu0 %v539
      %v541 = vpop.xlane.xlu0 %540
      %v542 = vsel %vm378, %v512, -inf
      %543 = vmax.xlane.f32.xlu0 %v542
      %v544 = vpop.xlane.xlu0 %543
      %v545 = vmax.f32 %v513, %v523
      %v546 = vmax.f32 %v514, %v526
      %v547 = vmax.f32 %v515, %v529
      %v548 = vmax.f32 %v516, %v532
      %v549 = vmax.f32 %v517, %v535
      %v550 = vmax.f32 %v518, %v538
      %v551 = vmax.f32 %v519, %v541
      %v552 = vmax.f32 %v520, %v544
      %v553 = vsub.f32 %v513, %v545
      %v554 = vsub.f32 %v514, %v546
      %v555 = vsub.f32 %v515, %v547
      %v556 = vsub.f32 %v516, %v548
      %v557 = vsub.f32 %v517, %v549
      %v558 = vsub.f32 %v518, %v550
      %v559 = vsub.f32 %v519, %v551
      %v560 = vsub.f32 %v520, %v552
      %v561 = vmul.f32 %v553, 1.442695
      %v562 = vpow.pop %v561
      %v563 = vmul.f32 %v554, 1.442695
      %v564 = vpow.pop %v563
      %v565 = vmul.f32 %v555, 1.442695
      %v566 = vpow.pop %v565
      %v567 = vmul.f32 %v556, 1.442695
      %v568 = vpow.pop %v567
      %v569 = vmul.f32 %v557, 1.442695
      %v570 = vpow.pop %v569
      %v571 = vmul.f32 %v558, 1.442695
      %v572 = vpow.pop %v571
      %v573 = vmul.f32 %v559, 1.442695
      %v574 = vpow.pop %v573
      %v575 = vmul.f32 %v560, 1.442695
      %v576 = vpow.pop %v575
      %578 = vset.pattern.permute.xlu0 0
      %579 = vperm.xlu0 %578, %v545
      %v580 = vpop.permute.xlu0 %579
      %583 = vset.pattern.permute.xlu0 0
      %584 = vperm.xlu0 %583, %v546
      %v585 = vpop.permute.xlu0 %584
      %588 = vset.pattern.permute.xlu0 0
      %589 = vperm.xlu0 %588, %v547
      %v590 = vpop.permute.xlu0 %589
      %593 = vset.pattern.permute.xlu0 0
      %594 = vperm.xlu0 %593, %v548
      %v595 = vpop.permute.xlu0 %594
      %598 = vset.pattern.permute.xlu0 0
      %599 = vperm.xlu0 %598, %v549
      %v600 = vpop.permute.xlu0 %599
      %603 = vset.pattern.permute.xlu0 0
      %604 = vperm.xlu0 %603, %v550
      %v605 = vpop.permute.xlu0 %604
      %608 = vset.pattern.permute.xlu0 0
      %609 = vperm.xlu0 %608, %v551
      %v610 = vpop.permute.xlu0 %609
      %613 = vset.pattern.permute.xlu0 0
      %614 = vperm.xlu0 %613, %v552
      %v615 = vpop.permute.xlu0 %614
      %v617 = vsub.f32 %v505, %v580
      %v618 = vsub.f32 %v506, %v585
      %v619 = vsub.f32 %v507, %v590
      %v620 = vsub.f32 %v508, %v595
      %v621 = vsub.f32 %v509, %v600
      %v622 = vsub.f32 %v510, %v605
      %v623 = vsub.f32 %v511, %v610
      %v624 = vsub.f32 %v512, %v615
      %v625 = vmul.f32 %v617, 1.442695
      %v626 = vpow.pop %v625
      %v627 = vmul.f32 %v618, 1.442695
      %v628 = vpow.pop %v627
      %v629 = vmul.f32 %v619, 1.442695
      %v630 = vpow.pop %v629
      %v631 = vmul.f32 %v620, 1.442695
      %v632 = vpow.pop %v631
      %v633 = vmul.f32 %v621, 1.442695
      %v634 = vpow.pop %v633
      %v635 = vmul.f32 %v622, 1.442695
      %v636 = vpow.pop %v635
      %v637 = vmul.f32 %v623, 1.442695
      %v638 = vpow.pop %v637
      %v639 = vmul.f32 %v624, 1.442695
      %v640 = vpow.pop %v639
      %v641 = vld [vmem:[#allocation3] sm:$0xff]
      %v642 = vld [vmem:[#allocation3 + $0x8] sm:$0xff]
      %v643 = vld [vmem:[#allocation3 + $0x10] sm:$0xff]
      %v644 = vld [vmem:[#allocation3 + $0x18] sm:$0xff]
      %v645 = vld [vmem:[#allocation3 + $0x20] sm:$0xff]
      %v646 = vld [vmem:[#allocation3 + $0x28] sm:$0xff]
      %v647 = vld [vmem:[#allocation3 + $0x30] sm:$0xff]
      %v648 = vld [vmem:[#allocation3 + $0x38] sm:$0xff]
      %v649 = vmul.f32 %v562, %v641
      %v650 = vmul.f32 %v564, %v642
      %v651 = vmul.f32 %v566, %v643
      %v652 = vmul.f32 %v568, %v644
      %v653 = vmul.f32 %v570, %v645
      %v654 = vmul.f32 %v572, %v646
      %v655 = vmul.f32 %v574, %v647
      %v656 = vmul.f32 %v576, %v648
      %v657 = vsel %vm378, %v626, 0.0
      %658 = vadd.xlane.f32.xlu0 %v657
      %v659 = vpop.xlane.xlu0 %658
      %v660 = vsel %vm378, %v628, 0.0
      %661 = vadd.xlane.f32.xlu0 %v660
      %v662 = vpop.xlane.xlu0 %661
      %v663 = vsel %vm378, %v630, 0.0
      %664 = vadd.xlane.f32.xlu0 %v663
      %v665 = vpop.xlane.xlu0 %664
      %v666 = vsel %vm378, %v632, 0.0
      %667 = vadd.xlane.f32.xlu0 %v666
      %v668 = vpop.xlane.xlu0 %667
      %v669 = vsel %vm378, %v634, 0.0
      %670 = vadd.xlane.f32.xlu0 %v669
      %v671 = vpop.xlane.xlu0 %670
      %v672 = vsel %vm378, %v636, 0.0
      %673 = vadd.xlane.f32.xlu0 %v672
      %v674 = vpop.xlane.xlu0 %673
      %v675 = vsel %vm378, %v638, 0.0
      %676 = vadd.xlane.f32.xlu0 %v675
      %v677 = vpop.xlane.xlu0 %676
      %v678 = vsel %vm378, %v640, 0.0
      %679 = vadd.xlane.f32.xlu0 %v678
      %v680 = vpop.xlane.xlu0 %679
      %v681 = vadd.f32 %v649, %v659
      %v682 = vadd.f32 %v650, %v662
      %v683 = vadd.f32 %v651, %v665
      %v684 = vadd.f32 %v652, %v668
      %v685 = vadd.f32 %v653, %v671
      %v686 = vadd.f32 %v654, %v674
      %v687 = vadd.f32 %v655, %v677
      %v688 = vadd.f32 %v656, %v680
      %vm689 = vcmask 7168
      %690 = vst.msk [vmem:[#allocation3] sm:$0xff] %vm689, %v681
      %691 = vst.msk [vmem:[#allocation3 + $0x8] sm:$0xff] %vm689, %v682
      %692 = vst.msk [vmem:[#allocation3 + $0x10] sm:$0xff] %vm689, %v683
      %693 = vst.msk [vmem:[#allocation3 + $0x18] sm:$0xff] %vm689, %v684
      %694 = vst.msk [vmem:[#allocation3 + $0x20] sm:$0xff] %vm689, %v685
      %695 = vst.msk [vmem:[#allocation3 + $0x28] sm:$0xff] %vm689, %v686
      %696 = vst.msk [vmem:[#allocation3 + $0x30] sm:$0xff] %vm689, %v687
      %697 = vst.msk [vmem:[#allocation3 + $0x38] sm:$0xff] %vm689, %v688
      %v698 = vld [vmem:[#allocation4] sm:$0xff]
      %v699 = vld [vmem:[#allocation4 + $0x8] sm:$0xff]
      %v700 = vld [vmem:[#allocation4 + $0x10] sm:$0xff]
      %v701 = vld [vmem:[#allocation4 + $0x18] sm:$0xff]
      %v702 = vld [vmem:[#allocation4 + $0x20] sm:$0xff]
      %v703 = vld [vmem:[#allocation4 + $0x28] sm:$0xff]
      %v704 = vld [vmem:[#allocation4 + $0x30] sm:$0xff]
      %v705 = vld [vmem:[#allocation4 + $0x38] sm:$0xff]
      %707 = vset.pattern.permute.xlu0 0
      %708 = vperm.xlu0 %707, %v562
      %v709 = vpop.permute.xlu0 %708
      %712 = vset.pattern.permute.xlu0 0
      %713 = vperm.xlu0 %712, %v564
      %v714 = vpop.permute.xlu0 %713
      %717 = vset.pattern.permute.xlu0 0
      %718 = vperm.xlu0 %717, %v566
      %v719 = vpop.permute.xlu0 %718
      %722 = vset.pattern.permute.xlu0 0
      %723 = vperm.xlu0 %722, %v568
      %v724 = vpop.permute.xlu0 %723
      %727 = vset.pattern.permute.xlu0 0
      %728 = vperm.xlu0 %727, %v570
      %v729 = vpop.permute.xlu0 %728
      %732 = vset.pattern.permute.xlu0 0
      %733 = vperm.xlu0 %732, %v572
      %v734 = vpop.permute.xlu0 %733
      %737 = vset.pattern.permute.xlu0 0
      %738 = vperm.xlu0 %737, %v574
      %v739 = vpop.permute.xlu0 %738
      %742 = vset.pattern.permute.xlu0 0
      %743 = vperm.xlu0 %742, %v576
      %v744 = vpop.permute.xlu0 %743
      %v746 = vmul.f32 %v709, %v698
      %v747 = vmul.f32 %v714, %v699
      %v748 = vmul.f32 %v719, %v700
      %v749 = vmul.f32 %v724, %v701
      %v750 = vmul.f32 %v729, %v702
      %v751 = vmul.f32 %v734, %v703
      %v752 = vmul.f32 %v739, %v704
      %v753 = vmul.f32 %v744, %v705
      %v754 = vpack.c.bf16 %v626, %v626
      %v755 = vpack.c.bf16 %v628, %v628
      %v756 = vpack.c.bf16 %v630, %v630
      %v757 = vpack.c.bf16 %v632, %v632
      %v758 = vpack.c.bf16 %v634, %v634
      %v759 = vpack.c.bf16 %v636, %v636
      %v760 = vpack.c.bf16 %v638, %v638
      %v761 = vpack.c.bf16 %v640, %v640
      %v764 = vunpack.c.l.b16 %v754
      %v765 = vunpack.c.l.b16 %v755
      %v766 = vpack.c.b16 %v765, %v764
      %v769 = vunpack.c.l.b16 %v360
      %v770 = vunpack.c.l.b16 %v361
      %v771 = vpack.c.b16 %v770, %v769
      %v774 = vsel %vm378, %v766, 0
      %776 = vmatpush.bf16.msra.mxu0 0
      %777 = vmatpush.bf16.msra.mxu0 0
      %778 = vmatpush.bf16.msra.mxu0 0
      %779 = vmatpush.bf16.msra.mxu0 0
      %780 = vmatpush.bf16.msra.mxu0 0
      %781 = vmatpush.bf16.msra.mxu0 0
      %782 = vmatpush.bf16.msra.mxu0 0
      %783 = vmatpush.bf16.msra.mxu0 %v771
      %784 = vmatmul.bf16.gmra.mxu0 %v774
      %v785 = vpop.f32.mrf.mxu0
      %v786 = vadd.f32 0.0, %v785
      %v787 = vpop.f32.mrf.mxu0
      %v788 = vadd.f32 0.0, %v787
      %789 = vdwg.mxu0
      %v792 = vunpack.c.l.b16 %v756
      %v793 = vunpack.c.l.b16 %v757
      %v794 = vpack.c.b16 %v793, %v792
      %v797 = vunpack.c.l.b16 %v362
      %v798 = vunpack.c.l.b16 %v363
      %v799 = vpack.c.b16 %v798, %v797
      %v802 = vsel %vm378, %v794, 0
      %804 = vmatpush.bf16.msra.mxu0 0
      %805 = vmatpush.bf16.msra.mxu0 0
      %806 = vmatpush.bf16.msra.mxu0 0
      %807 = vmatpush.bf16.msra.mxu0 0
      %808 = vmatpush.bf16.msra.mxu0 0
      %809 = vmatpush.bf16.msra.mxu0 0
      %810 = vmatpush.bf16.msra.mxu0 0
      %811 = vmatpush.bf16.msra.mxu0 %v799
      %812 = vmatmul.bf16.gmra.mxu0 %v802
      %v813 = vpop.f32.mrf.mxu0
      %v814 = vadd.f32 0.0, %v813
      %v815 = vpop.f32.mrf.mxu0
      %v816 = vadd.f32 0.0, %v815
      %817 = vdwg.mxu0
      %v820 = vunpack.c.l.b16 %v758
      %v821 = vunpack.c.l.b16 %v759
      %v822 = vpack.c.b16 %v821, %v820
      %v825 = vunpack.c.l.b16 %v364
      %v826 = vunpack.c.l.b16 %v365
      %v827 = vpack.c.b16 %v826, %v825
      %v830 = vsel %vm378, %v822, 0
      %832 = vmatpush.bf16.msra.mxu0 0
      %833 = vmatpush.bf16.msra.mxu0 0
      %834 = vmatpush.bf16.msra.mxu0 0
      %835 = vmatpush.bf16.msra.mxu0 0
      %836 = vmatpush.bf16.msra.mxu0 0
      %837 = vmatpush.bf16.msra.mxu0 0
      %838 = vmatpush.bf16.msra.mxu0 0
      %839 = vmatpush.bf16.msra.mxu0 %v827
      %840 = vmatmul.bf16.gmra.mxu0 %v830
      %v841 = vpop.f32.mrf.mxu0
      %v842 = vadd.f32 0.0, %v841
      %v843 = vpop.f32.mrf.mxu0
      %v844 = vadd.f32 0.0, %v843
      %845 = vdwg.mxu0
      %v848 = vunpack.c.l.b16 %v760
      %v849 = vunpack.c.l.b16 %v761
      %v850 = vpack.c.b16 %v849, %v848
      %v853 = vunpack.c.l.b16 %v366
      %v854 = vunpack.c.l.b16 %v367
      %v855 = vpack.c.b16 %v854, %v853
      %v858 = vsel %vm378, %v850, 0
      %860 = vmatpush.bf16.msra.mxu0 0
      %861 = vmatpush.bf16.msra.mxu0 0
      %862 = vmatpush.bf16.msra.mxu0 0
      %863 = vmatpush.bf16.msra.mxu0 0
      %864 = vmatpush.bf16.msra.mxu0 0
      %865 = vmatpush.bf16.msra.mxu0 0
      %866 = vmatpush.bf16.msra.mxu0 0
      %867 = vmatpush.bf16.msra.mxu0 %v855
      %868 = vmatmul.bf16.gmra.mxu0 %v858
      %v869 = vpop.f32.mrf.mxu0
      %v870 = vadd.f32 0.0, %v869
      %v871 = vpop.f32.mrf.mxu0
      %v872 = vadd.f32 0.0, %v871
      %873 = vdwg.mxu0
      %v874 = vadd.f32 %v746, %v786
      %v875 = vadd.f32 %v747, %v788
      %v876 = vadd.f32 %v748, %v814
      %v877 = vadd.f32 %v749, %v816
      %v878 = vadd.f32 %v750, %v842
      %v879 = vadd.f32 %v751, %v844
      %v880 = vadd.f32 %v752, %v870
      %v881 = vadd.f32 %v753, %v872
      %882 = vst.msk [vmem:[#allocation4] sm:$0xff] %vm378, %v874
      %883 = vst.msk [vmem:[#allocation4 + $0x8] sm:$0xff] %vm378, %v875
      %884 = vst.msk [vmem:[#allocation4 + $0x10] sm:$0xff] %vm378, %v876
      %885 = vst.msk [vmem:[#allocation4 + $0x18] sm:$0xff] %vm378, %v877
      %886 = vst.msk [vmem:[#allocation4 + $0x20] sm:$0xff] %vm378, %v878
      %887 = vst.msk [vmem:[#allocation4 + $0x28] sm:$0xff] %vm378, %v879
      %888 = vst.msk [vmem:[#allocation4 + $0x30] sm:$0xff] %vm378, %v880
      %889 = vst.msk [vmem:[#allocation4 + $0x38] sm:$0xff] %vm378, %v881
      %890 = vst.msk [vmem:[#allocation2] sm:$0xff] %vm689, %v545
      %891 = vst.msk [vmem:[#allocation2 + $0x8] sm:$0xff] %vm689, %v546
      %892 = vst.msk [vmem:[#allocation2 + $0x10] sm:$0xff] %vm689, %v547
      %893 = vst.msk [vmem:[#allocation2 + $0x18] sm:$0xff] %vm689, %v548
      %894 = vst.msk [vmem:[#allocation2 + $0x20] sm:$0xff] %vm689, %v549
      %895 = vst.msk [vmem:[#allocation2 + $0x28] sm:$0xff] %vm689, %v550
      %896 = vst.msk [vmem:[#allocation2 + $0x30] sm:$0xff] %vm689, %v551
      %897 = vst.msk [vmem:[#allocation2 + $0x38] sm:$0xff] %vm689, %v552
      // Predicated region
      $region41: #{conformer_ctc_forward.24} parent=35 // pred_check
        %p898 = pneg %p314
      $region42: #{conformer_ctc_forward.24} parent=35 // pred_check_branch
        %900 = sbr.rel (%p898) target = $region44
      $region43: #{conformer_ctc_forward.24} parent=35 // pred_region
        %v901 = vld [vmem:[#allocation3] sm:$0xff]
        %v902 = vld [vmem:[#allocation3 + $0x8] sm:$0xff]
        %v903 = vrcp.pop %v901
        %v904 = vrcp.pop %v902
        %v905 = vld [vmem:[#allocation4] sm:$0xff]
        %v906 = vld [vmem:[#allocation4 + $0x8] sm:$0xff]
        %908 = vset.pattern.permute.xlu0 0
        %909 = vperm.xlu0 %908, %v903
        %v910 = vpop.permute.xlu0 %909
        %913 = vset.pattern.permute.xlu0 0
        %914 = vperm.xlu0 %913, %v904
        %v915 = vpop.permute.xlu0 %914
        %v917 = vmul.f32 %v905, %v910
        %v918 = vmul.f32 %v906, %v915
        %919 = vst.msk [vmem:[%s312] sm:$0xff] %vm378, %v917
        %920 = vst.msk [vmem:[%s312 + $0x8] sm:$0xff] %vm378, %v918
        %s921 = scalar_lea.vmem [#allocation3], 16
        %v922 = vld [vmem:[%s921] sm:$0xff]
        %v923 = vld [vmem:[%s921 + $0x8] sm:$0xff]
        %v924 = vrcp.pop %v922
        %v925 = vrcp.pop %v923
        %s926 = scalar_lea.vmem [#allocation4], 16
        %v927 = vld [vmem:[%s926] sm:$0xff]
        %v928 = vld [vmem:[%s926 + $0x8] sm:$0xff]
        %930 = vset.pattern.permute.xlu0 0
        %931 = vperm.xlu0 %930, %v924
        %v932 = vpop.permute.xlu0 %931
        %935 = vset.pattern.permute.xlu0 0
        %936 = vperm.xlu0 %935, %v925
        %v937 = vpop.permute.xlu0 %936
        %v939 = vmul.f32 %v927, %v932
        %v940 = vmul.f32 %v928, %v937
        %943 = vrot.lane.b32.xlu0 %v939, 16
        %v944 = vpop.permute.xlu0 %943
        %945 = vrot.lane.b32.xlu0 %v940, 16
        %v946 = vpop.permute.xlu0 %945
        %vm949 = vcmask 261248
        %950 = vst.msk [vmem:[%s312] sm:$0xff] %vm949, %v944
        %951 = vst.msk [vmem:[%s312 + $0x8] sm:$0xff] %vm949, %v946
        %s952 = scalar_lea.vmem [#allocation3], 32
        %v953 = vld [vmem:[%s952] sm:$0xff]
        %v954 = vld [vmem:[%s952 + $0x8] sm:$0xff]
        %v955 = vrcp.pop %v953
        %v956 = vrcp.pop %v954
        %s957 = scalar_lea.vmem [#allocation4], 32
        %v958 = vld [vmem:[%s957] sm:$0xff]
        %v959 = vld [vmem:[%s957 + $0x8] sm:$0xff]
        %961 = vset.pattern.permute.xlu0 0
        %962 = vperm.xlu0 %961, %v955
        %v963 = vpop.permute.xlu0 %962
        %966 = vset.pattern.permute.xlu0 0
        %967 = vperm.xlu0 %966, %v956
        %v968 = vpop.permute.xlu0 %967
        %v970 = vmul.f32 %v958, %v963
        %v971 = vmul.f32 %v959, %v968
        %974 = vrot.lane.b32.xlu0 %v970, 32
        %v975 = vpop.permute.xlu0 %974
        %976 = vrot.lane.b32.xlu0 %v971, 32
        %v977 = vpop.permute.xlu0 %976
        %vm980 = vcmask 392448
        %981 = vst.msk [vmem:[%s312] sm:$0xff] %vm980, %v975
        %982 = vst.msk [vmem:[%s312 + $0x8] sm:$0xff] %vm980, %v977
        %s983 = scalar_lea.vmem [#allocation3], 48
        %v984 = vld [vmem:[%s983] sm:$0xff]
        %v985 = vld [vmem:[%s983 + $0x8] sm:$0xff]
        %v986 = vrcp.pop %v984
        %v987 = vrcp.pop %v985
        %s988 = scalar_lea.vmem [#allocation4], 48
        %v989 = vld [vmem:[%s988] sm:$0xff]
        %v990 = vld [vmem:[%s988 + $0x8] sm:$0xff]
        %992 = vset.pattern.permute.xlu0 0
        %993 = vperm.xlu0 %992, %v986
        %v994 = vpop.permute.xlu0 %993
        %997 = vset.pattern.permute.xlu0 0
        %998 = vperm.xlu0 %997, %v987
        %v999 = vpop.permute.xlu0 %998
        %v1001 = vmul.f32 %v989, %v994
        %v1002 = vmul.f32 %v990, %v999
        %1005 = vrot.lane.b32.xlu0 %v1001, 48
        %v1006 = vpop.permute.xlu0 %1005
        %1007 = vrot.lane.b32.xlu0 %v1002, 48
        %v1008 = vpop.permute.xlu0 %1007
        %vm1011 = vcmask 523648
        %1012 = vst.msk [vmem:[%s312] sm:$0xff] %vm1011, %v1006
        %1013 = vst.msk [vmem:[%s312 + $0x8] sm:$0xff] %vm1011, %v1008
      $region44: #{conformer_ctc_forward.24} parent=35 // pred_fallthru
        _
      %p1014 = scmp.lt.s32.totalorder %s19, 1
      %s1015 = scalar_select %p1014, %s19, 1
      %s1016 = smul.addr %s1015, 2
      %s1017 = smul.addr %s1016, 8
      %s1018 = scalar_lea.vmem %s4, %s1017
      // Predicated region
      $region45: #{conformer_ctc_forward.24} parent=35 // pred_check
        %p1019 = pneg %p155
      $region46: #{conformer_ctc_forward.24} parent=35 // pred_check_branch
        %1021 = sbr.rel (%p1019) target = $region48
      $region47: #{conformer_ctc_forward.24} parent=35 // pred_region
        _
      $region48: #{conformer_ctc_forward.24} parent=35 // pred_fallthru
        _
    $region36: #{conformer_ctc_forward.24} parent=5 // pred_fallthru
      _
    %p1022 = scmp.le.s32.totalorder 2, %s10
    // Predicated region
    $region49: #{conformer_ctc_forward.24} parent=5 // pred_check
      %p1023 = pneg %p1022
    $region50: #{conformer_ctc_forward.24} parent=5 // pred_check_branch
      %1025 = sbr.rel (%p1023) target = $region52
    $region51: #{conformer_ctc_forward.24} parent=5 // pred_region
      %s1026 = ssub.s32 %s10, 2
      // Predicated region
      $region53: #{conformer_ctc_forward.24} parent=51 // pred_check
        %p1027 = pneg %p161
      $region54: #{conformer_ctc_forward.24} parent=51 // pred_check_branch
        %1029 = sbr.rel (%p1027) target = $region56
      $region55: #{conformer_ctc_forward.24} parent=51 // pred_region
        %p1030 = scmp.lt.s32.totalorder %s21, 1
        %s1031 = scalar_select %p1030, %s21, 1
        %s1032 = smul.addr %s1031, 2
        %s1033 = smul.addr %s1032, 8
        %s1034 = scalar_lea.vmem %s4, %s1033
      $region56: #{conformer_ctc_forward.24} parent=51 // pred_fallthru
        _
    $region52: #{conformer_ctc_forward.24} parent=5 // pred_fallthru
      _
  $region6: #{conformer_ctc_forward.24} parent=0 // loop_footer
    %s14 = sadd.s32 1, %s10
  $region7: #{conformer_ctc_forward.24} parent=0 // loop_footer_branch
    %9 = sbr.rel target = $region3
  $region8: #{conformer_ctc_forward.24} parent=0 // loop_exit
    _

// kernel: conformer_ctc_forward.28
$region0: #{conformer_ctc_forward.28}
  #allocation0 [shape = 'u32[]', space=smem, size = 0x4, offset = 0x4, fixed_abs, tag = 'smem constant byte address 0x4 - core index']
  #allocation1 [shape = 'u32[72,128]{1,0:T(1,128)}', space=vmem, size = 0x9000, scoped, tag = 'internal scratch']
  %s0 = inlined_call_operand.vmem [shape: f32[32,64], index: 0, kind: input, shape index: {}]
  %s1 = inlined_call_operand.vmem [shape: bf16[64,256], index: 1, kind: input, shape index: {}]
  %s2 = inlined_call_operand.vmem [shape: f32[1,256], index: 2, kind: input, shape index: {}]
  %s3 = inlined_call_operand.vmem [shape: f32[1,64], index: 3, kind: input, shape index: {}]
  %s4 = inlined_call_operand.vmem [shape: f32[1,64], index: 4, kind: input, shape index: {}]
  %s5 = inlined_call_operand.vmem [shape: f32[32,256], index: 5, kind: output, shape index: {}]
  %s6 = sld [smem:[#allocation0]]
  $region30: #{conformer_ctc_forward.28} parent=0
    _
  %s8 = ssub.s32 1, %s6
  %s9 = scalar_select 0, %s8, %s6
  // Predicated region
  $region2: #{conformer_ctc_forward.28} parent=0 // pred_check
    _
  $region3: #{conformer_ctc_forward.28} parent=0 // pred_check_branch
    %11 = sbr.rel (0) target = $region5
  $region4: #{conformer_ctc_forward.28} parent=0 // pred_region
    _
  $region5: #{conformer_ctc_forward.28} parent=0 // pred_fallthru
    _
  // Predicated region
  $region6: #{conformer_ctc_forward.28} parent=0 // pred_check
    _
  $region7: #{conformer_ctc_forward.28} parent=0 // pred_check_branch
    %13 = sbr.rel (0) target = $region9
  $region8: #{conformer_ctc_forward.28} parent=0 // pred_region
    _
  $region9: #{conformer_ctc_forward.28} parent=0 // pred_fallthru
    _
  // Predicated region
  $region10: #{conformer_ctc_forward.28} parent=0 // pred_check
    _
  $region11: #{conformer_ctc_forward.28} parent=0 // pred_check_branch
    %15 = sbr.rel (0) target = $region13
  $region12: #{conformer_ctc_forward.28} parent=0 // pred_region
    _
  $region13: #{conformer_ctc_forward.28} parent=0 // pred_fallthru
    _
  // Predicated region
  $region14: #{conformer_ctc_forward.28} parent=0 // pred_check
    _
  $region15: #{conformer_ctc_forward.28} parent=0 // pred_check_branch
    %17 = sbr.rel (0) target = $region17
  $region16: #{conformer_ctc_forward.28} parent=0 // pred_region
    _
  $region17: #{conformer_ctc_forward.28} parent=0 // pred_fallthru
    _
  // Predicated region
  $region18: #{conformer_ctc_forward.28} parent=0 // pred_check
    _
  $region19: #{conformer_ctc_forward.28} parent=0 // pred_check_branch
    %19 = sbr.rel (0) target = $region21
  $region20: #{conformer_ctc_forward.28} parent=0 // pred_region
    _
  $region21: #{conformer_ctc_forward.28} parent=0 // pred_fallthru
    _
  %v21 = vld [vmem:[%s0] sm:$0xff]
  %v22 = vld [vmem:[%s0 + $0x8] sm:$0xff]
  %v23 = vld [vmem:[%s0 + $0x10] sm:$0xff]
  %v24 = vld [vmem:[%s0 + $0x18] sm:$0xff]
  %vm25 = vcmask 523264
  %v26 = vsel %vm25, %v21, 0.0
  %27 = vadd.xlane.f32.xlu0 %v26
  %v28 = vpop.xlane.xlu0 %27
  %v29 = vsel %vm25, %v22, 0.0
  %30 = vadd.xlane.f32.xlu0 %v29
  %v31 = vpop.xlane.xlu0 %30
  %v32 = vsel %vm25, %v23, 0.0
  %33 = vadd.xlane.f32.xlu0 %v32
  %v34 = vpop.xlane.xlu0 %33
  %v35 = vsel %vm25, %v24, 0.0
  %36 = vadd.xlane.f32.xlu0 %v35
  %v37 = vpop.xlane.xlu0 %36
  %v38 = vrcp.pop 64.0
  %v39 = vmul.f32 64.0, %v38
  %v40 = vsub.f32 1.0, %v39
  %v41 = vmul.f32 %v38, %v40
  %v42 = vadd.f32 %v38, %v41
  %vm43 = vweird.f32 %v38
  %v44 = vsel %vm43, %v38, %v42
  %v45 = vmul.f32 %v28, %v44
  %v46 = vmul.f32 %v31, %v44
  %v47 = vmul.f32 %v34, %v44
  %v48 = vmul.f32 %v37, %v44
  %v49 = vsub.f32 %v21, %v45
  %v50 = vsub.f32 %v22, %v46
  %v51 = vsub.f32 %v23, %v47
  %v52 = vsub.f32 %v24, %v48
  %v53 = vmul.f32 %v49, %v49
  %v54 = vmul.f32 %v50, %v50
  %v55 = vmul.f32 %v51, %v51
  %v56 = vmul.f32 %v52, %v52
  %v57 = vsel %vm25, %v53, 0.0
  %58 = vadd.xlane.f32.xlu0 %v57
  %v59 = vpop.xlane.xlu0 %58
  %v60 = vsel %vm25, %v54, 0.0
  %61 = vadd.xlane.f32.xlu0 %v60
  %v62 = vpop.xlane.xlu0 %61
  %v63 = vsel %vm25, %v55, 0.0
  %64 = vadd.xlane.f32.xlu0 %v63
  %v65 = vpop.xlane.xlu0 %64
  %v66 = vsel %vm25, %v56, 0.0
  %67 = vadd.xlane.f32.xlu0 %v66
  %v68 = vpop.xlane.xlu0 %67
  %v69 = vmul.f32 %v59, %v44
  %v70 = vmul.f32 %v62, %v44
  %v71 = vmul.f32 %v65, %v44
  %v72 = vmul.f32 %v68, %v44
  %v73 = vadd.f32 %v69, 1e-05
  %v74 = vadd.f32 %v70, 1e-05
  %v75 = vadd.f32 %v71, 1e-05
  %v76 = vadd.f32 %v72, 1e-05
  %v77 = vrsqrt.pop %v73
  %v78 = vmul.f32 %v77, %v73
  %v79 = vmul.f32 %v78, %v77
  %v80 = vmul.f32 0.5, %v79
  %v81 = vsub.f32 1.5, %v80
  %v82 = vmul.f32 %v77, %v81
  %vm83 = vweird.f32 %v73
  %vm84 = vweird.f32 %v77
  %vm85 = vmor %vm83, %vm84
  %v86 = vsel %vm85, %v77, %v82
  %v87 = vrsqrt.pop %v74
  %v88 = vmul.f32 %v87, %v74
  %v89 = vmul.f32 %v88, %v87
  %v90 = vmul.f32 0.5, %v89
  %v91 = vsub.f32 1.5, %v90
  %v92 = vmul.f32 %v87, %v91
  %vm93 = vweird.f32 %v74
  %vm94 = vweird.f32 %v87
  %vm95 = vmor %vm93, %vm94
  %v96 = vsel %vm95, %v87, %v92
  %v97 = vrsqrt.pop %v75
  %v98 = vmul.f32 %v97, %v75
  %v99 = vmul.f32 %v98, %v97
  %v100 = vmul.f32 0.5, %v99
  %v101 = vsub.f32 1.5, %v100
  %v102 = vmul.f32 %v97, %v101
  %vm103 = vweird.f32 %v75
  %vm104 = vweird.f32 %v97
  %vm105 = vmor %vm103, %vm104
  %v106 = vsel %vm105, %v97, %v102
  %v107 = vrsqrt.pop %v76
  %v108 = vmul.f32 %v107, %v76
  %v109 = vmul.f32 %v108, %v107
  %v110 = vmul.f32 0.5, %v109
  %v111 = vsub.f32 1.5, %v110
  %v112 = vmul.f32 %v107, %v111
  %vm113 = vweird.f32 %v76
  %vm114 = vweird.f32 %v107
  %vm115 = vmor %vm113, %vm114
  %v116 = vsel %vm115, %v107, %v112
  %v117 = vmul.f32 %v49, %v86
  %v118 = vmul.f32 %v50, %v96
  %v119 = vmul.f32 %v51, %v106
  %v120 = vmul.f32 %v52, %v116
  %v121 = vld [vmem:[%s3] sm:$0x1]
  %v123 = vperm.slane %v121, 0
  %v125 = vmul.f32 %v117, %v123
  %v126 = vmul.f32 %v118, %v123
  %v127 = vmul.f32 %v119, %v123
  %v128 = vmul.f32 %v120, %v123
  %v129 = vld [vmem:[%s4] sm:$0x1]
  %v131 = vperm.slane %v129, 0
  %v133 = vadd.f32 %v125, %v131
  %v134 = vadd.f32 %v126, %v131
  %v135 = vadd.f32 %v127, %v131
  %v136 = vadd.f32 %v128, %v131
  %v137 = vpack.c.bf16 %v134, %v133
  %v138 = vpack.c.bf16 %v136, %v135
  %v139 = vld [vmem:[%s1] sm:$0xff]
  %v140 = vld [vmem:[%s1 + $0x8] sm:$0xff]
  %v141 = vld [vmem:[%s1 + $0x10] sm:$0xff]
  %v142 = vld [vmem:[%s1 + $0x18] sm:$0xff]
  %v143 = vld [vmem:[%s1 + $0x20] sm:$0xff]
  %v144 = vld [vmem:[%s1 + $0x28] sm:$0xff]
  %v145 = vld [vmem:[%s1 + $0x30] sm:$0xff]
  %v146 = vld [vmem:[%s1 + $0x38] sm:$0xff]
  %v147 = vld [vmem:[%s2] sm:$0x3]
  %v149 = vperm.slane %v147, 0
  %v150 = vperm.slane %v147, 1
  %v161 = vunpack.c.l.b16 %v139
  %v162 = vunpack.c.h.b16 %v139
  %v163 = vunpack.c.l.b16 %v140
  %v164 = vunpack.c.h.b16 %v140
  %v165 = vunpack.c.l.b16 %v141
  %v166 = vunpack.c.h.b16 %v141
  %v167 = vunpack.c.l.b16 %v142
  %v168 = vunpack.c.h.b16 %v142
  %v169 = vunpack.c.l.b16 %v143
  %v170 = vunpack.c.h.b16 %v143
  %v171 = vunpack.c.l.b16 %v144
  %v172 = vunpack.c.h.b16 %v144
  %v173 = vunpack.c.l.b16 %v145
  %v174 = vunpack.c.h.b16 %v145
  %v175 = vunpack.c.l.b16 %v146
  %v176 = vunpack.c.h.b16 %v146
  %v177 = vpack.c.b16 %v163, %v161
  %v178 = vpack.c.b16 %v164, %v162
  %v179 = vpack.c.b16 %v167, %v165
  %v180 = vpack.c.b16 %v168, %v166
  %v181 = vpack.c.b16 %v171, %v169
  %v182 = vpack.c.b16 %v172, %v170
  %v183 = vpack.c.b16 %v175, %v173
  %v184 = vpack.c.b16 %v176, %v174
  %v194 = vsel %vm25, %v137, 0
  %v197 = vsel %vm25, %v138, 0
  %199 = vmatpush.bf16.msra.mxu0 0
  %200 = vmatpush.bf16.msra.mxu0 0
  %201 = vmatpush.bf16.msra.mxu0 0
  %202 = vmatpush.bf16.msra.mxu0 0
  %203 = vmatpush.bf16.msra.mxu0 %v183
  %204 = vmatpush.bf16.msra.mxu0 %v181
  %205 = vmatpush.bf16.msra.mxu0 %v179
  %206 = vmatpush.bf16.msra.mxu0 %v177
  %207 = vmatmul.bf16.gmra.mxu0 %v194
  %v208 = vpop.f32.mrf.mxu0
  %v209 = vadd.f32 %v149, %v208
  %v210 = vpop.f32.mrf.mxu0
  %v211 = vadd.f32 %v149, %v210
  %212 = vmatmul.bf16.gmra.mxu0 %v197
  %v213 = vpop.f32.mrf.mxu0
  %v214 = vadd.f32 %v149, %v213
  %v215 = vpop.f32.mrf.mxu0
  %v216 = vadd.f32 %v149, %v215
  %217 = vdwg.mxu0
  %218 = vmatpush.bf16.msra.mxu0 0
  %219 = vmatpush.bf16.msra.mxu0 0
  %220 = vmatpush.bf16.msra.mxu0 0
  %221 = vmatpush.bf16.msra.mxu0 0
  %222 = vmatpush.bf16.msra.mxu0 %v184
  %223 = vmatpush.bf16.msra.mxu0 %v182
  %224 = vmatpush.bf16.msra.mxu0 %v180
  %225 = vmatpush.bf16.msra.mxu0 %v178
  %226 = vmatmul.bf16.gmra.mxu0 %v194
  %v227 = vpop.f32.mrf.mxu0
  %v228 = vadd.f32 %v150, %v227
  %v229 = vpop.f32.mrf.mxu0
  %v230 = vadd.f32 %v150, %v229
  %231 = vmatmul.bf16.gmra.mxu0 %v197
  %v232 = vpop.f32.mrf.mxu0
  %v233 = vadd.f32 %v150, %v232
  %v234 = vpop.f32.mrf.mxu0
  %v235 = vadd.f32 %v150, %v234
  %236 = vdwg.mxu0
  %v237 = vxor.u32 %v209, 2147483648
  %v238 = vxor.u32 %v228, 2147483648
  %v239 = vxor.u32 %v211, 2147483648
  %v240 = vxor.u32 %v230, 2147483648
  %v241 = vxor.u32 %v214, 2147483648
  %v242 = vxor.u32 %v233, 2147483648
  %v243 = vxor.u32 %v216, 2147483648
  %v244 = vxor.u32 %v235, 2147483648
  %v245 = vmul.f32 %v237, 1.442695
  %v246 = vpow.pop %v245
  %v247 = vmul.f32 %v238, 1.442695
  %v248 = vpow.pop %v247
  %v249 = vmul.f32 %v239, 1.442695
  %v250 = vpow.pop %v249
  %v251 = vmul.f32 %v240, 1.442695
  %v252 = vpow.pop %v251
  %v253 = vmul.f32 %v241, 1.442695
  %v254 = vpow.pop %v253
  %v255 = vmul.f32 %v242, 1.442695
  %v256 = vpow.pop %v255
  %v257 = vmul.f32 %v243, 1.442695
  %v258 = vpow.pop %v257
  %v259 = vmul.f32 %v244, 1.442695
  %v260 = vpow.pop %v259
  %v261 = vadd.f32 %v246, 1.0
  %v262 = vadd.f32 %v248, 1.0
  %v263 = vadd.f32 %v250, 1.0
  %v264 = vadd.f32 %v252, 1.0
  %v265 = vadd.f32 %v254, 1.0
  %v266 = vadd.f32 %v256, 1.0
  %v267 = vadd.f32 %v258, 1.0
  %v268 = vadd.f32 %v260, 1.0
  %v269 = vrcp.pop %v261
  %v270 = vmul.f32 %v261, %v269
  %v271 = vsub.f32 1.0, %v270
  %v272 = vmul.f32 %v269, %v271
  %v273 = vadd.f32 %v269, %v272
  %vm274 = vweird.f32 %v261
  %vm275 = vweird.f32 %v269
  %vm276 = vmor %vm274, %vm275
  %v277 = vsel %vm276, %v269, %v273
  %v278 = vand.u32 2147483647, %v261
  %vm279 = vcmp.eq.f32.partialorder %v278, 8.507059e+37
  %v280 = vand.u32 %v261, 2147483648
  %v281 = vor.u32 1.1754944e-38, %v280
  %v282 = vsel %vm279, %v281, %v277
  %v283 = vmul.f32 1.0, %v282
  %v284 = vrcp.pop %v262
  %v285 = vmul.f32 %v262, %v284
  %v286 = vsub.f32 1.0, %v285
  %v287 = vmul.f32 %v284, %v286
  %v288 = vadd.f32 %v284, %v287
  %vm289 = vweird.f32 %v262
  %vm290 = vweird.f32 %v284
  %vm291 = vmor %vm289, %vm290
  %v292 = vsel %vm291, %v284, %v288
  %v293 = vand.u32 2147483647, %v262
  %vm294 = vcmp.eq.f32.partialorder %v293, 8.507059e+37
  %v295 = vand.u32 %v262, 2147483648
  %v296 = vor.u32 1.1754944e-38, %v295
  %v297 = vsel %vm294, %v296, %v292
  %v298 = vmul.f32 1.0, %v297
  %v299 = vrcp.pop %v263
  %v300 = vmul.f32 %v263, %v299
  %v301 = vsub.f32 1.0, %v300
  %v302 = vmul.f32 %v299, %v301
  %v303 = vadd.f32 %v299, %v302
  %vm304 = vweird.f32 %v263
  %vm305 = vweird.f32 %v299
  %vm306 = vmor %vm304, %vm305
  %v307 = vsel %vm306, %v299, %v303
  %v308 = vand.u32 2147483647, %v263
  %vm309 = vcmp.eq.f32.partialorder %v308, 8.507059e+37
  %v310 = vand.u32 %v263, 2147483648
  %v311 = vor.u32 1.1754944e-38, %v310
  %v312 = vsel %vm309, %v311, %v307
  %v313 = vmul.f32 1.0, %v312
  %v314 = vrcp.pop %v264
  %v315 = vmul.f32 %v264, %v314
  %v316 = vsub.f32 1.0, %v315
  %v317 = vmul.f32 %v314, %v316
  %v318 = vadd.f32 %v314, %v317
  %vm319 = vweird.f32 %v264
  %vm320 = vweird.f32 %v314
  %vm321 = vmor %vm319, %vm320
  %v322 = vsel %vm321, %v314, %v318
  %v323 = vand.u32 2147483647, %v264
  %vm324 = vcmp.eq.f32.partialorder %v323, 8.507059e+37
  %v325 = vand.u32 %v264, 2147483648
  %v326 = vor.u32 1.1754944e-38, %v325
  %v327 = vsel %vm324, %v326, %v322
  %v328 = vmul.f32 1.0, %v327
  %v329 = vrcp.pop %v265
  %v330 = vmul.f32 %v265, %v329
  %v331 = vsub.f32 1.0, %v330
  %v332 = vmul.f32 %v329, %v331
  %v333 = vadd.f32 %v329, %v332
  %vm334 = vweird.f32 %v265
  %vm335 = vweird.f32 %v329
  %vm336 = vmor %vm334, %vm335
  %v337 = vsel %vm336, %v329, %v333
  %v338 = vand.u32 2147483647, %v265
  %vm339 = vcmp.eq.f32.partialorder %v338, 8.507059e+37
  %v340 = vand.u32 %v265, 2147483648
  %v341 = vor.u32 1.1754944e-38, %v340
  %v342 = vsel %vm339, %v341, %v337
  %v343 = vmul.f32 1.0, %v342
  %v344 = vrcp.pop %v266
  %v345 = vmul.f32 %v266, %v344
  %v346 = vsub.f32 1.0, %v345
  %v347 = vmul.f32 %v344, %v346
  %v348 = vadd.f32 %v344, %v347
  %vm349 = vweird.f32 %v266
  %vm350 = vweird.f32 %v344
  %vm351 = vmor %vm349, %vm350
  %v352 = vsel %vm351, %v344, %v348
  %v353 = vand.u32 2147483647, %v266
  %vm354 = vcmp.eq.f32.partialorder %v353, 8.507059e+37
  %v355 = vand.u32 %v266, 2147483648
  %v356 = vor.u32 1.1754944e-38, %v355
  %v357 = vsel %vm354, %v356, %v352
  %v358 = vmul.f32 1.0, %v357
  %v359 = vrcp.pop %v267
  %v360 = vmul.f32 %v267, %v359
  %v361 = vsub.f32 1.0, %v360
  %v362 = vmul.f32 %v359, %v361
  %v363 = vadd.f32 %v359, %v362
  %vm364 = vweird.f32 %v267
  %vm365 = vweird.f32 %v359
  %vm366 = vmor %vm364, %vm365
  %v367 = vsel %vm366, %v359, %v363
  %v368 = vand.u32 2147483647, %v267
  %vm369 = vcmp.eq.f32.partialorder %v368, 8.507059e+37
  %v370 = vand.u32 %v267, 2147483648
  %v371 = vor.u32 1.1754944e-38, %v370
  %v372 = vsel %vm369, %v371, %v367
  %v373 = vmul.f32 1.0, %v372
  %v374 = vrcp.pop %v268
  %v375 = vmul.f32 %v268, %v374
  %v376 = vsub.f32 1.0, %v375
  %v377 = vmul.f32 %v374, %v376
  %v378 = vadd.f32 %v374, %v377
  %vm379 = vweird.f32 %v268
  %vm380 = vweird.f32 %v374
  %vm381 = vmor %vm379, %vm380
  %v382 = vsel %vm381, %v374, %v378
  %v383 = vand.u32 2147483647, %v268
  %vm384 = vcmp.eq.f32.partialorder %v383, 8.507059e+37
  %v385 = vand.u32 %v268, 2147483648
  %v386 = vor.u32 1.1754944e-38, %v385
  %v387 = vsel %vm384, %v386, %v382
  %v388 = vmul.f32 1.0, %v387
  %v389 = vmul.f32 %v209, %v283
  %v390 = vmul.f32 %v228, %v298
  %v391 = vmul.f32 %v211, %v313
  %v392 = vmul.f32 %v230, %v328
  %v393 = vmul.f32 %v214, %v343
  %v394 = vmul.f32 %v233, %v358
  %v395 = vmul.f32 %v216, %v373
  %v396 = vmul.f32 %v235, %v388
  %397 = vst [vmem:[%s5] sm:$0xff] %v389
  %398 = vst [vmem:[%s5 + $0x8] sm:$0xff] %v390
  %399 = vst [vmem:[%s5 + $0x10] sm:$0xff] %v391
  %400 = vst [vmem:[%s5 + $0x18] sm:$0xff] %v392
  %401 = vst [vmem:[%s5 + $0x20] sm:$0xff] %v393
  %402 = vst [vmem:[%s5 + $0x28] sm:$0xff] %v394
  %403 = vst [vmem:[%s5 + $0x30] sm:$0xff] %v395
  %404 = vst [vmem:[%s5 + $0x38] sm:$0xff] %v396
  // Predicated region
  $region22: #{conformer_ctc_forward.28} parent=0 // pred_check
    _
  $region23: #{conformer_ctc_forward.28} parent=0 // pred_check_branch
    %406 = sbr.rel (0) target = $region25
  $region24: #{conformer_ctc_forward.28} parent=0 // pred_region
    _
  $region25: #{conformer_ctc_forward.28} parent=0 // pred_fallthru
    _
  // Predicated region
  $region26: #{conformer_ctc_forward.28} parent=0 // pred_check
    _
  $region27: #{conformer_ctc_forward.28} parent=0 // pred_check_branch
    %408 = sbr.rel (0) target = $region29
  $region28: #{conformer_ctc_forward.28} parent=0 // pred_region
    _
  $region29: #{conformer_ctc_forward.28} parent=0 // pred_fallthru
    _

// kernel: conformer_ctc_forward.27
$region0: #{conformer_ctc_forward.27}
  #allocation0 [shape = 'u32[]', space=smem, size = 0x4, offset = 0x4, fixed_abs, tag = 'smem constant byte address 0x4 - core index']
  #allocation1 [shape = 'u32[72,128]{1,0:T(1,128)}', space=vmem, size = 0x9000, scoped, tag = 'internal scratch']
  #allocation2 [shape = 'f32[22,128]{1,0:T(8,128)}', space=vmem, size = 0x3000, scoped, tag = 'scratch operand']
  %s0 = inlined_call_operand.vmem [shape: bf16[2,16,128], index: 0, kind: input, shape index: {}]
  %s1 = inlined_call_operand.vmem [shape: f32[7,128], index: 1, kind: input, shape index: {}]
  %s2 = inlined_call_operand.vmem [shape: f32[1,128], index: 2, kind: input, shape index: {}]
  %s3 = inlined_call_operand.vmem [shape: f32[1,128], index: 3, kind: input, shape index: {}]
  %s4 = inlined_call_operand.vmem [shape: f32[1,128], index: 4, kind: input, shape index: {}]
  %s5 = inlined_call_operand.vmem [shape: bf16[128,64], index: 5, kind: input, shape index: {}]
  %s6 = inlined_call_operand.vmem [shape: f32[1,64], index: 6, kind: input, shape index: {}]
  %s7 = inlined_call_operand.vmem [shape: f32[2,16,64], index: 7, kind: input, shape index: {}]
  %s8 = inlined_call_operand.vmem [shape: f32[2,16,64], index: 8, kind: output, shape index: {}]
  %s9 = sld [smem:[#allocation0]]
  $region65: #{conformer_ctc_forward.27} parent=0
    _
  %s11 = ssub.s32 1, %s9
  %s12 = scalar_select 0, %s11, %s9
  loop: start=0, step=1, limit=4
  $region2: #{conformer_ctc_forward.27} parent=0 // loop_pre_header
    _
  $region3: #{conformer_ctc_forward.27} parent=0 // loop_header
    %s14 = sphi 0, %s18
    %p15 = scmp.ge.s32.totalorder %s14, 4
    %s24 = sphi 0, %s26
    %s27 = sphi 0, %s24
    %s28 = sphi 0, %s27
    %s44 = sphi 0, %s28
    %s48 = sphi 0, %s48
    %s50 = sphi 0, %s48
    %s51 = sphi 0, %s50
    %s65 = sphi 0, %s51
    %s69 = sphi 0, %s69
    %s71 = sphi 0, %s69
    %s72 = sphi 0, %s71
    %s86 = sphi 0, %s72
    %s90 = sphi 0, %s90
    %s92 = sphi 0, %s90
    %s93 = sphi 0, %s92
    %s107 = sphi 0, %s93
    %s111 = sphi 0, %s111
    %s113 = sphi 0, %s111
    %s114 = sphi 0, %s113
    %s128 = sphi 0, %s114
    %s132 = sphi 0, %s132
    %s134 = sphi 0, %s132
    %s135 = sphi 0, %s134
    %s149 = sphi 0, %s135
    %s153 = sphi 0, %s153
    %s155 = sphi 0, %s153
    %s156 = sphi 0, %s155
    %s170 = sphi 0, %s156
    %s176 = sphi 0, %s178
    %s179 = sphi 0, %s176
    %s180 = sphi 0, %s179
    %s196 = sphi 0, %s180
    %s202 = sphi 0, %s204
    %s205 = sphi 0, %s202
    %s206 = sphi 0, %s205
    %s222 = sphi 0, %s206
  $region4: #{conformer_ctc_forward.27} parent=0 // loop_header_branch
    %17 = sbr.rel (%p15) target = $region8
  $region5: #{conformer_ctc_forward.27} parent=0 // loop_body
    %s19 = ssub.s32 %s14, 1
    %s20 = ssub.s32 %s14, 2
    %s21 = sadd.s32 %s14, 1
    %s22 = ssub.s32 %s14, %s21
    %p23 = scmp.eq.s32.totalorder %s22, 0
    %s25 = sadd.s32 %s24, 1
    %s26 = scalar_select %p23, %s24, %s25
    %p29 = pneg %p23
    %p30 = scmp.eq.s32.totalorder %s14, 1
    %p31 = por %p29, %p30
    %p32 = scmp.ne.s32.totalorder %s24, %s27
    %p33 = scmp.eq.s32.totalorder %s14, 0
    %p34 = por %p32, %p33
    %p35 = scmp.ne.s32.totalorder %s24, %s27
    %p36 = scmp.eq.s32.totalorder %s19, 1
    %p37 = por %p35, %p36
    %p38 = scmp.ne.s32.totalorder %s27, %s28
    %p39 = scmp.eq.s32.totalorder %s19, 0
    %p40 = por %p38, %p39
    %p41 = scmp.ne.s32.totalorder %s27, %s28
    %p42 = scmp.eq.s32.totalorder %s20, 1
    %p43 = por %p41, %p42
    %p45 = scmp.ne.s32.totalorder %s28, %s44
    %p46 = scmp.eq.s32.totalorder %s20, 0
    %p47 = por %p45, %p46
    %s49 = sadd.s32 %s48, 1
    %p52 = scmp.eq.s32.totalorder %s14, 1
    %p53 = scmp.ne.s32.totalorder %s48, %s50
    %p54 = scmp.eq.s32.totalorder %s14, 0
    %p55 = por %p53, %p54
    %p56 = scmp.ne.s32.totalorder %s48, %s50
    %p57 = scmp.eq.s32.totalorder %s19, 1
    %p58 = por %p56, %p57
    %p59 = scmp.ne.s32.totalorder %s50, %s51
    %p60 = scmp.eq.s32.totalorder %s19, 0
    %p61 = por %p59, %p60
    %p62 = scmp.ne.s32.totalorder %s50, %s51
    %p63 = scmp.eq.s32.totalorder %s20, 1
    %p64 = por %p62, %p63
    %p66 = scmp.ne.s32.totalorder %s51, %s65
    %p67 = scmp.eq.s32.totalorder %s20, 0
    %p68 = por %p66, %p67
    %s70 = sadd.s32 %s69, 1
    %p73 = scmp.eq.s32.totalorder %s14, 1
    %p74 = scmp.ne.s32.totalorder %s69, %s71
    %p75 = scmp.eq.s32.totalorder %s14, 0
    %p76 = por %p74, %p75
    %p77 = scmp.ne.s32.totalorder %s69, %s71
    %p78 = scmp.eq.s32.totalorder %s19, 1
    %p79 = por %p77, %p78
    %p80 = scmp.ne.s32.totalorder %s71, %s72
    %p81 = scmp.eq.s32.totalorder %s19, 0
    %p82 = por %p80, %p81
    %p83 = scmp.ne.s32.totalorder %s71, %s72
    %p84 = scmp.eq.s32.totalorder %s20, 1
    %p85 = por %p83, %p84
    %p87 = scmp.ne.s32.totalorder %s72, %s86
    %p88 = scmp.eq.s32.totalorder %s20, 0
    %p89 = por %p87, %p88
    %s91 = sadd.s32 %s90, 1
    %p94 = scmp.eq.s32.totalorder %s14, 1
    %p95 = scmp.ne.s32.totalorder %s90, %s92
    %p96 = scmp.eq.s32.totalorder %s14, 0
    %p97 = por %p95, %p96
    %p98 = scmp.ne.s32.totalorder %s90, %s92
    %p99 = scmp.eq.s32.totalorder %s19, 1
    %p100 = por %p98, %p99
    %p101 = scmp.ne.s32.totalorder %s92, %s93
    %p102 = scmp.eq.s32.totalorder %s19, 0
    %p103 = por %p101, %p102
    %p104 = scmp.ne.s32.totalorder %s92, %s93
    %p105 = scmp.eq.s32.totalorder %s20, 1
    %p106 = por %p104, %p105
    %p108 = scmp.ne.s32.totalorder %s93, %s107
    %p109 = scmp.eq.s32.totalorder %s20, 0
    %p110 = por %p108, %p109
    %s112 = sadd.s32 %s111, 1
    %p115 = scmp.eq.s32.totalorder %s14, 1
    %p116 = scmp.ne.s32.totalorder %s111, %s113
    %p117 = scmp.eq.s32.totalorder %s14, 0
    %p118 = por %p116, %p117
    %p119 = scmp.ne.s32.totalorder %s111, %s113
    %p120 = scmp.eq.s32.totalorder %s19, 1
    %p121 = por %p119, %p120
    %p122 = scmp.ne.s32.totalorder %s113, %s114
    %p123 = scmp.eq.s32.totalorder %s19, 0
    %p124 = por %p122, %p123
    %p125 = scmp.ne.s32.totalorder %s113, %s114
    %p126 = scmp.eq.s32.totalorder %s20, 1
    %p127 = por %p125, %p126
    %p129 = scmp.ne.s32.totalorder %s114, %s128
    %p130 = scmp.eq.s32.totalorder %s20, 0
    %p131 = por %p129, %p130
    %s133 = sadd.s32 %s132, 1
    %p136 = scmp.eq.s32.totalorder %s14, 1
    %p137 = scmp.ne.s32.totalorder %s132, %s134
    %p138 = scmp.eq.s32.totalorder %s14, 0
    %p139 = por %p137, %p138
    %p140 = scmp.ne.s32.totalorder %s132, %s134
    %p141 = scmp.eq.s32.totalorder %s19, 1
    %p142 = por %p140, %p141
    %p143 = scmp.ne.s32.totalorder %s134, %s135
    %p144 = scmp.eq.s32.totalorder %s19, 0
    %p145 = por %p143, %p144
    %p146 = scmp.ne.s32.totalorder %s134, %s135
    %p147 = scmp.eq.s32.totalorder %s20, 1
    %p148 = por %p146, %p147
    %p150 = scmp.ne.s32.totalorder %s135, %s149
    %p151 = scmp.eq.s32.totalorder %s20, 0
    %p152 = por %p150, %p151
    %s154 = sadd.s32 %s153, 1
    %p157 = scmp.eq.s32.totalorder %s14, 1
    %p158 = scmp.ne.s32.totalorder %s153, %s155
    %p159 = scmp.eq.s32.totalorder %s14, 0
    %p160 = por %p158, %p159
    %p161 = scmp.ne.s32.totalorder %s153, %s155
    %p162 = scmp.eq.s32.totalorder %s19, 1
    %p163 = por %p161, %p162
    %p164 = scmp.ne.s32.totalorder %s155, %s156
    %p165 = scmp.eq.s32.totalorder %s19, 0
    %p166 = por %p164, %p165
    %p167 = scmp.ne.s32.totalorder %s155, %s156
    %p168 = scmp.eq.s32.totalorder %s20, 1
    %p169 = por %p167, %p168
    %p171 = scmp.ne.s32.totalorder %s156, %s170
    %p172 = scmp.eq.s32.totalorder %s20, 0
    %p173 = por %p171, %p172
    %s174 = ssub.s32 %s14, %s21
    %p175 = scmp.eq.s32.totalorder %s174, 0
    %s177 = sadd.s32 %s176, 1
    %s178 = scalar_select %p175, %s176, %s177
    %p181 = pneg %p175
    %p182 = scmp.eq.s32.totalorder %s14, 1
    %p183 = por %p181, %p182
    %p184 = scmp.ne.s32.totalorder %s176, %s179
    %p185 = scmp.eq.s32.totalorder %s14, 0
    %p186 = por %p184, %p185
    %p187 = scmp.ne.s32.totalorder %s176, %s179
    %p188 = scmp.eq.s32.totalorder %s19, 1
    %p189 = por %p187, %p188
    %p190 = scmp.ne.s32.totalorder %s179, %s180
    %p191 = scmp.eq.s32.totalorder %s19, 0
    %p192 = por %p190, %p191
    %p193 = scmp.ne.s32.totalorder %s179, %s180
    %p194 = scmp.eq.s32.totalorder %s20, 1
    %p195 = por %p193, %p194
    %p197 = scmp.ne.s32.totalorder %s180, %s196
    %p198 = scmp.eq.s32.totalorder %s20, 0
    %p199 = por %p197, %p198
    %s200 = ssub.s32 %s14, %s21
    %p201 = scmp.eq.s32.totalorder %s200, 0
    %s203 = sadd.s32 %s202, 1
    %s204 = scalar_select %p201, %s202, %s203
    %p207 = pneg %p201
    %p208 = scmp.eq.s32.totalorder %s14, 1
    %p209 = por %p207, %p208
    %p210 = scmp.ne.s32.totalorder %s202, %s205
    %p211 = scmp.eq.s32.totalorder %s14, 0
    %p212 = por %p210, %p211
    %p213 = scmp.ne.s32.totalorder %s202, %s205
    %p214 = scmp.eq.s32.totalorder %s19, 1
    %p215 = por %p213, %p214
    %p216 = scmp.ne.s32.totalorder %s205, %s206
    %p217 = scmp.eq.s32.totalorder %s19, 0
    %p218 = por %p216, %p217
    %p219 = scmp.ne.s32.totalorder %s205, %s206
    %p220 = scmp.eq.s32.totalorder %s20, 1
    %p221 = por %p219, %p220
    %p223 = scmp.ne.s32.totalorder %s206, %s222
    %p224 = scmp.eq.s32.totalorder %s20, 0
    %p225 = por %p223, %p224
    %p226 = scmp.le.s32.totalorder 1, %s14
    %p227 = scmp.lt.s32.totalorder %s14, 3
    %p228 = pnand %p226, %p227
    %p229 = pneg %p228
    // Predicated region
    $region9: #{conformer_ctc_forward.27} parent=5 // pred_check
      _
    $region10: #{conformer_ctc_forward.27} parent=5 // pred_check_branch
      %231 = sbr.rel (%p228) target = $region12
    $region11: #{conformer_ctc_forward.27} parent=5 // pred_region
      %s232 = ssub.s32 %s14, 1
      // Predicated region
      $region13: #{conformer_ctc_forward.27} parent=11 // pred_check
        %p233 = pneg %p61
      $region14: #{conformer_ctc_forward.27} parent=11 // pred_check_branch
        %235 = sbr.rel (%p233) target = $region16
      $region15: #{conformer_ctc_forward.27} parent=11 // pred_region
        _
      $region16: #{conformer_ctc_forward.27} parent=11 // pred_fallthru
        _
      // Predicated region
      $region17: #{conformer_ctc_forward.27} parent=11 // pred_check
        %p236 = pneg %p82
      $region18: #{conformer_ctc_forward.27} parent=11 // pred_check_branch
        %238 = sbr.rel (%p236) target = $region20
      $region19: #{conformer_ctc_forward.27} parent=11 // pred_region
        _
      $region20: #{conformer_ctc_forward.27} parent=11 // pred_fallthru
        _
      // Predicated region
      $region21: #{conformer_ctc_forward.27} parent=11 // pred_check
        %p239 = pneg %p103
      $region22: #{conformer_ctc_forward.27} parent=11 // pred_check_branch
        %241 = sbr.rel (%p239) target = $region24
      $region23: #{conformer_ctc_forward.27} parent=11 // pred_region
        _
      $region24: #{conformer_ctc_forward.27} parent=11 // pred_fallthru
        _
      // Predicated region
      $region25: #{conformer_ctc_forward.27} parent=11 // pred_check
        %p242 = pneg %p124
      $region26: #{conformer_ctc_forward.27} parent=11 // pred_check_branch
        %244 = sbr.rel (%p242) target = $region28
      $region27: #{conformer_ctc_forward.27} parent=11 // pred_region
        _
      $region28: #{conformer_ctc_forward.27} parent=11 // pred_fallthru
        _
      // Predicated region
      $region29: #{conformer_ctc_forward.27} parent=11 // pred_check
        %p245 = pneg %p145
      $region30: #{conformer_ctc_forward.27} parent=11 // pred_check_branch
        %247 = sbr.rel (%p245) target = $region32
      $region31: #{conformer_ctc_forward.27} parent=11 // pred_region
        _
      $region32: #{conformer_ctc_forward.27} parent=11 // pred_fallthru
        _
      // Predicated region
      $region33: #{conformer_ctc_forward.27} parent=11 // pred_check
        %p248 = pneg %p166
      $region34: #{conformer_ctc_forward.27} parent=11 // pred_check_branch
        %250 = sbr.rel (%p248) target = $region36
      $region35: #{conformer_ctc_forward.27} parent=11 // pred_region
        _
      $region36: #{conformer_ctc_forward.27} parent=11 // pred_fallthru
        _
    $region12: #{conformer_ctc_forward.27} parent=5 // pred_fallthru
      _
    %p251 = scmp.lt.s32.totalorder %s14, 2
    // Predicated region
    $region37: #{conformer_ctc_forward.27} parent=5 // pred_check
      %p252 = pneg %p251
    $region38: #{conformer_ctc_forward.27} parent=5 // pred_check_branch
      %254 = sbr.rel (%p252) target = $region40
    $region39: #{conformer_ctc_forward.27} parent=5 // pred_region
      // Predicated region
      $region41: #{conformer_ctc_forward.27} parent=39 // pred_check
        %p255 = pneg %p34
      $region42: #{conformer_ctc_forward.27} parent=39 // pred_check_branch
        %257 = sbr.rel (%p255) target = $region44
      $region43: #{conformer_ctc_forward.27} parent=39 // pred_region
        %p258 = scmp.lt.s32.totalorder %s14, 1
        %s259 = scalar_select %p258, %s14, 1
        %s260 = smul.addr %s259, 2
        %s261 = smul.addr %s260, 4
        %s262 = scalar_lea.vmem %s0, %s261
      $region44: #{conformer_ctc_forward.27} parent=39 // pred_fallthru
        _
      // Predicated region
      $region45: #{conformer_ctc_forward.27} parent=39 // pred_check
        %p263 = pneg %p186
      $region46: #{conformer_ctc_forward.27} parent=39 // pred_check_branch
        %265 = sbr.rel (%p263) target = $region48
      $region47: #{conformer_ctc_forward.27} parent=39 // pred_region
        %p266 = scmp.lt.s32.totalorder %s14, 1
        %s267 = scalar_select %p266, %s14, 1
        %s268 = smul.addr %s267, 2
        %s269 = smul.addr %s268, 8
        %s270 = scalar_lea.vmem %s7, %s269
      $region48: #{conformer_ctc_forward.27} parent=39 // pred_fallthru
        _
    $region40: #{conformer_ctc_forward.27} parent=5 // pred_fallthru
      _
    %p271 = scmp.le.s32.totalorder 1, %s14
    %p272 = scmp.lt.s32.totalorder %s14, 3
    %p273 = pnand %p271, %p272
    %p274 = pneg %p273
    // Predicated region
    $region49: #{conformer_ctc_forward.27} parent=5 // pred_check
      _
    $region50: #{conformer_ctc_forward.27} parent=5 // pred_check_branch
      %276 = sbr.rel (%p273) target = $region52
    $region51: #{conformer_ctc_forward.27} parent=5 // pred_region
      %s277 = ssub.s32 %s14, 1
      %p278 = scmp.lt.s32.totalorder %s19, 1
      %s279 = scalar_select %p278, %s19, 1
      %s280 = smul.addr %s279, 2
      %s281 = smul.addr %s280, 4
      %s282 = scalar_lea.vmem %s0, %s281
      %p283 = pneg %p40
      %p284 = pneg %p37
      %p285 = pneg %p61
      %p286 = pneg %p58
      %p287 = pneg %p82
      %p288 = pneg %p79
      %p289 = pneg %p103
      %p290 = pneg %p100
      %p291 = pneg %p124
      %p292 = pneg %p121
      %p293 = pneg %p145
      %p294 = pneg %p142
      %p295 = pneg %p166
      %p296 = pneg %p163
      %p297 = scmp.lt.s32.totalorder %s19, 1
      %s298 = scalar_select %p297, %s19, 1
      %s299 = smul.addr %s298, 2
      %s300 = smul.addr %s299, 8
      %s301 = scalar_lea.vmem %s7, %s300
      %p302 = pneg %p192
      %p303 = pneg %p189
      %p304 = pneg %p218
      %p305 = pneg %p215
      %p306 = scmp.lt.s32.totalorder %s19, 1
      %s307 = scalar_select %p306, %s19, 1
      %s308 = smul.addr %s307, 2
      %s309 = smul.addr %s308, 8
      %s310 = scalar_lea.vmem %s8, %s309
      %p311 = scmp.lt.s32.totalorder %s19, 1
      %s312 = scalar_select %p311, %s19, 1
      %s313 = smul.addr %s312, 2
      %s314 = smul.addr %s313, 4
      %s315 = scalar_lea.vmem %s0, %s314
      %p316 = scmp.lt.s32.totalorder %s19, 1
      %s317 = scalar_select %p316, %s19, 1
      %s318 = smul.addr %s317, 2
      %s319 = smul.addr %s318, 8
      %s320 = scalar_lea.vmem %s7, %s319
      %p321 = scmp.lt.s32.totalorder %s19, 1
      %s322 = scalar_select %p321, %s19, 1
      %s323 = smul.addr %s322, 2
      %s324 = smul.addr %s323, 8
      %s325 = scalar_lea.vmem %s8, %s324
      %326 = vst [vmem:[#allocation2] sm:$0xff] 0.0
      %327 = vst [vmem:[#allocation2 + $0x8] sm:$0xff] 0.0
      %328 = vst [vmem:[#allocation2 + $0x10] sm:$0x3f] 0.0
      %v329 = vld [vmem:[%s315] sm:$0xf]
      %v330 = vld [vmem:[%s315 + $0x4] sm:$0xf]
      %v331 = vunpack.c.l.bf16 %v329
      %v332 = vunpack.c.l.bf16 %v330
      %333 = vst [vmem:[#allocation2 + $0x3] sm:$0xff] %v331
      %334 = vst [vmem:[#allocation2 + $0xb] sm:$0xff] %v332
      %v335 = vld [vmem:[#allocation2] sm:$0xff]
      %v336 = vld [vmem:[#allocation2 + $0x8] sm:$0xff]
      %v337 = vld [vmem:[#allocation2 + $0x10] sm:$0x3f]
      %v338 = vld [vmem:[%s1] sm:$0x7f]
      %v339 = vperm.slane %v338, 0
      %v340 = vmul.f32 %v335, %v339
      %v341 = vmul.f32 %v336, %v339
      %v342 = vadd.f32 %v340, 0.0
      %v343 = vadd.f32 %v341, 0.0
      %v344 = vperm.slane %v338, 1
      %v345 = vmul.f32 %v335, %v344
      %v346 = vmul.f32 %v336, %v344
      %v347 = vmul.f32 %v337, %v344
      %vm351 = vcmask 1046528
      %v352 = vrot.slane %v345, 1
      %v353 = vrot.slane %v346, 1
      %v354 = vsel %vm351, %v352, %v353
      %v355 = vrot.slane %v347, 1
      %v356 = vsel %vm351, %v353, %v355
      %v359 = vadd.f32 %v342, %v354
      %v360 = vadd.f32 %v343, %v356
      %v361 = vperm.slane %v338, 2
      %v362 = vmul.f32 %v335, %v361
      %v363 = vmul.f32 %v336, %v361
      %v364 = vmul.f32 %v337, %v361
      %vm368 = vcmask 1045504
      %v369 = vrot.slane %v362, 2
      %v370 = vrot.slane %v363, 2
      %v371 = vsel %vm368, %v369, %v370
      %v372 = vrot.slane %v364, 2
      %v373 = vsel %vm368, %v370, %v372
      %v376 = vadd.f32 %v359, %v371
      %v377 = vadd.f32 %v360, %v373
      %v378 = vperm.slane %v338, 3
      %v379 = vmul.f32 %v335, %v378
      %v380 = vmul.f32 %v336, %v378
      %v381 = vmul.f32 %v337, %v378
      %vm385 = vcmask 1044480
      %v386 = vrot.slane %v379, 3
      %v387 = vrot.slane %v380, 3
      %v388 = vsel %vm385, %v386, %v387
      %v389 = vrot.slane %v381, 3
      %v390 = vsel %vm385, %v387, %v389
      %v393 = vadd.f32 %v376, %v388
      %v394 = vadd.f32 %v377, %v390
      %v395 = vperm.slane %v338, 4
      %v396 = vmul.f32 %v335, %v395
      %v397 = vmul.f32 %v336, %v395
      %v398 = vmul.f32 %v337, %v395
      %vm402 = vcmask 1043456
      %v403 = vrot.slane %v396, 4
      %v404 = vrot.slane %v397, 4
      %v405 = vsel %vm402, %v403, %v404
      %v406 = vrot.slane %v398, 4
      %v407 = vsel %vm402, %v404, %v406
      %v410 = vadd.f32 %v393, %v405
      %v411 = vadd.f32 %v394, %v407
      %v412 = vperm.slane %v338, 5
      %v413 = vmul.f32 %v335, %v412
      %v414 = vmul.f32 %v336, %v412
      %v415 = vmul.f32 %v337, %v412
      %vm419 = vcmask 1042432
      %v420 = vrot.slane %v413, 5
      %v421 = vrot.slane %v414, 5
      %v422 = vsel %vm419, %v420, %v421
      %v423 = vrot.slane %v415, 5
      %v424 = vsel %vm419, %v421, %v423
      %v427 = vadd.f32 %v410, %v422
      %v428 = vadd.f32 %v411, %v424
      %v429 = vperm.slane %v338, 6
      %v430 = vmul.f32 %v335, %v429
      %v431 = vmul.f32 %v336, %v429
      %v432 = vmul.f32 %v337, %v429
      %vm436 = vcmask 1041408
      %v437 = vrot.slane %v430, 6
      %v438 = vrot.slane %v431, 6
      %v439 = vsel %vm436, %v437, %v438
      %v440 = vrot.slane %v432, 6
      %v441 = vsel %vm436, %v438, %v440
      %v444 = vadd.f32 %v427, %v439
      %v445 = vadd.f32 %v428, %v441
      %v446 = vld [vmem:[%s2] sm:$0x1]
      %v448 = vperm.slane %v446, 0
      %v450 = vadd.f32 %v444, %v448
      %v451 = vadd.f32 %v445, %v448
      %v452 = vld [vmem:[%s3] sm:$0x1]
      %v454 = vperm.slane %v452, 0
      %v456 = vmul.f32 %v450, %v454
      %v457 = vmul.f32 %v451, %v454
      %v458 = vld [vmem:[%s4] sm:$0x1]
      %v460 = vperm.slane %v458, 0
      %v462 = vadd.f32 %v456, %v460
      %v463 = vadd.f32 %v457, %v460
      %v464 = vxor.u32 %v462, 2147483648
      %v465 = vxor.u32 %v463, 2147483648
      %v466 = vmul.f32 %v464, 1.442695
      %v467 = vpow.pop %v466
      %v468 = vmul.f32 %v465, 1.442695
      %v469 = vpow.pop %v468
      %v470 = vadd.f32 %v467, 1.0
      %v471 = vadd.f32 %v469, 1.0
      %v472 = vrcp.pop %v470
      %v473 = vmul.f32 %v470, %v472
      %v474 = vsub.f32 1.0, %v473
      %v475 = vmul.f32 %v472, %v474
      %v476 = vadd.f32 %v472, %v475
      %vm477 = vweird.f32 %v470
      %vm478 = vweird.f32 %v472
      %vm479 = vmor %vm477, %vm478
      %v480 = vsel %vm479, %v472, %v476
      %v481 = vand.u32 2147483647, %v470
      %vm482 = vcmp.eq.f32.partialorder %v481, 8.507059e+37
      %v483 = vand.u32 %v470, 2147483648
      %v484 = vor.u32 1.1754944e-38, %v483
      %v485 = vsel %vm482, %v484, %v480
      %v486 = vmul.f32 1.0, %v485
      %v487 = vrcp.pop %v471
      %v488 = vmul.f32 %v471, %v487
      %v489 = vsub.f32 1.0, %v488
      %v490 = vmul.f32 %v487, %v489
      %v491 = vadd.f32 %v487, %v490
      %vm492 = vweird.f32 %v471
      %vm493 = vweird.f32 %v487
      %vm494 = vmor %vm492, %vm493
      %v495 = vsel %vm494, %v487, %v491
      %v496 = vand.u32 2147483647, %v471
      %vm497 = vcmp.eq.f32.partialorder %v496, 8.507059e+37
      %v498 = vand.u32 %v471, 2147483648
      %v499 = vor.u32 1.1754944e-38, %v498
      %v500 = vsel %vm497, %v499, %v495
      %v501 = vmul.f32 1.0, %v500
      %v502 = vmul.f32 %v462, %v486
      %v503 = vmul.f32 %v463, %v501
      %v504 = vpack.c.bf16 %v503, %v502
      %v505 = vld [vmem:[%s5] sm:$0xf]
      %v506 = vld [vmem:[%s5 + $0x4] sm:$0xf]
      %v507 = vld [vmem:[%s5 + $0x8] sm:$0xf]
      %v508 = vld [vmem:[%s5 + $0xc] sm:$0xf]
      %v509 = vld [vmem:[%s5 + $0x10] sm:$0xf]
      %v510 = vld [vmem:[%s5 + $0x14] sm:$0xf]
      %v511 = vld [vmem:[%s5 + $0x18] sm:$0xf]
      %v512 = vld [vmem:[%s5 + $0x1c] sm:$0xf]
      %v513 = vld [vmem:[%s5 + $0x20] sm:$0xf]
      %v514 = vld [vmem:[%s5 + $0x24] sm:$0xf]
      %v515 = vld [vmem:[%s5 + $0x28] sm:$0xf]
      %v516 = vld [vmem:[%s5 + $0x2c] sm:$0xf]
      %v517 = vld [vmem:[%s5 + $0x30] sm:$0xf]
      %v518 = vld [vmem:[%s5 + $0x34] sm:$0xf]
      %v519 = vld [vmem:[%s5 + $0x38] sm:$0xf]
      %v520 = vld [vmem:[%s5 + $0x3c] sm:$0xf]
      %v521 = vld [vmem:[%s6] sm:$0x1]
      %v523 = vperm.slane %v521, 0
      %v541 = vunpack.c.l.b16 %v505
      %v542 = vunpack.c.l.b16 %v506
      %v543 = vunpack.c.l.b16 %v507
      %v544 = vunpack.c.l.b16 %v508
      %v545 = vunpack.c.l.b16 %v509
      %v546 = vunpack.c.l.b16 %v510
      %v547 = vunpack.c.l.b16 %v511
      %v548 = vunpack.c.l.b16 %v512
      %v549 = vunpack.c.l.b16 %v513
      %v550 = vunpack.c.l.b16 %v514
      %v551 = vunpack.c.l.b16 %v515
      %v552 = vunpack.c.l.b16 %v516
      %v553 = vunpack.c.l.b16 %v517
      %v554 = vunpack.c.l.b16 %v518
      %v555 = vunpack.c.l.b16 %v519
      %v556 = vunpack.c.l.b16 %v520
      %v557 = vpack.c.b16 %v542, %v541
      %v558 = vpack.c.b16 %v544, %v543
      %v559 = vpack.c.b16 %v546, %v545
      %v560 = vpack.c.b16 %v548, %v547
      %v561 = vpack.c.b16 %v550, %v549
      %v562 = vpack.c.b16 %v552, %v551
      %v563 = vpack.c.b16 %v554, %v553
      %v564 = vpack.c.b16 %v556, %v555
      %573 = vmatpush.bf16.msra.mxu0 %v564
      %574 = vmatpush.bf16.msra.mxu0 %v563
      %575 = vmatpush.bf16.msra.mxu0 %v562
      %576 = vmatpush.bf16.msra.mxu0 %v561
      %577 = vmatpush.bf16.msra.mxu0 %v560
      %578 = vmatpush.bf16.msra.mxu0 %v559
      %579 = vmatpush.bf16.msra.mxu0 %v558
      %580 = vmatpush.bf16.msra.mxu0 %v557
      %581 = vmatmul.bf16.gmra.mxu0 %v504
      %v582 = vpop.f32.mrf.mxu0
      %v583 = vadd.f32 %v523, %v582
      %v584 = vpop.f32.mrf.mxu0
      %v585 = vadd.f32 %v523, %v584
      %586 = vdwg.mxu0
      %v587 = vld [vmem:[%s320] sm:$0xff]
      %v588 = vld [vmem:[%s320 + $0x8] sm:$0xff]
      %v589 = vadd.f32 %v583, %v587
      %v590 = vadd.f32 %v585, %v588
      %vm591 = vcmask 523264
      %592 = vst.msk [vmem:[%s325] sm:$0xff] %vm591, %v589
      %593 = vst.msk [vmem:[%s325 + $0x8] sm:$0xff] %vm591, %v590
      %p594 = scmp.lt.s32.totalorder %s19, 1
      %s595 = scalar_select %p594, %s19, 1
      %s596 = smul.addr %s595, 2
      %s597 = smul.addr %s596, 8
      %s598 = scalar_lea.vmem %s8, %s597
      // Predicated region
      $region53: #{conformer_ctc_forward.27} parent=51 // pred_check
        %p599 = pneg %p215
      $region54: #{conformer_ctc_forward.27} parent=51 // pred_check_branch
        %601 = sbr.rel (%p599) target = $region56
      $region55: #{conformer_ctc_forward.27} parent=51 // pred_region
        _
      $region56: #{conformer_ctc_forward.27} parent=51 // pred_fallthru
        _
    $region52: #{conformer_ctc_forward.27} parent=5 // pred_fallthru
      _
    %p602 = scmp.le.s32.totalorder 2, %s14
    // Predicated region
    $region57: #{conformer_ctc_forward.27} parent=5 // pred_check
      %p603 = pneg %p602
    $region58: #{conformer_ctc_forward.27} parent=5 // pred_check_branch
      %605 = sbr.rel (%p603) target = $region60
    $region59: #{conformer_ctc_forward.27} parent=5 // pred_region
      %s606 = ssub.s32 %s14, 2
      // Predicated region
      $region61: #{conformer_ctc_forward.27} parent=59 // pred_check
        %p607 = pneg %p221
      $region62: #{conformer_ctc_forward.27} parent=59 // pred_check_branch
        %609 = sbr.rel (%p607) target = $region64
      $region63: #{conformer_ctc_forward.27} parent=59 // pred_region
        %p610 = scmp.lt.s32.totalorder %s20, 1
        %s611 = scalar_select %p610, %s20, 1
        %s612 = smul.addr %s611, 2
        %s613 = smul.addr %s612, 8
        %s614 = scalar_lea.vmem %s8, %s613
      $region64: #{conformer_ctc_forward.27} parent=59 // pred_fallthru
        _
    $region60: #{conformer_ctc_forward.27} parent=5 // pred_fallthru
      _
  $region6: #{conformer_ctc_forward.27} parent=0 // loop_footer
    %s18 = sadd.s32 1, %s14
  $region7: #{conformer_ctc_forward.27} parent=0 // loop_footer_branch
    %13 = sbr.rel target = $region3
  $region8: #{conformer_ctc_forward.27} parent=0 // loop_exit
    _

// kernel: conformer_ctc_forward.29
$region0: #{conformer_ctc_forward.29}
  #allocation0 [shape = 'u32[]', space=smem, size = 0x4, offset = 0x4, fixed_abs, tag = 'smem constant byte address 0x4 - core index']
  #allocation1 [shape = 'u32[72,128]{1,0:T(1,128)}', space=vmem, size = 0x9000, scoped, tag = 'internal scratch']
  %s0 = inlined_call_operand.vmem [shape: f32[32,256], index: 0, kind: input, shape index: {}]
  %s1 = inlined_call_operand.vmem [shape: bf16[256,64], index: 1, kind: input, shape index: {}]
  %s2 = inlined_call_operand.vmem [shape: f32[1,64], index: 2, kind: input, shape index: {}]
  %s3 = inlined_call_operand.vmem [shape: f32[32,64], index: 3, kind: input, shape index: {}]
  %s4 = inlined_call_operand.vmem [shape: f32[1,64], index: 4, kind: input, shape index: {}]
  %s5 = inlined_call_operand.vmem [shape: f32[1,64], index: 5, kind: input, shape index: {}]
  %s6 = inlined_call_operand.vmem [shape: f32[32,64], index: 6, kind: output, shape index: {}]
  %s7 = sld [smem:[#allocation0]]
  $region34: #{conformer_ctc_forward.29} parent=0
    _
  %s9 = ssub.s32 1, %s7
  %s10 = scalar_select 0, %s9, %s7
  // Predicated region
  $region2: #{conformer_ctc_forward.29} parent=0 // pred_check
    _
  $region3: #{conformer_ctc_forward.29} parent=0 // pred_check_branch
    %12 = sbr.rel (0) target = $region5
  $region4: #{conformer_ctc_forward.29} parent=0 // pred_region
    _
  $region5: #{conformer_ctc_forward.29} parent=0 // pred_fallthru
    _
  // Predicated region
  $region6: #{conformer_ctc_forward.29} parent=0 // pred_check
    _
  $region7: #{conformer_ctc_forward.29} parent=0 // pred_check_branch
    %14 = sbr.rel (0) target = $region9
  $region8: #{conformer_ctc_forward.29} parent=0 // pred_region
    _
  $region9: #{conformer_ctc_forward.29} parent=0 // pred_fallthru
    _
  // Predicated region
  $region10: #{conformer_ctc_forward.29} parent=0 // pred_check
    _
  $region11: #{conformer_ctc_forward.29} parent=0 // pred_check_branch
    %16 = sbr.rel (0) target = $region13
  $region12: #{conformer_ctc_forward.29} parent=0 // pred_region
    _
  $region13: #{conformer_ctc_forward.29} parent=0 // pred_fallthru
    _
  // Predicated region
  $region14: #{conformer_ctc_forward.29} parent=0 // pred_check
    _
  $region15: #{conformer_ctc_forward.29} parent=0 // pred_check_branch
    %18 = sbr.rel (0) target = $region17
  $region16: #{conformer_ctc_forward.29} parent=0 // pred_region
    _
  $region17: #{conformer_ctc_forward.29} parent=0 // pred_fallthru
    _
  // Predicated region
  $region18: #{conformer_ctc_forward.29} parent=0 // pred_check
    _
  $region19: #{conformer_ctc_forward.29} parent=0 // pred_check_branch
    %20 = sbr.rel (0) target = $region21
  $region20: #{conformer_ctc_forward.29} parent=0 // pred_region
    _
  $region21: #{conformer_ctc_forward.29} parent=0 // pred_fallthru
    _
  // Predicated region
  $region22: #{conformer_ctc_forward.29} parent=0 // pred_check
    _
  $region23: #{conformer_ctc_forward.29} parent=0 // pred_check_branch
    %22 = sbr.rel (0) target = $region25
  $region24: #{conformer_ctc_forward.29} parent=0 // pred_region
    _
  $region25: #{conformer_ctc_forward.29} parent=0 // pred_fallthru
    _
  %v23 = vld [vmem:[%s0] sm:$0xff]
  %v24 = vld [vmem:[%s0 + $0x8] sm:$0xff]
  %v25 = vld [vmem:[%s0 + $0x10] sm:$0xff]
  %v26 = vld [vmem:[%s0 + $0x18] sm:$0xff]
  %v27 = vld [vmem:[%s0 + $0x20] sm:$0xff]
  %v28 = vld [vmem:[%s0 + $0x28] sm:$0xff]
  %v29 = vld [vmem:[%s0 + $0x30] sm:$0xff]
  %v30 = vld [vmem:[%s0 + $0x38] sm:$0xff]
  %v31 = vpack.c.bf16 %v25, %v23
  %v32 = vpack.c.bf16 %v26, %v24
  %v33 = vpack.c.bf16 %v29, %v27
  %v34 = vpack.c.bf16 %v30, %v28
  %v35 = vld [vmem:[%s1] sm:$0xf]
  %v36 = vld [vmem:[%s1 + $0x4] sm:$0xf]
  %v37 = vld [vmem:[%s1 + $0x8] sm:$0xf]
  %v38 = vld [vmem:[%s1 + $0xc] sm:$0xf]
  %v39 = vld [vmem:[%s1 + $0x10] sm:$0xf]
  %v40 = vld [vmem:[%s1 + $0x14] sm:$0xf]
  %v41 = vld [vmem:[%s1 + $0x18] sm:$0xf]
  %v42 = vld [vmem:[%s1 + $0x1c] sm:$0xf]
  %v43 = vld [vmem:[%s1 + $0x20] sm:$0xf]
  %v44 = vld [vmem:[%s1 + $0x24] sm:$0xf]
  %v45 = vld [vmem:[%s1 + $0x28] sm:$0xf]
  %v46 = vld [vmem:[%s1 + $0x2c] sm:$0xf]
  %v47 = vld [vmem:[%s1 + $0x30] sm:$0xf]
  %v48 = vld [vmem:[%s1 + $0x34] sm:$0xf]
  %v49 = vld [vmem:[%s1 + $0x38] sm:$0xf]
  %v50 = vld [vmem:[%s1 + $0x3c] sm:$0xf]
  %v51 = vld [vmem:[%s1 + $0x40] sm:$0xf]
  %v52 = vld [vmem:[%s1 + $0x44] sm:$0xf]
  %v53 = vld [vmem:[%s1 + $0x48] sm:$0xf]
  %v54 = vld [vmem:[%s1 + $0x4c] sm:$0xf]
  %v55 = vld [vmem:[%s1 + $0x50] sm:$0xf]
  %v56 = vld [vmem:[%s1 + $0x54] sm:$0xf]
  %v57 = vld [vmem:[%s1 + $0x58] sm:$0xf]
  %v58 = vld [vmem:[%s1 + $0x5c] sm:$0xf]
  %v59 = vld [vmem:[%s1 + $0x60] sm:$0xf]
  %v60 = vld [vmem:[%s1 + $0x64] sm:$0xf]
  %v61 = vld [vmem:[%s1 + $0x68] sm:$0xf]
  %v62 = vld [vmem:[%s1 + $0x6c] sm:$0xf]
  %v63 = vld [vmem:[%s1 + $0x70] sm:$0xf]
  %v64 = vld [vmem:[%s1 + $0x74] sm:$0xf]
  %v65 = vld [vmem:[%s1 + $0x78] sm:$0xf]
  %v66 = vld [vmem:[%s1 + $0x7c] sm:$0xf]
  %v67 = vld [vmem:[%s2] sm:$0x1]
  %v69 = vperm.slane %v67, 0
  %v103 = vunpack.c.l.b16 %v35
  %v104 = vunpack.c.l.b16 %v36
  %v105 = vunpack.c.l.b16 %v37
  %v106 = vunpack.c.l.b16 %v38
  %v107 = vunpack.c.l.b16 %v39
  %v108 = vunpack.c.l.b16 %v40
  %v109 = vunpack.c.l.b16 %v41
  %v110 = vunpack.c.l.b16 %v42
  %v111 = vunpack.c.l.b16 %v43
  %v112 = vunpack.c.l.b16 %v44
  %v113 = vunpack.c.l.b16 %v45
  %v114 = vunpack.c.l.b16 %v46
  %v115 = vunpack.c.l.b16 %v47
  %v116 = vunpack.c.l.b16 %v48
  %v117 = vunpack.c.l.b16 %v49
  %v118 = vunpack.c.l.b16 %v50
  %v119 = vunpack.c.l.b16 %v51
  %v120 = vunpack.c.l.b16 %v52
  %v121 = vunpack.c.l.b16 %v53
  %v122 = vunpack.c.l.b16 %v54
  %v123 = vunpack.c.l.b16 %v55
  %v124 = vunpack.c.l.b16 %v56
  %v125 = vunpack.c.l.b16 %v57
  %v126 = vunpack.c.l.b16 %v58
  %v127 = vunpack.c.l.b16 %v59
  %v128 = vunpack.c.l.b16 %v60
  %v129 = vunpack.c.l.b16 %v61
  %v130 = vunpack.c.l.b16 %v62
  %v131 = vunpack.c.l.b16 %v63
  %v132 = vunpack.c.l.b16 %v64
  %v133 = vunpack.c.l.b16 %v65
  %v134 = vunpack.c.l.b16 %v66
  %v135 = vpack.c.b16 %v104, %v103
  %v136 = vpack.c.b16 %v106, %v105
  %v137 = vpack.c.b16 %v108, %v107
  %v138 = vpack.c.b16 %v110, %v109
  %v139 = vpack.c.b16 %v112, %v111
  %v140 = vpack.c.b16 %v114, %v113
  %v141 = vpack.c.b16 %v116, %v115
  %v142 = vpack.c.b16 %v118, %v117
  %v143 = vpack.c.b16 %v120, %v119
  %v144 = vpack.c.b16 %v122, %v121
  %v145 = vpack.c.b16 %v124, %v123
  %v146 = vpack.c.b16 %v126, %v125
  %v147 = vpack.c.b16 %v128, %v127
  %v148 = vpack.c.b16 %v130, %v129
  %v149 = vpack.c.b16 %v132, %v131
  %v150 = vpack.c.b16 %v134, %v133
  %167 = vmatpush.bf16.msra.mxu0 %v142
  %168 = vmatpush.bf16.msra.mxu0 %v141
  %169 = vmatpush.bf16.msra.mxu0 %v140
  %170 = vmatpush.bf16.msra.mxu0 %v139
  %171 = vmatpush.bf16.msra.mxu0 %v138
  %172 = vmatpush.bf16.msra.mxu0 %v137
  %173 = vmatpush.bf16.msra.mxu0 %v136
  %174 = vmatpush.bf16.msra.mxu0 %v135
  %175 = vmatmul.bf16.gmra.mxu0 %v31
  %v176 = vpop.f32.mrf.mxu0
  %v177 = vadd.f32 %v69, %v176
  %v178 = vpop.f32.mrf.mxu0
  %v179 = vadd.f32 %v69, %v178
  %180 = vmatmul.bf16.gmra.mxu0 %v33
  %v181 = vpop.f32.mrf.mxu0
  %v182 = vadd.f32 %v69, %v181
  %v183 = vpop.f32.mrf.mxu0
  %v184 = vadd.f32 %v69, %v183
  %185 = vdwg.mxu0
  %186 = vmatpush.bf16.msra.mxu0 %v150
  %187 = vmatpush.bf16.msra.mxu0 %v149
  %188 = vmatpush.bf16.msra.mxu0 %v148
  %189 = vmatpush.bf16.msra.mxu0 %v147
  %190 = vmatpush.bf16.msra.mxu0 %v146
  %191 = vmatpush.bf16.msra.mxu0 %v145
  %192 = vmatpush.bf16.msra.mxu0 %v144
  %193 = vmatpush.bf16.msra.mxu0 %v143
  %194 = vmatmul.bf16.gmra.mxu0 %v32
  %v195 = vpop.f32.mrf.mxu0
  %v196 = vadd.f32 %v177, %v195
  %v197 = vpop.f32.mrf.mxu0
  %v198 = vadd.f32 %v179, %v197
  %199 = vmatmul.bf16.gmra.mxu0 %v34
  %v200 = vpop.f32.mrf.mxu0
  %v201 = vadd.f32 %v182, %v200
  %v202 = vpop.f32.mrf.mxu0
  %v203 = vadd.f32 %v184, %v202
  %204 = vdwg.mxu0
  %v205 = vld [vmem:[%s3] sm:$0xff]
  %v206 = vld [vmem:[%s3 + $0x8] sm:$0xff]
  %v207 = vld [vmem:[%s3 + $0x10] sm:$0xff]
  %v208 = vld [vmem:[%s3 + $0x18] sm:$0xff]
  %v209 = vmul.f32 %v196, 0.5
  %v210 = vmul.f32 %v198, 0.5
  %v211 = vmul.f32 %v201, 0.5
  %v212 = vmul.f32 %v203, 0.5
  %v213 = vadd.f32 %v205, %v209
  %v214 = vadd.f32 %v206, %v210
  %v215 = vadd.f32 %v207, %v211
  %v216 = vadd.f32 %v208, %v212
  %vm217 = vcmask 523264
  %v218 = vsel %vm217, %v213, 0.0
  %219 = vadd.xlane.f32.xlu0 %v218
  %v220 = vpop.xlane.xlu0 %219
  %v221 = vsel %vm217, %v214, 0.0
  %222 = vadd.xlane.f32.xlu0 %v221
  %v223 = vpop.xlane.xlu0 %222
  %v224 = vsel %vm217, %v215, 0.0
  %225 = vadd.xlane.f32.xlu0 %v224
  %v226 = vpop.xlane.xlu0 %225
  %v227 = vsel %vm217, %v216, 0.0
  %228 = vadd.xlane.f32.xlu0 %v227
  %v229 = vpop.xlane.xlu0 %228
  %v230 = vrcp.pop 64.0
  %v231 = vmul.f32 64.0, %v230
  %v232 = vsub.f32 1.0, %v231
  %v233 = vmul.f32 %v230, %v232
  %v234 = vadd.f32 %v230, %v233
  %vm235 = vweird.f32 %v230
  %v236 = vsel %vm235, %v230, %v234
  %v237 = vmul.f32 %v220, %v236
  %v238 = vmul.f32 %v223, %v236
  %v239 = vmul.f32 %v226, %v236
  %v240 = vmul.f32 %v229, %v236
  %v241 = vsub.f32 %v213, %v237
  %v242 = vsub.f32 %v214, %v238
  %v243 = vsub.f32 %v215, %v239
  %v244 = vsub.f32 %v216, %v240
  %v245 = vmul.f32 %v241, %v241
  %v246 = vmul.f32 %v242, %v242
  %v247 = vmul.f32 %v243, %v243
  %v248 = vmul.f32 %v244, %v244
  %v249 = vsel %vm217, %v245, 0.0
  %250 = vadd.xlane.f32.xlu0 %v249
  %v251 = vpop.xlane.xlu0 %250
  %v252 = vsel %vm217, %v246, 0.0
  %253 = vadd.xlane.f32.xlu0 %v252
  %v254 = vpop.xlane.xlu0 %253
  %v255 = vsel %vm217, %v247, 0.0
  %256 = vadd.xlane.f32.xlu0 %v255
  %v257 = vpop.xlane.xlu0 %256
  %v258 = vsel %vm217, %v248, 0.0
  %259 = vadd.xlane.f32.xlu0 %v258
  %v260 = vpop.xlane.xlu0 %259
  %v261 = vmul.f32 %v251, %v236
  %v262 = vmul.f32 %v254, %v236
  %v263 = vmul.f32 %v257, %v236
  %v264 = vmul.f32 %v260, %v236
  %v265 = vadd.f32 %v261, 1e-05
  %v266 = vadd.f32 %v262, 1e-05
  %v267 = vadd.f32 %v263, 1e-05
  %v268 = vadd.f32 %v264, 1e-05
  %v269 = vrsqrt.pop %v265
  %v270 = vmul.f32 %v269, %v265
  %v271 = vmul.f32 %v270, %v269
  %v272 = vmul.f32 0.5, %v271
  %v273 = vsub.f32 1.5, %v272
  %v274 = vmul.f32 %v269, %v273
  %vm275 = vweird.f32 %v265
  %vm276 = vweird.f32 %v269
  %vm277 = vmor %vm275, %vm276
  %v278 = vsel %vm277, %v269, %v274
  %v279 = vrsqrt.pop %v266
  %v280 = vmul.f32 %v279, %v266
  %v281 = vmul.f32 %v280, %v279
  %v282 = vmul.f32 0.5, %v281
  %v283 = vsub.f32 1.5, %v282
  %v284 = vmul.f32 %v279, %v283
  %vm285 = vweird.f32 %v266
  %vm286 = vweird.f32 %v279
  %vm287 = vmor %vm285, %vm286
  %v288 = vsel %vm287, %v279, %v284
  %v289 = vrsqrt.pop %v267
  %v290 = vmul.f32 %v289, %v267
  %v291 = vmul.f32 %v290, %v289
  %v292 = vmul.f32 0.5, %v291
  %v293 = vsub.f32 1.5, %v292
  %v294 = vmul.f32 %v289, %v293
  %vm295 = vweird.f32 %v267
  %vm296 = vweird.f32 %v289
  %vm297 = vmor %vm295, %vm296
  %v298 = vsel %vm297, %v289, %v294
  %v299 = vrsqrt.pop %v268
  %v300 = vmul.f32 %v299, %v268
  %v301 = vmul.f32 %v300, %v299
  %v302 = vmul.f32 0.5, %v301
  %v303 = vsub.f32 1.5, %v302
  %v304 = vmul.f32 %v299, %v303
  %vm305 = vweird.f32 %v268
  %vm306 = vweird.f32 %v299
  %vm307 = vmor %vm305, %vm306
  %v308 = vsel %vm307, %v299, %v304
  %v309 = vmul.f32 %v241, %v278
  %v310 = vmul.f32 %v242, %v288
  %v311 = vmul.f32 %v243, %v298
  %v312 = vmul.f32 %v244, %v308
  %v313 = vld [vmem:[%s4] sm:$0x1]
  %v315 = vperm.slane %v313, 0
  %v317 = vmul.f32 %v309, %v315
  %v318 = vmul.f32 %v310, %v315
  %v319 = vmul.f32 %v311, %v315
  %v320 = vmul.f32 %v312, %v315
  %v321 = vld [vmem:[%s5] sm:$0x1]
  %v323 = vperm.slane %v321, 0
  %v325 = vadd.f32 %v317, %v323
  %v326 = vadd.f32 %v318, %v323
  %v327 = vadd.f32 %v319, %v323
  %v328 = vadd.f32 %v320, %v323
  %329 = vst.msk [vmem:[%s6] sm:$0xff] %vm217, %v325
  %330 = vst.msk [vmem:[%s6 + $0x8] sm:$0xff] %vm217, %v326
  %331 = vst.msk [vmem:[%s6 + $0x10] sm:$0xff] %vm217, %v327
  %332 = vst.msk [vmem:[%s6 + $0x18] sm:$0xff] %vm217, %v328
  // Predicated region
  $region26: #{conformer_ctc_forward.29} parent=0 // pred_check
    _
  $region27: #{conformer_ctc_forward.29} parent=0 // pred_check_branch
    %334 = sbr.rel (0) target = $region29
  $region28: #{conformer_ctc_forward.29} parent=0 // pred_region
    _
  $region29: #{conformer_ctc_forward.29} parent=0 // pred_fallthru
    _
  // Predicated region
  $region30: #{conformer_ctc_forward.29} parent=0 // pred_check
    _
  $region31: #{conformer_ctc_forward.29} parent=0 // pred_check_branch
    %336 = sbr.rel (0) target = $region33
  $region32: #{conformer_ctc_forward.29} parent=0 // pred_region
    _
  $region33: #{conformer_ctc_forward.29} parent=0 // pred_fallthru
    _

// kernel: conformer_ctc_forward.39
$region0: #{conformer_ctc_forward.39}
  #allocation0 [shape = 'u32[]', space=smem, size = 0x4, offset = 0x4, fixed_abs, tag = 'smem constant byte address 0x4 - core index']
  #allocation1 [shape = 'u32[72,128]{1,0:T(1,128)}', space=vmem, size = 0x9000, scoped, tag = 'internal scratch']
  %s0 = inlined_call_operand.vmem [shape: f32[32,64], index: 0, kind: input, shape index: {}]
  %s1 = inlined_call_operand.vmem [shape: bf16[64,128], index: 1, kind: input, shape index: {}]
  %s2 = inlined_call_operand.vmem [shape: f32[1,128], index: 2, kind: input, shape index: {}]
  %s3 = inlined_call_operand.vmem [shape: f32[32,128], index: 3, kind: output, shape index: {}]
  %s4 = sld [smem:[#allocation0]]
  $region22: #{conformer_ctc_forward.39} parent=0
    _
  %s6 = ssub.s32 1, %s4
  %s7 = scalar_select 0, %s6, %s4
  // Predicated region
  $region2: #{conformer_ctc_forward.39} parent=0 // pred_check
    _
  $region3: #{conformer_ctc_forward.39} parent=0 // pred_check_branch
    %9 = sbr.rel (0) target = $region5
  $region4: #{conformer_ctc_forward.39} parent=0 // pred_region
    _
  $region5: #{conformer_ctc_forward.39} parent=0 // pred_fallthru
    _
  // Predicated region
  $region6: #{conformer_ctc_forward.39} parent=0 // pred_check
    _
  $region7: #{conformer_ctc_forward.39} parent=0 // pred_check_branch
    %11 = sbr.rel (0) target = $region9
  $region8: #{conformer_ctc_forward.39} parent=0 // pred_region
    _
  $region9: #{conformer_ctc_forward.39} parent=0 // pred_fallthru
    _
  // Predicated region
  $region10: #{conformer_ctc_forward.39} parent=0 // pred_check
    _
  $region11: #{conformer_ctc_forward.39} parent=0 // pred_check_branch
    %13 = sbr.rel (0) target = $region13
  $region12: #{conformer_ctc_forward.39} parent=0 // pred_region
    _
  $region13: #{conformer_ctc_forward.39} parent=0 // pred_fallthru
    _
  %v15 = vld [vmem:[%s0] sm:$0xff]
  %v16 = vld [vmem:[%s0 + $0x8] sm:$0xff]
  %v17 = vld [vmem:[%s0 + $0x10] sm:$0xff]
  %v18 = vld [vmem:[%s0 + $0x18] sm:$0xff]
  %v19 = vpack.c.bf16 %v16, %v15
  %v20 = vpack.c.bf16 %v18, %v17
  %v21 = vld [vmem:[%s1] sm:$0xf]
  %v22 = vld [vmem:[%s1 + $0x4] sm:$0xf]
  %v23 = vld [vmem:[%s1 + $0x8] sm:$0xf]
  %v24 = vld [vmem:[%s1 + $0xc] sm:$0xf]
  %v25 = vld [vmem:[%s1 + $0x10] sm:$0xf]
  %v26 = vld [vmem:[%s1 + $0x14] sm:$0xf]
  %v27 = vld [vmem:[%s1 + $0x18] sm:$0xf]
  %v28 = vld [vmem:[%s1 + $0x1c] sm:$0xf]
  %v29 = vld [vmem:[%s2] sm:$0x1]
  %v31 = vperm.slane %v29, 0
  %v41 = vunpack.c.l.b16 %v21
  %v42 = vunpack.c.l.b16 %v22
  %v43 = vunpack.c.l.b16 %v23
  %v44 = vunpack.c.l.b16 %v24
  %v45 = vunpack.c.l.b16 %v25
  %v46 = vunpack.c.l.b16 %v26
  %v47 = vunpack.c.l.b16 %v27
  %v48 = vunpack.c.l.b16 %v28
  %v49 = vpack.c.b16 %v42, %v41
  %v50 = vpack.c.b16 %v44, %v43
  %v51 = vpack.c.b16 %v46, %v45
  %v52 = vpack.c.b16 %v48, %v47
  %vm57 = vcmask 523264
  %v59 = vsel %vm57, %v19, 0
  %v62 = vsel %vm57, %v20, 0
  %64 = vmatpush.bf16.msra.mxu0 0
  %65 = vmatpush.bf16.msra.mxu0 0
  %66 = vmatpush.bf16.msra.mxu0 0
  %67 = vmatpush.bf16.msra.mxu0 0
  %68 = vmatpush.bf16.msra.mxu0 %v52
  %69 = vmatpush.bf16.msra.mxu0 %v51
  %70 = vmatpush.bf16.msra.mxu0 %v50
  %71 = vmatpush.bf16.msra.mxu0 %v49
  %72 = vmatmul.bf16.gmra.mxu0 %v59
  %v73 = vpop.f32.mrf.mxu0
  %v74 = vadd.f32 %v31, %v73
  %v75 = vpop.f32.mrf.mxu0
  %v76 = vadd.f32 %v31, %v75
  %77 = vmatmul.bf16.gmra.mxu0 %v62
  %v78 = vpop.f32.mrf.mxu0
  %v79 = vadd.f32 %v31, %v78
  %v80 = vpop.f32.mrf.mxu0
  %v81 = vadd.f32 %v31, %v80
  %82 = vdwg.mxu0
  %83 = vst [vmem:[%s3] sm:$0xff] %v74
  %84 = vst [vmem:[%s3 + $0x8] sm:$0xff] %v76
  %85 = vst [vmem:[%s3 + $0x10] sm:$0xff] %v79
  %86 = vst [vmem:[%s3 + $0x18] sm:$0xff] %v81
  // Predicated region
  $region14: #{conformer_ctc_forward.39} parent=0 // pred_check
    _
  $region15: #{conformer_ctc_forward.39} parent=0 // pred_check_branch
    %88 = sbr.rel (0) target = $region17
  $region16: #{conformer_ctc_forward.39} parent=0 // pred_region
    _
  $region17: #{conformer_ctc_forward.39} parent=0 // pred_fallthru
    _
  // Predicated region
  $region18: #{conformer_ctc_forward.39} parent=0 // pred_check
    _
  $region19: #{conformer_ctc_forward.39} parent=0 // pred_check_branch
    %90 = sbr.rel (0) target = $region21
  $region20: #{conformer_ctc_forward.39} parent=0 // pred_region
    _
  $region21: #{conformer_ctc_forward.39} parent=0 // pred_fallthru
    _

</llo_original>
